<compile_context>
chip_gen: v6e
topology: v6e:2x2x1
jax: 0.10.0
libtpu: 0.0.40
codegen_flags: <defaults>
</compile_context>

<pallas_src>
import math
from functools import partial

import jax
import jax.numpy as jnp
from jax import lax
from jax.experimental import pallas as pl
from jax.experimental.pallas import tpu as pltpu

_BN_EPS = 1e-5
_NEG_SLOPE = 0.1
_VMEM_LIMIT = 32 * 1024 * 1024  # explicit so the same tiles stay safe on v7x (64 MiB phys)


def _pick_tile(total, cap, mult=8):
    """Largest divisor of `total` that is <= cap and a multiple of `mult`; else `total`."""
    for d in range(min(total, cap), 0, -1):
        if total % d == 0 and d % mult == 0:
            return d
    return total


def _pick_row_tile(hout, wout, cout, budget_bytes=2 << 20):
    """Largest row tile TH dividing Hout whose f32 output block fits the budget."""
    for th in range(hout, 0, -1):
        if hout % th:
            continue
        if th != hout and (th * wout) % 8:
            continue  # keep the sublane(8) constraint on the flattened row dim
        if th * wout * cout * 4 <= budget_bytes:
            return th
    return hout  # full extent is always a legal block


# ------------------ phase 1: conv (in-kernel im2col) + partial BN stats ------------------
def _conv_stats_kernel(x_ref, w_ref, y_ref, stats_ref, *, taps, th, wout, cin, cout):
    # x_ref    : (1, Hs, Ws, Cs)      padded activation (bf16), resident per image
    # w_ref    : (9, Cin, Cout)       bf16 conv taps (tap order dy*3+dx)
    # y_ref    : (1, th*wout, Cout)   f32 pre-BN conv output tile
    # stats_ref: (1, 1, 2, Cout)      f32 per-tile [sum, sum-of-squares]
    row0 = pl.program_id(1) * th
    acc = jnp.zeros((th * wout, cout), jnp.float32)
    for t, (c_off, drow, dcol) in enumerate(taps):
        slab = x_ref[0, pl.ds(row0 + drow, th), pl.ds(dcol, wout), pl.ds(c_off, cin)]
        acc = acc + jnp.dot(slab.reshape(th * wout, cin), w_ref[t],
                            preferred_element_type=jnp.float32)
    y_ref[0] = acc
    stats_ref[0, 0, 0:1, :] = jnp.sum(acc, axis=0, keepdims=True)
    stats_ref[0, 0, 1:2, :] = jnp.sum(acc * acc, axis=0, keepdims=True)


# ------------------ phase 2: normalize + LeakyReLU (lane-dense) ------------------
def _bn_lrelu_kernel(y_ref, scale_ref, shift_ref, o_ref):
    z = y_ref[...] * scale_ref[...] + shift_ref[...]
    o_ref[...] = jnp.maximum(z, _NEG_SLOPE * z).astype(o_ref.dtype)


# ---------------------------------- wrappers ----------------------------------
def conv_unit_pallas(x_nhwc, params, stride=1, out_dtype=jnp.float32):
    """Conv2d(3x3, pad=1, stride) + BatchNorm2d(batch stats) + LeakyReLU(0.1)."""
    w, gamma, beta = params["w"], params["gamma"], params["beta"]
    # conv bias intentionally NOT applied here: exactly cancelled by training-mode BN.
    N, H, W, Cin = x_nhwc.shape
    Cout = w.shape[0]
    Hout = (H + 2 - 3) // stride + 1
    Wout = (W + 2 - 3) // stride + 1

    # bf16 feed for the MXU (f32 accumulation inside the kernel).
    x_pad = jnp.pad(x_nhwc.astype(jnp.bfloat16), ((0, 0), (1, 1), (1, 1), (0, 0)))
    if stride == 1:
        x_src = x_pad                                     # (N, H+2, W+2, Cin)
        taps = tuple((0, dy, dx) for dy in range(3) for dx in range(3))
    elif stride == 2:
        # row/col parity planes stacked on channels -> every tap is a contiguous slice
        planes = [x_pad[:, py::2, px::2, :] for py in range(2) for px in range(2)]
        x_src = jnp.concatenate(planes, axis=-1)          # (N, H/2+1, W/2+1, 4*Cin)
        taps = tuple((((dy % 2) * 2 + (dx % 2)) * Cin, dy // 2, dx // 2)
                     for dy in range(3) for dx in range(3))
    else:
        raise ValueError("only stride 1 or 2 supported")

    # (Cout, Cin, 3, 3) -> (9, Cin, Cout), tap order dy*3+dx (matches `taps`)
    w_taps = jnp.transpose(w, (2, 3, 1, 0)).reshape(9, Cin, Cout).astype(jnp.bfloat16)

    TH = _pick_row_tile(Hout, Wout, Cout)   # biggest row tile within the VMEM budget
    R = Hout // TH
    _, Hs, Ws, Cs = x_src.shape

    kernel = partial(_conv_stats_kernel, taps=taps, th=TH, wout=Wout, cin=Cin, cout=Cout)
    y, pstats = pl.pallas_call(
        kernel,
        out_shape=(jax.ShapeDtypeStruct((N, Hout * Wout, Cout), jnp.float32),
                   jax.ShapeDtypeStruct((N, R, 2, Cout), jnp.float32)),
        grid=(N, R),
        in_specs=[
            pl.BlockSpec((1, Hs, Ws, Cs), lambda n, r: (n, 0, 0, 0)),   # resident per image
            pl.BlockSpec((9, Cin, Cout), lambda n, r: (0, 0, 0)),
        ],
        out_specs=[
            pl.BlockSpec((1, TH * Wout, Cout), lambda n, r: (n, r, 0)),
            pl.BlockSpec((1, 1, 2, Cout), lambda n, r: (n, r, 0, 0)),
        ],
        compiler_params=pltpu.CompilerParams(
            dimension_semantics=("parallel", "parallel"),
            vmem_limit_bytes=_VMEM_LIMIT),
    )(x_src, w_taps)

    # tiny cross-tile stats combine + fold gamma/mean into scale/shift (O(Cout) XLA work)
    m = float(N * Hout * Wout)
    s = jnp.sum(pstats, axis=(0, 1))                       # (2, Cout)
    mean = s[0] / m
    var = jnp.maximum(s[1] / m - mean * mean, 0.0)         # biased batch variance
    scale = gamma * lax.rsqrt(var + _BN_EPS)
    shift = beta - mean * scale

    # lane-dense phase 2: view (M, Cout) as (M/fold, fold*Cout) with fold*Cout == 128
    M = N * Hout * Wout
    fold = 128 // math.gcd(Cout, 128)
    if M % fold != 0 or fold * Cout > 1024:
        fold = 1                                            # fallback: natural layout
    Mf, Cf = M // fold, fold * Cout
    tile_mult = 16 if jnp.dtype(out_dtype) == jnp.dtype(jnp.bfloat16) else 8
    TMf = _pick_tile(Mf, 512, mult=tile_mult)

    yf = y.reshape(Mf, Cf)                                  # metadata-level reshape
    scale_f = jnp.tile(scale, fold).reshape(1, Cf).astype(jnp.float32)
    shift_f = jnp.tile(shift, fold).reshape(1, Cf).astype(jnp.float32)

    # Donate the pre-BN buffer to the output when shapes/dtypes match (P8).
    alias = {0: 0} if jnp.dtype(out_dtype) == yf.dtype else {}

    out = pl.pallas_call(
        _bn_lrelu_kernel,
        out_shape=jax.ShapeDtypeStruct((Mf, Cf), out_dtype),
        grid=(Mf // TMf,),
        in_specs=[
            pl.BlockSpec((TMf, Cf), lambda i: (i, 0)),
            pl.BlockSpec((1, Cf), lambda i: (0, 0)),
            pl.BlockSpec((1, Cf), lambda i: (0, 0)),
        ],
        out_specs=pl.BlockSpec((TMf, Cf), lambda i: (i, 0)),
        input_output_aliases=alias,
        compiler_params=pltpu.CompilerParams(
            dimension_semantics=("parallel",),
            vmem_limit_bytes=_VMEM_LIMIT),
    )(yf, scale_f, shift_f)

    return out.reshape(N, Hout, Wout, Cout)


def conv_block_pallas(x_nchw, params_list, strides):
    y = jnp.transpose(x_nchw, (0, 2, 3, 1))  # NCHW -> NHWC
    n_units = len(params_list)
    for i, (p, s) in enumerate(zip(params_list, strides)):
        # Intermediate layers emit bf16 (next layer rounds to bf16 anyway -> identical
        # numerics, half the HBM traffic on the layer boundary); last layer stays f32.
        od = jnp.float32 if i == n_units - 1 else jnp.bfloat16
        y = conv_unit_pallas(y, p, stride=s, out_dtype=od)
    return jnp.transpose(y, (0, 3, 1, 2))    # NHWC -> NCHW


# --------------------------- pure-JAX reference -------------------------------
def _conv_unit_ref(x_nhwc, params, stride):
    # Same forward as the PyTorch module (conv+bias, training-mode BN, LeakyReLU 0.1).
    # Operands are rounded to bf16 (mirroring the kernel's MXU feed); products and
    # all BN math are f32 (precision=HIGHEST keeps XLA from re-lowering to bf16).
    w, cb, gamma, beta = params["w"], params["cb"], params["gamma"], params["beta"]
    xs = x_nhwc.astype(jnp.bfloat16).astype(jnp.float32)
    ws = jnp.transpose(w, (2, 3, 1, 0)).astype(jnp.bfloat16).astype(jnp.float32)
    y = lax.conv_general_dilated(
        xs, ws, window_strides=(stride, stride), padding=((1, 1), (1, 1)),
        dimension_numbers=("NHWC", "HWIO", "NHWC"),
        precision=lax.Precision.HIGHEST) + cb
    mu = jnp.mean(y, axis=(0, 1, 2), keepdims=True)
    var = jnp.mean((y - mu) ** 2, axis=(0, 1, 2), keepdims=True)  # biased variance
    z = (y - mu) * lax.rsqrt(var + _BN_EPS) * gamma + beta
    return jnp.where(z >= 0.0, z, _NEG_SLOPE * z)


def conv_block_ref(x_nchw, params_list, strides):
    y = jnp.transpose(x_nchw, (0, 2, 3, 1))
    for p, s in zip(params_list, strides):
        y = _conv_unit_ref(y, p, s)
    return jnp.transpose(y, (0, 3, 1, 2))


# ------------------------------- params init ----------------------------------
def init_conv_unit(key, in_ch, out_ch):
    kw, kb, kg, kbt = jax.random.split(key, 4)
    fan_in = in_ch * 9
    bound = 1.0 / math.sqrt(fan_in)
    return dict(
        w=jax.random.uniform(kw, (out_ch, in_ch, 3, 3), jnp.float32, -bound, bound),
        cb=jax.random.uniform(kb, (out_ch,), jnp.float32, -bound, bound),
        gamma=1.0 + 0.1 * jax.random.normal(kg, (out_ch,), jnp.float32),
        beta=0.1 * jax.random.normal(kbt, (out_ch,), jnp.float32),
    )


if __name__ == "__main__":
    key = jax.random.PRNGKey(0)
    kx, kp = jax.random.split(key)
    in_ch, out_ch = 4, 8
    N, H, W = 2, 16, 16

    x = jax.random.normal(kx, (N, in_ch, H, W), jnp.float32)  # NCHW, like PyTorch

    keys = jax.random.split(kp, 4)
    params_list = [init_conv_unit(keys[0], in_ch, out_ch)] + [
        init_conv_unit(keys[i], out_ch, out_ch) for i in range(1, 4)
    ]
    strides = [1, 1, 1, 2]  # c1, c2, c3, c4 (make_last=True)

    y = jax.block_until_ready(conv_block_pallas(x, params_list, strides))
    assert y.shape == (N, out_ch, H // 2, W // 2), y.shape

    y_ref = conv_block_ref(x, params_list, strides)
    if not jnp.allclose(y, y_ref, rtol=5e-3, atol=5e-3):
        max_err = float(jnp.max(jnp.abs(y - y_ref)))
        raise AssertionError(f"Pallas output mismatch vs reference, max_err={max_err}")

    print("KERNEL_OK")
</pallas_src>

<mosaic_0001>
module attributes {stable_mosaic.version = 11 : i64} {
  func.func @_conv_stats_kernel(%arg0: i32, %arg1: i32, %arg2: memref<1x18x18x4xbf16, #tpu.memory_space<vmem>>, %arg3: memref<9x4x8xbf16, #tpu.memory_space<vmem>>, %arg4: memref<1x256x8xf32, #tpu.memory_space<vmem>>, %arg5: memref<1x1x2x8xf32, #tpu.memory_space<vmem>>) attributes {dimension_semantics = [#tpu.dimension_semantics<parallel>, #tpu.dimension_semantics<parallel>], iteration_bounds = array<i64: 2, 1>, scalar_prefetch = 0 : i64, scratch_operands = 0 : i64, tpu.core_type = #tpu.core_type<tc>, window_params = [{transform_indices = @transform_0, window_bounds = array<i64: 1, 18, 18, 4>}, {pipeline_mode = #tpu.pipeline_mode<synchronous>, transform_indices = @transform_1, window_bounds = array<i64: 9, 4, 8>}, {transform_indices = @transform_2, window_bounds = array<i64: 1, 256, 8>}, {transform_indices = @transform_3, window_bounds = array<i64: 1, 1, 2, 8>}]} {
    %c16_i32 = arith.constant 16 : i32
    %0 = arith.muli %arg1, %c16_i32 : i32
    %cst = arith.constant 0.000000e+00 : f32
    %1 = vector.broadcast %cst : f32 to vector<256x8xf32>
    %c0_i32 = arith.constant 0 : i32
    %2 = arith.addi %0, %c0_i32 : i32
    %c0 = arith.constant 0 : index
    %3 = arith.index_cast %2 : i32 to index
    %c0_0 = arith.constant 0 : index
    %c0_1 = arith.constant 0 : index
    %4 = vector.load %arg2[%c0, %3, %c0_0, %c0_1] : memref<1x18x18x4xbf16, #tpu.memory_space<vmem>>, vector<1x16x16x4xbf16>
    %5 = vector.shape_cast %4 : vector<1x16x16x4xbf16> to vector<16x16x4xbf16>
    %6 = vector.shape_cast %5 : vector<16x16x4xbf16> to vector<256x4xbf16>
    %c0_2 = arith.constant 0 : index
    %c0_3 = arith.constant 0 : index
    %c0_4 = arith.constant 0 : index
    %7 = vector.load %arg3[%c0_2, %c0_3, %c0_4] : memref<9x4x8xbf16, #tpu.memory_space<vmem>>, vector<1x4x8xbf16>
    %8 = vector.shape_cast %7 : vector<1x4x8xbf16> to vector<4x8xbf16>
    %cst_5 = arith.constant dense<0.000000e+00> : vector<256x8xf32>
    %9 = tpu.matmul %6, %8, %cst_5 {dimension_numbers = #tpu.dot_dimension_numbers<[1], [0], [0], [1], [0, 0, 1, 1], [], []>} : vector<256x4xbf16>, vector<4x8xbf16>, vector<256x8xf32> -> vector<256x8xf32>
    %10 = arith.addf %1, %9 : vector<256x8xf32>
    %c0_i32_6 = arith.constant 0 : i32
    %11 = arith.addi %0, %c0_i32_6 : i32
    %c0_7 = arith.constant 0 : index
    %12 = arith.index_cast %11 : i32 to index
    %c1 = arith.constant 1 : index
    %c0_8 = arith.constant 0 : index
    %13 = vector.load %arg2[%c0_7, %12, %c1, %c0_8] : memref<1x18x18x4xbf16, #tpu.memory_space<vmem>>, vector<1x16x16x4xbf16>
    %14 = vector.shape_cast %13 : vector<1x16x16x4xbf16> to vector<16x16x4xbf16>
    %15 = vector.shape_cast %14 : vector<16x16x4xbf16> to vector<256x4xbf16>
    %c1_9 = arith.constant 1 : index
    %c0_10 = arith.constant 0 : index
    %c0_11 = arith.constant 0 : index
    %16 = vector.load %arg3[%c1_9, %c0_10, %c0_11] : memref<9x4x8xbf16, #tpu.memory_space<vmem>>, vector<1x4x8xbf16>
    %17 = vector.shape_cast %16 : vector<1x4x8xbf16> to vector<4x8xbf16>
    %cst_12 = arith.constant dense<0.000000e+00> : vector<256x8xf32>
    %18 = tpu.matmul %15, %17, %cst_12 {dimension_numbers = #tpu.dot_dimension_numbers<[1], [0], [0], [1], [0, 0, 1, 1], [], []>} : vector<256x4xbf16>, vector<4x8xbf16>, vector<256x8xf32> -> vector<256x8xf32>
    %19 = arith.addf %10, %18 : vector<256x8xf32>
    %c0_i32_13 = arith.constant 0 : i32
    %20 = arith.addi %0, %c0_i32_13 : i32
    %c0_14 = arith.constant 0 : index
    %21 = arith.index_cast %20 : i32 to index
    %c2 = arith.constant 2 : index
    %c0_15 = arith.constant 0 : index
    %22 = vector.load %arg2[%c0_14, %21, %c2, %c0_15] : memref<1x18x18x4xbf16, #tpu.memory_space<vmem>>, vector<1x16x16x4xbf16>
    %23 = vector.shape_cast %22 : vector<1x16x16x4xbf16> to vector<16x16x4xbf16>
    %24 = vector.shape_cast %23 : vector<16x16x4xbf16> to vector<256x4xbf16>
    %c2_16 = arith.constant 2 : index
    %c0_17 = arith.constant 0 : index
    %c0_18 = arith.constant 0 : index
    %25 = vector.load %arg3[%c2_16, %c0_17, %c0_18] : memref<9x4x8xbf16, #tpu.memory_space<vmem>>, vector<1x4x8xbf16>
    %26 = vector.shape_cast %25 : vector<1x4x8xbf16> to vector<4x8xbf16>
    %cst_19 = arith.constant dense<0.000000e+00> : vector<256x8xf32>
    %27 = tpu.matmul %24, %26, %cst_19 {dimension_numbers = #tpu.dot_dimension_numbers<[1], [0], [0], [1], [0, 0, 1, 1], [], []>} : vector<256x4xbf16>, vector<4x8xbf16>, vector<256x8xf32> -> vector<256x8xf32>
    %28 = arith.addf %19, %27 : vector<256x8xf32>
    %c1_i32 = arith.constant 1 : i32
    %29 = arith.addi %0, %c1_i32 : i32
    %c0_20 = arith.constant 0 : index
    %30 = arith.index_cast %29 : i32 to index
    %c0_21 = arith.constant 0 : index
    %c0_22 = arith.constant 0 : index
    %31 = vector.load %arg2[%c0_20, %30, %c0_21, %c0_22] : memref<1x18x18x4xbf16, #tpu.memory_space<vmem>>, vector<1x16x16x4xbf16>
    %32 = vector.shape_cast %31 : vector<1x16x16x4xbf16> to vector<16x16x4xbf16>
    %33 = vector.shape_cast %32 : vector<16x16x4xbf16> to vector<256x4xbf16>
    %c3 = arith.constant 3 : index
    %c0_23 = arith.constant 0 : index
    %c0_24 = arith.constant 0 : index
    %34 = vector.load %arg3[%c3, %c0_23, %c0_24] : memref<9x4x8xbf16, #tpu.memory_space<vmem>>, vector<1x4x8xbf16>
    %35 = vector.shape_cast %34 : vector<1x4x8xbf16> to vector<4x8xbf16>
    %cst_25 = arith.constant dense<0.000000e+00> : vector<256x8xf32>
    %36 = tpu.matmul %33, %35, %cst_25 {dimension_numbers = #tpu.dot_dimension_numbers<[1], [0], [0], [1], [0, 0, 1, 1], [], []>} : vector<256x4xbf16>, vector<4x8xbf16>, vector<256x8xf32> -> vector<256x8xf32>
    %37 = arith.addf %28, %36 : vector<256x8xf32>
    %c1_i32_26 = arith.constant 1 : i32
    %38 = arith.addi %0, %c1_i32_26 : i32
    %c0_27 = arith.constant 0 : index
    %39 = arith.index_cast %38 : i32 to index
    %c1_28 = arith.constant 1 : index
    %c0_29 = arith.constant 0 : index
    %40 = vector.load %arg2[%c0_27, %39, %c1_28, %c0_29] : memref<1x18x18x4xbf16, #tpu.memory_space<vmem>>, vector<1x16x16x4xbf16>
    %41 = vector.shape_cast %40 : vector<1x16x16x4xbf16> to vector<16x16x4xbf16>
    %42 = vector.shape_cast %41 : vector<16x16x4xbf16> to vector<256x4xbf16>
    %c4 = arith.constant 4 : index
    %c0_30 = arith.constant 0 : index
    %c0_31 = arith.constant 0 : index
    %43 = vector.load %arg3[%c4, %c0_30, %c0_31] : memref<9x4x8xbf16, #tpu.memory_space<vmem>>, vector<1x4x8xbf16>
    %44 = vector.shape_cast %43 : vector<1x4x8xbf16> to vector<4x8xbf16>
    %cst_32 = arith.constant dense<0.000000e+00> : vector<256x8xf32>
    %45 = tpu.matmul %42, %44, %cst_32 {dimension_numbers = #tpu.dot_dimension_numbers<[1], [0], [0], [1], [0, 0, 1, 1], [], []>} : vector<256x4xbf16>, vector<4x8xbf16>, vector<256x8xf32> -> vector<256x8xf32>
    %46 = arith.addf %37, %45 : vector<256x8xf32>
    %c1_i32_33 = arith.constant 1 : i32
    %47 = arith.addi %0, %c1_i32_33 : i32
    %c0_34 = arith.constant 0 : index
    %48 = arith.index_cast %47 : i32 to index
    %c2_35 = arith.constant 2 : index
    %c0_36 = arith.constant 0 : index
    %49 = vector.load %arg2[%c0_34, %48, %c2_35, %c0_36] : memref<1x18x18x4xbf16, #tpu.memory_space<vmem>>, vector<1x16x16x4xbf16>
    %50 = vector.shape_cast %49 : vector<1x16x16x4xbf16> to vector<16x16x4xbf16>
    %51 = vector.shape_cast %50 : vector<16x16x4xbf16> to vector<256x4xbf16>
    %c5 = arith.constant 5 : index
    %c0_37 = arith.constant 0 : index
    %c0_38 = arith.constant 0 : index
    %52 = vector.load %arg3[%c5, %c0_37, %c0_38] : memref<9x4x8xbf16, #tpu.memory_space<vmem>>, vector<1x4x8xbf16>
    %53 = vector.shape_cast %52 : vector<1x4x8xbf16> to vector<4x8xbf16>
    %cst_39 = arith.constant dense<0.000000e+00> : vector<256x8xf32>
    %54 = tpu.matmul %51, %53, %cst_39 {dimension_numbers = #tpu.dot_dimension_numbers<[1], [0], [0], [1], [0, 0, 1, 1], [], []>} : vector<256x4xbf16>, vector<4x8xbf16>, vector<256x8xf32> -> vector<256x8xf32>
    %55 = arith.addf %46, %54 : vector<256x8xf32>
    %c2_i32 = arith.constant 2 : i32
    %56 = arith.addi %0, %c2_i32 : i32
    %c0_40 = arith.constant 0 : index
    %57 = arith.index_cast %56 : i32 to index
    %c0_41 = arith.constant 0 : index
    %c0_42 = arith.constant 0 : index
    %58 = vector.load %arg2[%c0_40, %57, %c0_41, %c0_42] : memref<1x18x18x4xbf16, #tpu.memory_space<vmem>>, vector<1x16x16x4xbf16>
    %59 = vector.shape_cast %58 : vector<1x16x16x4xbf16> to vector<16x16x4xbf16>
    %60 = vector.shape_cast %59 : vector<16x16x4xbf16> to vector<256x4xbf16>
    %c6 = arith.constant 6 : index
    %c0_43 = arith.constant 0 : index
    %c0_44 = arith.constant 0 : index
    %61 = vector.load %arg3[%c6, %c0_43, %c0_44] : memref<9x4x8xbf16, #tpu.memory_space<vmem>>, vector<1x4x8xbf16>
    %62 = vector.shape_cast %61 : vector<1x4x8xbf16> to vector<4x8xbf16>
    %cst_45 = arith.constant dense<0.000000e+00> : vector<256x8xf32>
    %63 = tpu.matmul %60, %62, %cst_45 {dimension_numbers = #tpu.dot_dimension_numbers<[1], [0], [0], [1], [0, 0, 1, 1], [], []>} : vector<256x4xbf16>, vector<4x8xbf16>, vector<256x8xf32> -> vector<256x8xf32>
    %64 = arith.addf %55, %63 : vector<256x8xf32>
    %c2_i32_46 = arith.constant 2 : i32
    %65 = arith.addi %0, %c2_i32_46 : i32
    %c0_47 = arith.constant 0 : index
    %66 = arith.index_cast %65 : i32 to index
    %c1_48 = arith.constant 1 : index
    %c0_49 = arith.constant 0 : index
    %67 = vector.load %arg2[%c0_47, %66, %c1_48, %c0_49] : memref<1x18x18x4xbf16, #tpu.memory_space<vmem>>, vector<1x16x16x4xbf16>
    %68 = vector.shape_cast %67 : vector<1x16x16x4xbf16> to vector<16x16x4xbf16>
    %69 = vector.shape_cast %68 : vector<16x16x4xbf16> to vector<256x4xbf16>
    %c7 = arith.constant 7 : index
    %c0_50 = arith.constant 0 : index
    %c0_51 = arith.constant 0 : index
    %70 = vector.load %arg3[%c7, %c0_50, %c0_51] : memref<9x4x8xbf16, #tpu.memory_space<vmem>>, vector<1x4x8xbf16>
    %71 = vector.shape_cast %70 : vector<1x4x8xbf16> to vector<4x8xbf16>
    %cst_52 = arith.constant dense<0.000000e+00> : vector<256x8xf32>
    %72 = tpu.matmul %69, %71, %cst_52 {dimension_numbers = #tpu.dot_dimension_numbers<[1], [0], [0], [1], [0, 0, 1, 1], [], []>} : vector<256x4xbf16>, vector<4x8xbf16>, vector<256x8xf32> -> vector<256x8xf32>
    %73 = arith.addf %64, %72 : vector<256x8xf32>
    %c2_i32_53 = arith.constant 2 : i32
    %74 = arith.addi %0, %c2_i32_53 : i32
    %c0_54 = arith.constant 0 : index
    %75 = arith.index_cast %74 : i32 to index
    %c2_55 = arith.constant 2 : index
    %c0_56 = arith.constant 0 : index
    %76 = vector.load %arg2[%c0_54, %75, %c2_55, %c0_56] : memref<1x18x18x4xbf16, #tpu.memory_space<vmem>>, vector<1x16x16x4xbf16>
    %77 = vector.shape_cast %76 : vector<1x16x16x4xbf16> to vector<16x16x4xbf16>
    %78 = vector.shape_cast %77 : vector<16x16x4xbf16> to vector<256x4xbf16>
    %c8 = arith.constant 8 : index
    %c0_57 = arith.constant 0 : index
    %c0_58 = arith.constant 0 : index
    %79 = vector.load %arg3[%c8, %c0_57, %c0_58] : memref<9x4x8xbf16, #tpu.memory_space<vmem>>, vector<1x4x8xbf16>
    %80 = vector.shape_cast %79 : vector<1x4x8xbf16> to vector<4x8xbf16>
    %cst_59 = arith.constant dense<0.000000e+00> : vector<256x8xf32>
    %81 = tpu.matmul %78, %80, %cst_59 {dimension_numbers = #tpu.dot_dimension_numbers<[1], [0], [0], [1], [0, 0, 1, 1], [], []>} : vector<256x4xbf16>, vector<4x8xbf16>, vector<256x8xf32> -> vector<256x8xf32>
    %82 = arith.addf %73, %81 : vector<256x8xf32>
    %c0_60 = arith.constant 0 : index
    %c0_61 = arith.constant 0 : index
    %c0_62 = arith.constant 0 : index
    %83 = vector.load %arg4[%c0_60, %c0_61, %c0_62] : memref<1x256x8xf32, #tpu.memory_space<vmem>>, vector<1x256x8xf32>
    %84 = vector.shape_cast %83 : vector<1x256x8xf32> to vector<256x8xf32>
    %85 = vector.shape_cast %82 : vector<256x8xf32> to vector<1x256x8xf32>
    tpu.vector_store %arg4[%c0_60, %c0_61, %c0_62], %85 {strides = array<i32>} : memref<1x256x8xf32, #tpu.memory_space<vmem>>, vector<1x256x8xf32>,
    %cst_63 = arith.constant dense<0.000000e+00> : vector<8xf32>
    %86 = vector.multi_reduction <add>, %82, %cst_63 [0] : vector<256x8xf32> to vector<8xf32>
    %87 = vector.shape_cast %86 : vector<8xf32> to vector<1x8xf32>
    %c0_64 = arith.constant 0 : index
    %c0_65 = arith.constant 0 : index
    %c0_66 = arith.constant 0 : index
    %c0_67 = arith.constant 0 : index
    %88 = vector.load %arg5[%c0_64, %c0_65, %c0_66, %c0_67] : memref<1x1x2x8xf32, #tpu.memory_space<vmem>>, vector<1x1x1x8xf32>
    %89 = vector.shape_cast %88 : vector<1x1x1x8xf32> to vector<1x8xf32>
    %90 = vector.shape_cast %87 : vector<1x8xf32> to vector<1x1x1x8xf32>
    tpu.vector_store %arg5[%c0_64, %c0_65, %c0_66, %c0_67], %90 {strides = array<i32>} : memref<1x1x2x8xf32, #tpu.memory_space<vmem>>, vector<1x1x1x8xf32>,
    %91 = arith.mulf %82, %82 : vector<256x8xf32>
    %cst_68 = arith.constant dense<0.000000e+00> : vector<8xf32>
    %92 = vector.multi_reduction <add>, %91, %cst_68 [0] : vector<256x8xf32> to vector<8xf32>
    %93 = vector.shape_cast %92 : vector<8xf32> to vector<1x8xf32>
    %c0_69 = arith.constant 0 : index
    %c0_70 = arith.constant 0 : index
    %c1_71 = arith.constant 1 : index
    %c0_72 = arith.constant 0 : index
    %94 = vector.load %arg5[%c0_69, %c0_70, %c1_71, %c0_72] : memref<1x1x2x8xf32, #tpu.memory_space<vmem>>, vector<1x1x1x8xf32>
    %95 = vector.shape_cast %94 : vector<1x1x1x8xf32> to vector<1x8xf32>
    %96 = vector.shape_cast %93 : vector<1x8xf32> to vector<1x1x1x8xf32>
    tpu.vector_store %arg5[%c0_69, %c0_70, %c1_71, %c0_72], %96 {strides = array<i32>} : memref<1x1x2x8xf32, #tpu.memory_space<vmem>>, vector<1x1x1x8xf32>,
    return
  }
  func.func @transform_0(%arg0: i32, %arg1: i32) -> (i32, i32, i32, i32) {
    %c0_i32 = arith.constant 0 : i32
    %c0_i32_0 = arith.constant 0 : i32
    %c0_i32_1 = arith.constant 0 : i32
    %c0_i32_2 = arith.constant 0 : i32
    return %arg0, %c0_i32, %c0_i32_0, %c0_i32_1 : i32, i32, i32, i32
  }
  func.func @transform_1(%arg0: i32, %arg1: i32) -> (i32, i32, i32) {
    %c0_i32 = arith.constant 0 : i32
    %c0_i32_0 = arith.constant 0 : i32
    %c0_i32_1 = arith.constant 0 : i32
    %c0_i32_2 = arith.constant 0 : i32
    return %c0_i32, %c0_i32_0, %c0_i32_1 : i32, i32, i32
  }
  func.func @transform_2(%arg0: i32, %arg1: i32) -> (i32, i32, i32) {
    %c0_i32 = arith.constant 0 : i32
    %c0_i32_0 = arith.constant 0 : i32
    return %arg0, %arg1, %c0_i32 : i32, i32, i32
  }
  func.func @transform_3(%arg0: i32, %arg1: i32) -> (i32, i32, i32, i32) {
    %c0_i32 = arith.constant 0 : i32
    %c0_i32_0 = arith.constant 0 : i32
    %c0_i32_1 = arith.constant 0 : i32
    return %arg0, %arg1, %c0_i32, %c0_i32_0 : i32, i32, i32, i32
  }
}

</mosaic_0001>

<llo_original>
// kernel: tpu_custom_call.1
$region0: #{tpu_custom_call.1}
  #allocation0 [shape = 'u32[]', space=smem, size = 0x4, offset = 0x4, fixed_abs, tag = 'smem constant byte address 0x4 - core index']
  #allocation1 [shape = 'u32[144,128]{1,0:T(1,128)}', space=vmem, size = 0x12000, scoped, tag = 'internal scratch']
  %s0 = inlined_call_operand.vmem [shape: bf16[2,18,18,4], index: 0, kind: input, shape index: {}]
  %s1 = inlined_call_operand.vmem [shape: bf16[9,4,8], index: 1, kind: input, shape index: {}]
  %s2 = inlined_call_operand.vmem [shape: f32[2,256,8], index: 2, kind: output, shape index: {0}]
  %s3 = inlined_call_operand.hbm [shape: f32[2,1,2,8], index: 3, kind: output, shape index: {1}]
  %4 = xla_tuple %s2, %s3
  %s5 = sld [smem:[#allocation0]]
  $region49: #{tpu_custom_call.1} parent=0
    _
  %s7 = ssub.s32 1, %s5
  %s8 = scalar_select 0, %s7, %s5
  $region1: #{tpu_custom_call.1} parent=0
    #allocation2 [shape = 'u8[2048]{0}', space=vmem, size = 0x800, scoped, tag = 'output window, operand 1']
    #allocation3 [shape = 's32[2]{0}', space=sflag, size = 0x8, scoped, tag = 'scoped memory for tpu_custom_call.1']
    %9 = vsyncpa [#allocation3], 0
    %s10 = scalar_lea.sflag [#allocation3], 1
    %11 = vsyncpa %s10, 0
    loop: start=0, step=1, limit=4
    $region2: #{tpu_custom_call.1} parent=1 // loop_pre_header
      _
    $region3: #{tpu_custom_call.1} parent=1 // loop_header
      %s13 = sphi 0, %s17
      %p14 = scmp.ge.s32.totalorder %s13, 4
      %s20 = sphi 0, %s32
      %s21 = sphi 0, %s28
      %s22 = sphi 0, %s20
      %s23 = sphi 0, %s21
      %s24 = sphi 0, %s22
      %s25 = sphi 0, %s23
      %s35 = sphi 0, %s37
      %s38 = sphi 0, %s35
      %s39 = sphi 0, %s38
      %s55 = sphi 0, %s39
      %s59 = sphi 0, %s59
      %s61 = sphi 0, %s59
      %s62 = sphi 0, %s61
      %s76 = sphi 0, %s62
      %s84 = sphi 0, %s86
      %s87 = sphi 0, %s84
      %s88 = sphi 0, %s87
      %s104 = sphi 0, %s88
      %s112 = sphi 0, %s114
      %s115 = sphi 0, %s112
      %s116 = sphi 0, %s115
      %s132 = sphi 0, %s116
    $region4: #{tpu_custom_call.1} parent=1 // loop_header_branch
      %16 = sbr.rel (%p14) target = $region8
    $region5: #{tpu_custom_call.1} parent=1 // loop_body
      %s18 = ssub.s32 %s13, 1
      %s19 = ssub.s32 %s13, 2
      %s26 = sadd.s32 1, %s21
      %p27 = scmp.ge.s32.totalorder %s26, 1
      %s28 = scalar_select %p27, 0, %s26
      %s29 = sadd.s32 1, %s20
      %s30 = scalar_select %p27, %s29, %s20
      %p31 = scmp.ge.s32.totalorder %s30, 2
      %s32 = scalar_select %p31, 0, %s30
      %s33 = ssub.s32 %s20, %s32
      %p34 = scmp.eq.s32.totalorder %s33, 0
      %s36 = sadd.s32 %s35, 1
      %s37 = scalar_select %p34, %s35, %s36
      %p40 = pneg %p34
      %p41 = scmp.eq.s32.totalorder %s13, 1
      %p42 = por %p40, %p41
      %p43 = scmp.ne.s32.totalorder %s35, %s38
      %p44 = scmp.eq.s32.totalorder %s13, 0
      %p45 = por %p43, %p44
      %p46 = scmp.ne.s32.totalorder %s35, %s38
      %p47 = scmp.eq.s32.totalorder %s18, 1
      %p48 = por %p46, %p47
      %p49 = scmp.ne.s32.totalorder %s38, %s39
      %p50 = scmp.eq.s32.totalorder %s18, 0
      %p51 = por %p49, %p50
      %p52 = scmp.ne.s32.totalorder %s38, %s39
      %p53 = scmp.eq.s32.totalorder %s19, 1
      %p54 = por %p52, %p53
      %p56 = scmp.ne.s32.totalorder %s39, %s55
      %p57 = scmp.eq.s32.totalorder %s19, 0
      %p58 = por %p56, %p57
      %s60 = sadd.s32 %s59, 1
      %p63 = scmp.eq.s32.totalorder %s13, 1
      %p64 = scmp.ne.s32.totalorder %s59, %s61
      %p65 = scmp.eq.s32.totalorder %s13, 0
      %p66 = por %p64, %p65
      %p67 = scmp.ne.s32.totalorder %s59, %s61
      %p68 = scmp.eq.s32.totalorder %s18, 1
      %p69 = por %p67, %p68
      %p70 = scmp.ne.s32.totalorder %s61, %s62
      %p71 = scmp.eq.s32.totalorder %s18, 0
      %p72 = por %p70, %p71
      %p73 = scmp.ne.s32.totalorder %s61, %s62
      %p74 = scmp.eq.s32.totalorder %s19, 1
      %p75 = por %p73, %p74
      %p77 = scmp.ne.s32.totalorder %s62, %s76
      %p78 = scmp.eq.s32.totalorder %s19, 0
      %p79 = por %p77, %p78
      %s80 = ssub.s32 %s20, %s32
      %s81 = ssub.s32 %s21, %s28
      %s82 = sor.u32 %s80, %s81
      %p83 = scmp.eq.s32.totalorder %s82, 0
      %s85 = sadd.s32 %s84, 1
      %s86 = scalar_select %p83, %s84, %s85
      %p89 = pneg %p83
      %p90 = scmp.eq.s32.totalorder %s13, 1
      %p91 = por %p89, %p90
      %p92 = scmp.ne.s32.totalorder %s84, %s87
      %p93 = scmp.eq.s32.totalorder %s13, 0
      %p94 = por %p92, %p93
      %p95 = scmp.ne.s32.totalorder %s84, %s87
      %p96 = scmp.eq.s32.totalorder %s18, 1
      %p97 = por %p95, %p96
      %p98 = scmp.ne.s32.totalorder %s87, %s88
      %p99 = scmp.eq.s32.totalorder %s18, 0
      %p100 = por %p98, %p99
      %p101 = scmp.ne.s32.totalorder %s87, %s88
      %p102 = scmp.eq.s32.totalorder %s19, 1
      %p103 = por %p101, %p102
      %p105 = scmp.ne.s32.totalorder %s88, %s104
      %p106 = scmp.eq.s32.totalorder %s19, 0
      %p107 = por %p105, %p106
      %s108 = ssub.s32 %s20, %s32
      %s109 = ssub.s32 %s21, %s28
      %s110 = sor.u32 %s108, %s109
      %p111 = scmp.eq.s32.totalorder %s110, 0
      %s113 = sadd.s32 %s112, 1
      %s114 = scalar_select %p111, %s112, %s113
      %p117 = pneg %p111
      %p118 = scmp.eq.s32.totalorder %s13, 1
      %p119 = por %p117, %p118
      %p120 = scmp.ne.s32.totalorder %s112, %s115
      %p121 = scmp.eq.s32.totalorder %s13, 0
      %p122 = por %p120, %p121
      %p123 = scmp.ne.s32.totalorder %s112, %s115
      %p124 = scmp.eq.s32.totalorder %s18, 1
      %p125 = por %p123, %p124
      %p126 = scmp.ne.s32.totalorder %s115, %s116
      %p127 = scmp.eq.s32.totalorder %s18, 0
      %p128 = por %p126, %p127
      %p129 = scmp.ne.s32.totalorder %s115, %s116
      %p130 = scmp.eq.s32.totalorder %s19, 1
      %p131 = por %p129, %p130
      %p133 = scmp.ne.s32.totalorder %s116, %s132
      %p134 = scmp.eq.s32.totalorder %s19, 0
      %p135 = por %p133, %p134
      %p136 = scmp.le.s32.totalorder 1, %s13
      %p137 = scmp.lt.s32.totalorder %s13, 3
      %p138 = pnand %p136, %p137
      %p139 = pneg %p138
      // Predicated region
      $region9: #{tpu_custom_call.1} parent=5 // pred_check
        _
      $region10: #{tpu_custom_call.1} parent=5 // pred_check_branch
        %141 = sbr.rel (%p138) target = $region12
      $region11: #{tpu_custom_call.1} parent=5 // pred_region
        %s142 = ssub.s32 %s13, 1
        // Predicated region
        $region13: #{tpu_custom_call.1} parent=11 // pred_check
          %p143 = pneg %p72
        $region14: #{tpu_custom_call.1} parent=11 // pred_check_branch
          %145 = sbr.rel (%p143) target = $region16
        $region15: #{tpu_custom_call.1} parent=11 // pred_region
          _
        $region16: #{tpu_custom_call.1} parent=11 // pred_fallthru
          _
      $region12: #{tpu_custom_call.1} parent=5 // pred_fallthru
        _
      %p146 = scmp.lt.s32.totalorder %s13, 2
      // Predicated region
      $region17: #{tpu_custom_call.1} parent=5 // pred_check
        %p147 = pneg %p146
      $region18: #{tpu_custom_call.1} parent=5 // pred_check_branch
        %149 = sbr.rel (%p147) target = $region20
      $region19: #{tpu_custom_call.1} parent=5 // pred_region
        // Predicated region
        $region21: #{tpu_custom_call.1} parent=19 // pred_check
          %p150 = pneg %p45
        $region22: #{tpu_custom_call.1} parent=19 // pred_check_branch
          %152 = sbr.rel (%p150) target = $region24
        $region23: #{tpu_custom_call.1} parent=19 // pred_region
          %p153 = scmp.lt.s32.totalorder %s20, 1
          %s154 = scalar_select %p153, %s20, 1
          %s155 = smul.addr %s154, 54
          %s156 = smul.addr %s155, 4
          %s157 = scalar_lea.vmem %s0, %s156
        $region24: #{tpu_custom_call.1} parent=19 // pred_fallthru
          _
      $region20: #{tpu_custom_call.1} parent=5 // pred_fallthru
        _
      %p158 = scmp.le.s32.totalorder 1, %s13
      %p159 = scmp.lt.s32.totalorder %s13, 3
      %p160 = pnand %p158, %p159
      %p161 = pneg %p160
      // Predicated region
      $region25: #{tpu_custom_call.1} parent=5 // pred_check
        _
      $region26: #{tpu_custom_call.1} parent=5 // pred_check_branch
        %163 = sbr.rel (%p160) target = $region28
      $region27: #{tpu_custom_call.1} parent=5 // pred_region
        %s164 = ssub.s32 %s13, 1
        %p165 = scmp.lt.s32.totalorder %s22, 1
        %s166 = scalar_select %p165, %s22, 1
        %s167 = smul.addr %s166, 54
        %s168 = smul.addr %s167, 4
        %s169 = scalar_lea.vmem %s0, %s168
        %p170 = pneg %p51
        %p171 = pneg %p48
        %p172 = pneg %p72
        %p173 = pneg %p69
        %p174 = pneg %p100
        %p175 = pneg %p97
        %s176 = smul.u32 32, %s23
        %p177 = scmp.lt.s32.totalorder %s22, 1
        %s178 = scalar_select %p177, %s22, 1
        %p179 = scmp.lt.s32.totalorder %s176, 31
        %s180 = scalar_select %p179, %s176, 31
        %s181 = smul.addr %s178, 32
        %s182 = sadd.s32 %s180, %s181
        %s183 = smul.addr %s182, 8
        %s184 = scalar_lea.vmem %s2, %s183
        %p185 = pneg %p128
        %p186 = pneg %p125
        %s187 = sand.u32 %s115, 1
        %s188 = scalar_lea.sflag [#allocation3], %s187
        %s189 = sand.u32 %s115, 1
        %s190 = smul.addr %s189, 2
        %s191 = scalar_lea.vmem [#allocation2], %s190
        %p192 = scmp.lt.s32.totalorder %s22, 1
        %s193 = scalar_select %p192, %s22, 1
        %s194 = smul.addr %s193, 54
        %s195 = smul.addr %s194, 4
        %s196 = scalar_lea.vmem %s0, %s195
        %s197 = smul.u32 32, %s23
        %p198 = scmp.lt.s32.totalorder %s22, 1
        %s199 = scalar_select %p198, %s22, 1
        %p200 = scmp.lt.s32.totalorder %s197, 31
        %s201 = scalar_select %p200, %s197, 31
        %s202 = smul.addr %s199, 32
        %s203 = sadd.s32 %s201, %s202
        %s204 = smul.addr %s203, 8
        %s205 = scalar_lea.vmem %s2, %s204
        %s206 = smul.u32 32, %s23
        %s208 = smul.u32 %s23, 16
        %s209 = smul.u32 %s208, 3
        %s210 = smul.addr %s209, 4
        %s211 = scalar_lea.vmem %s196, %s210
        %v212 = vld [vmem:[%s211] sm:$0xf]
        %v213 = vld [vmem:[%s211 + $0x4] sm:$0xf]
        %v214 = vld [vmem:[%s211 + $0xc] sm:$0xf]
        %v215 = vld [vmem:[%s211 + $0x10] sm:$0xf]
        %v216 = vld [vmem:[%s211 + $0x18] sm:$0xf]
        %v217 = vld [vmem:[%s211 + $0x1c] sm:$0xf]
        %v218 = vld [vmem:[%s211 + $0x24] sm:$0xf]
        %v219 = vld [vmem:[%s211 + $0x28] sm:$0xf]
        %v220 = vld [vmem:[%s211 + $0x30] sm:$0xf]
        %v221 = vld [vmem:[%s211 + $0x34] sm:$0xf]
        %v222 = vld [vmem:[%s211 + $0x3c] sm:$0xf]
        %v223 = vld [vmem:[%s211 + $0x40] sm:$0xf]
        %v224 = vld [vmem:[%s211 + $0x48] sm:$0xf]
        %v225 = vld [vmem:[%s211 + $0x4c] sm:$0xf]
        %v226 = vld [vmem:[%s211 + $0x54] sm:$0xf]
        %v227 = vld [vmem:[%s211 + $0x58] sm:$0xf]
        %v228 = vld [vmem:[%s211 + $0x60] sm:$0xf]
        %v229 = vld [vmem:[%s211 + $0x64] sm:$0xf]
        %v230 = vld [vmem:[%s211 + $0x6c] sm:$0xf]
        %v231 = vld [vmem:[%s211 + $0x70] sm:$0xf]
        %v232 = vld [vmem:[%s211 + $0x78] sm:$0xf]
        %v233 = vld [vmem:[%s211 + $0x7c] sm:$0xf]
        %v234 = vld [vmem:[%s211 + $0x84] sm:$0xf]
        %v235 = vld [vmem:[%s211 + $0x88] sm:$0xf]
        %v236 = vld [vmem:[%s211 + $0x90] sm:$0xf]
        %v237 = vld [vmem:[%s211 + $0x94] sm:$0xf]
        %v238 = vld [vmem:[%s211 + $0x9c] sm:$0xf]
        %v239 = vld [vmem:[%s211 + $0xa0] sm:$0xf]
        %v240 = vld [vmem:[%s211 + $0xa8] sm:$0xf]
        %v241 = vld [vmem:[%s211 + $0xac] sm:$0xf]
        %v242 = vld [vmem:[%s211 + $0xb4] sm:$0xf]
        %v243 = vld [vmem:[%s211 + $0xb8] sm:$0xf]
        %v244 = vld [vmem:[%s1] sm:$0x3]
        %v245 = vld [vmem:[%s211 + $0x8] sm:$0x1]
        %v246 = vld [vmem:[%s211 + $0x14] sm:$0x1]
        %v247 = vld [vmem:[%s211 + $0x20] sm:$0x1]
        %v248 = vld [vmem:[%s211 + $0x2c] sm:$0x1]
        %v249 = vld [vmem:[%s211 + $0x38] sm:$0x1]
        %v250 = vld [vmem:[%s211 + $0x44] sm:$0x1]
        %v251 = vld [vmem:[%s211 + $0x50] sm:$0x1]
        %v252 = vld [vmem:[%s211 + $0x5c] sm:$0x1]
        %v253 = vld [vmem:[%s211 + $0x68] sm:$0x1]
        %v254 = vld [vmem:[%s211 + $0x74] sm:$0x1]
        %v255 = vld [vmem:[%s211 + $0x80] sm:$0x1]
        %v256 = vld [vmem:[%s211 + $0x8c] sm:$0x1]
        %v257 = vld [vmem:[%s211 + $0x98] sm:$0x1]
        %v258 = vld [vmem:[%s211 + $0xa4] sm:$0x1]
        %v259 = vld [vmem:[%s211 + $0xb0] sm:$0x1]
        %v260 = vld [vmem:[%s211 + $0xbc] sm:$0x1]
        %vm261 = vsmask.f32 3328
        %vm262 = vsmask.f32 7440
        %vm263 = vmor %vm261, %vm262
        %v265 = vshrl.u32 %v212, 16
        %v267 = vrot.slane %v265, 4
        %v268 = vshll.u32 %v212, 16
        %v270 = vrot.slane %v268, 5
        %v271 = vor.u32 %v267, %v270
        %v272 = vrot.slane %v271, 4
        %v274 = vshll.u32 %v213, 16
        %v276 = vrot.slane %v274, 5
        %v277 = vsel %vm263, %v272, %v276
        %v278 = vshrl.u32 %v213, 16
        %v280 = vrot.slane %v278, 4
        %v281 = vor.u32 %v280, %v276
        %v282 = vrot.slane %v281, 4
        %v284 = vshll.u32 %v245, 16
        %v286 = vrot.slane %v284, 5
        %v287 = vsel %vm263, %v282, %v286
        %v289 = vshrl.u32 %v214, 16
        %v291 = vrot.slane %v289, 4
        %v292 = vshll.u32 %v214, 16
        %v294 = vrot.slane %v292, 5
        %v295 = vor.u32 %v291, %v294
        %v296 = vrot.slane %v295, 4
        %v298 = vshll.u32 %v215, 16
        %v300 = vrot.slane %v298, 5
        %v301 = vsel %vm263, %v296, %v300
        %v302 = vshrl.u32 %v215, 16
        %v304 = vrot.slane %v302, 4
        %v305 = vor.u32 %v304, %v300
        %v306 = vrot.slane %v305, 4
        %v308 = vshll.u32 %v246, 16
        %v310 = vrot.slane %v308, 5
        %v311 = vsel %vm263, %v306, %v310
        %v313 = vshrl.u32 %v216, 16
        %v315 = vrot.slane %v313, 4
        %v316 = vshll.u32 %v216, 16
        %v318 = vrot.slane %v316, 5
        %v319 = vor.u32 %v315, %v318
        %v320 = vrot.slane %v319, 4
        %v322 = vshll.u32 %v217, 16
        %v324 = vrot.slane %v322, 5
        %v325 = vsel %vm263, %v320, %v324
        %v326 = vshrl.u32 %v217, 16
        %v328 = vrot.slane %v326, 4
        %v329 = vor.u32 %v328, %v324
        %v330 = vrot.slane %v329, 4
        %v332 = vshll.u32 %v247, 16
        %v334 = vrot.slane %v332, 5
        %v335 = vsel %vm263, %v330, %v334
        %v337 = vshrl.u32 %v218, 16
        %v339 = vrot.slane %v337, 4
        %v340 = vshll.u32 %v218, 16
        %v342 = vrot.slane %v340, 5
        %v343 = vor.u32 %v339, %v342
        %v344 = vrot.slane %v343, 4
        %v346 = vshll.u32 %v219, 16
        %v348 = vrot.slane %v346, 5
        %v349 = vsel %vm263, %v344, %v348
        %v350 = vshrl.u32 %v219, 16
        %v352 = vrot.slane %v350, 4
        %v353 = vor.u32 %v352, %v348
        %v354 = vrot.slane %v353, 4
        %v356 = vshll.u32 %v248, 16
        %v358 = vrot.slane %v356, 5
        %v359 = vsel %vm263, %v354, %v358
        %v361 = vshrl.u32 %v220, 16
        %v363 = vrot.slane %v361, 4
        %v364 = vshll.u32 %v220, 16
        %v366 = vrot.slane %v364, 5
        %v367 = vor.u32 %v363, %v366
        %v368 = vrot.slane %v367, 4
        %v370 = vshll.u32 %v221, 16
        %v372 = vrot.slane %v370, 5
        %v373 = vsel %vm263, %v368, %v372
        %v374 = vshrl.u32 %v221, 16
        %v376 = vrot.slane %v374, 4
        %v377 = vor.u32 %v376, %v372
        %v378 = vrot.slane %v377, 4
        %v380 = vshll.u32 %v249, 16
        %v382 = vrot.slane %v380, 5
        %v383 = vsel %vm263, %v378, %v382
        %v385 = vshrl.u32 %v222, 16
        %v387 = vrot.slane %v385, 4
        %v388 = vshll.u32 %v222, 16
        %v390 = vrot.slane %v388, 5
        %v391 = vor.u32 %v387, %v390
        %v392 = vrot.slane %v391, 4
        %v394 = vshll.u32 %v223, 16
        %v396 = vrot.slane %v394, 5
        %v397 = vsel %vm263, %v392, %v396
        %v398 = vshrl.u32 %v223, 16
        %v400 = vrot.slane %v398, 4
        %v401 = vor.u32 %v400, %v396
        %v402 = vrot.slane %v401, 4
        %v404 = vshll.u32 %v250, 16
        %v406 = vrot.slane %v404, 5
        %v407 = vsel %vm263, %v402, %v406
        %v409 = vshrl.u32 %v224, 16
        %v411 = vrot.slane %v409, 4
        %v412 = vshll.u32 %v224, 16
        %v414 = vrot.slane %v412, 5
        %v415 = vor.u32 %v411, %v414
        %v416 = vrot.slane %v415, 4
        %v418 = vshll.u32 %v225, 16
        %v420 = vrot.slane %v418, 5
        %v421 = vsel %vm263, %v416, %v420
        %v422 = vshrl.u32 %v225, 16
        %v424 = vrot.slane %v422, 4
        %v425 = vor.u32 %v424, %v420
        %v426 = vrot.slane %v425, 4
        %v428 = vshll.u32 %v251, 16
        %v430 = vrot.slane %v428, 5
        %v431 = vsel %vm263, %v426, %v430
        %v433 = vshrl.u32 %v226, 16
        %v435 = vrot.slane %v433, 4
        %v436 = vshll.u32 %v226, 16
        %v438 = vrot.slane %v436, 5
        %v439 = vor.u32 %v435, %v438
        %v440 = vrot.slane %v439, 4
        %v442 = vshll.u32 %v227, 16
        %v444 = vrot.slane %v442, 5
        %v445 = vsel %vm263, %v440, %v444
        %v446 = vshrl.u32 %v227, 16
        %v448 = vrot.slane %v446, 4
        %v449 = vor.u32 %v448, %v444
        %v450 = vrot.slane %v449, 4
        %v452 = vshll.u32 %v252, 16
        %v454 = vrot.slane %v452, 5
        %v455 = vsel %vm263, %v450, %v454
        %v457 = vshrl.u32 %v228, 16
        %v459 = vrot.slane %v457, 4
        %v460 = vshll.u32 %v228, 16
        %v462 = vrot.slane %v460, 5
        %v463 = vor.u32 %v459, %v462
        %v464 = vrot.slane %v463, 4
        %v466 = vshll.u32 %v229, 16
        %v468 = vrot.slane %v466, 5
        %v469 = vsel %vm263, %v464, %v468
        %v470 = vshrl.u32 %v229, 16
        %v472 = vrot.slane %v470, 4
        %v473 = vor.u32 %v472, %v468
        %v474 = vrot.slane %v473, 4
        %v476 = vshll.u32 %v253, 16
        %v478 = vrot.slane %v476, 5
        %v479 = vsel %vm263, %v474, %v478
        %v481 = vshrl.u32 %v230, 16
        %v483 = vrot.slane %v481, 4
        %v484 = vshll.u32 %v230, 16
        %v486 = vrot.slane %v484, 5
        %v487 = vor.u32 %v483, %v486
        %v488 = vrot.slane %v487, 4
        %v490 = vshll.u32 %v231, 16
        %v492 = vrot.slane %v490, 5
        %v493 = vsel %vm263, %v488, %v492
        %v494 = vshrl.u32 %v231, 16
        %v496 = vrot.slane %v494, 4
        %v497 = vor.u32 %v496, %v492
        %v498 = vrot.slane %v497, 4
        %v500 = vshll.u32 %v254, 16
        %v502 = vrot.slane %v500, 5
        %v503 = vsel %vm263, %v498, %v502
        %v505 = vshrl.u32 %v232, 16
        %v507 = vrot.slane %v505, 4
        %v508 = vshll.u32 %v232, 16
        %v510 = vrot.slane %v508, 5
        %v511 = vor.u32 %v507, %v510
        %v512 = vrot.slane %v511, 4
        %v514 = vshll.u32 %v233, 16
        %v516 = vrot.slane %v514, 5
        %v517 = vsel %vm263, %v512, %v516
        %v518 = vshrl.u32 %v233, 16
        %v520 = vrot.slane %v518, 4
        %v521 = vor.u32 %v520, %v516
        %v522 = vrot.slane %v521, 4
        %v524 = vshll.u32 %v255, 16
        %v526 = vrot.slane %v524, 5
        %v527 = vsel %vm263, %v522, %v526
        %v529 = vshrl.u32 %v234, 16
        %v531 = vrot.slane %v529, 4
        %v532 = vshll.u32 %v234, 16
        %v534 = vrot.slane %v532, 5
        %v535 = vor.u32 %v531, %v534
        %v536 = vrot.slane %v535, 4
        %v538 = vshll.u32 %v235, 16
        %v540 = vrot.slane %v538, 5
        %v541 = vsel %vm263, %v536, %v540
        %v542 = vshrl.u32 %v235, 16
        %v544 = vrot.slane %v542, 4
        %v545 = vor.u32 %v544, %v540
        %v546 = vrot.slane %v545, 4
        %v548 = vshll.u32 %v256, 16
        %v550 = vrot.slane %v548, 5
        %v551 = vsel %vm263, %v546, %v550
        %v553 = vshrl.u32 %v236, 16
        %v555 = vrot.slane %v553, 4
        %v556 = vshll.u32 %v236, 16
        %v558 = vrot.slane %v556, 5
        %v559 = vor.u32 %v555, %v558
        %v560 = vrot.slane %v559, 4
        %v562 = vshll.u32 %v237, 16
        %v564 = vrot.slane %v562, 5
        %v565 = vsel %vm263, %v560, %v564
        %v566 = vshrl.u32 %v237, 16
        %v568 = vrot.slane %v566, 4
        %v569 = vor.u32 %v568, %v564
        %v570 = vrot.slane %v569, 4
        %v572 = vshll.u32 %v257, 16
        %v574 = vrot.slane %v572, 5
        %v575 = vsel %vm263, %v570, %v574
        %v577 = vshrl.u32 %v238, 16
        %v579 = vrot.slane %v577, 4
        %v580 = vshll.u32 %v238, 16
        %v582 = vrot.slane %v580, 5
        %v583 = vor.u32 %v579, %v582
        %v584 = vrot.slane %v583, 4
        %v586 = vshll.u32 %v239, 16
        %v588 = vrot.slane %v586, 5
        %v589 = vsel %vm263, %v584, %v588
        %v590 = vshrl.u32 %v239, 16
        %v592 = vrot.slane %v590, 4
        %v593 = vor.u32 %v592, %v588
        %v594 = vrot.slane %v593, 4
        %v596 = vshll.u32 %v258, 16
        %v598 = vrot.slane %v596, 5
        %v599 = vsel %vm263, %v594, %v598
        %v601 = vshrl.u32 %v240, 16
        %v603 = vrot.slane %v601, 4
        %v604 = vshll.u32 %v240, 16
        %v606 = vrot.slane %v604, 5
        %v607 = vor.u32 %v603, %v606
        %v608 = vrot.slane %v607, 4
        %v610 = vshll.u32 %v241, 16
        %v612 = vrot.slane %v610, 5
        %v613 = vsel %vm263, %v608, %v612
        %v614 = vshrl.u32 %v241, 16
        %v616 = vrot.slane %v614, 4
        %v617 = vor.u32 %v616, %v612
        %v618 = vrot.slane %v617, 4
        %v620 = vshll.u32 %v259, 16
        %v622 = vrot.slane %v620, 5
        %v623 = vsel %vm263, %v618, %v622
        %v625 = vshrl.u32 %v242, 16
        %v627 = vrot.slane %v625, 4
        %v628 = vshll.u32 %v242, 16
        %v630 = vrot.slane %v628, 5
        %v631 = vor.u32 %v627, %v630
        %v632 = vrot.slane %v631, 4
        %v634 = vshll.u32 %v243, 16
        %v636 = vrot.slane %v634, 5
        %v637 = vsel %vm263, %v632, %v636
        %v638 = vshrl.u32 %v243, 16
        %v640 = vrot.slane %v638, 4
        %v641 = vor.u32 %v640, %v636
        %v642 = vrot.slane %v641, 4
        %v644 = vshll.u32 %v260, 16
        %v646 = vrot.slane %v644, 5
        %v647 = vsel %vm263, %v642, %v646
        %s648 = scalar_lea.vmem %s1, 2
        %v649 = vld [vmem:[%s648] sm:$0x3]
        %v650 = vunpack.c.l.b16 %v277
        %v651 = vunpack.c.l.b16 %v287
        %v652 = vunpack.c.l.b16 %v301
        %v653 = vunpack.c.l.b16 %v311
        %v654 = vunpack.c.l.b16 %v325
        %v655 = vunpack.c.l.b16 %v335
        %v656 = vunpack.c.l.b16 %v349
        %v657 = vunpack.c.l.b16 %v359
        %v658 = vunpack.c.l.b16 %v373
        %v659 = vunpack.c.l.b16 %v383
        %v660 = vunpack.c.l.b16 %v397
        %v661 = vunpack.c.l.b16 %v407
        %v662 = vunpack.c.l.b16 %v421
        %v663 = vunpack.c.l.b16 %v431
        %v664 = vunpack.c.l.b16 %v445
        %v665 = vunpack.c.l.b16 %v455
        %v666 = vunpack.c.l.b16 %v469
        %v667 = vunpack.c.l.b16 %v479
        %v668 = vunpack.c.l.b16 %v493
        %v669 = vunpack.c.l.b16 %v503
        %v670 = vunpack.c.l.b16 %v517
        %v671 = vunpack.c.l.b16 %v527
        %v672 = vunpack.c.l.b16 %v541
        %v673 = vunpack.c.l.b16 %v551
        %v674 = vunpack.c.l.b16 %v565
        %v675 = vunpack.c.l.b16 %v575
        %v676 = vunpack.c.l.b16 %v589
        %v677 = vunpack.c.l.b16 %v599
        %v678 = vunpack.c.l.b16 %v613
        %v679 = vunpack.c.l.b16 %v623
        %v680 = vunpack.c.l.b16 %v637
        %v681 = vunpack.c.l.b16 %v647
        %v682 = vpack.c.b16 %v651, %v650
        %v683 = vpack.c.b16 %v653, %v652
        %v684 = vpack.c.b16 %v655, %v654
        %v685 = vpack.c.b16 %v657, %v656
        %v686 = vpack.c.b16 %v659, %v658
        %v687 = vpack.c.b16 %v661, %v660
        %v688 = vpack.c.b16 %v663, %v662
        %v689 = vpack.c.b16 %v665, %v664
        %v690 = vpack.c.b16 %v667, %v666
        %v691 = vpack.c.b16 %v669, %v668
        %v692 = vpack.c.b16 %v671, %v670
        %v693 = vpack.c.b16 %v673, %v672
        %v694 = vpack.c.b16 %v675, %v674
        %v695 = vpack.c.b16 %v677, %v676
        %v696 = vpack.c.b16 %v679, %v678
        %v697 = vpack.c.b16 %v681, %v680
        %vm698 = vcmask 31744
        %v700 = vsel %vm698, %v682, 0
        %v703 = vsel %vm698, %v683, 0
        %v706 = vsel %vm698, %v684, 0
        %v709 = vsel %vm698, %v685, 0
        %v712 = vsel %vm698, %v686, 0
        %v715 = vsel %vm698, %v687, 0
        %v718 = vsel %vm698, %v688, 0
        %v721 = vsel %vm698, %v689, 0
        %v724 = vsel %vm698, %v690, 0
        %v727 = vsel %vm698, %v691, 0
        %v730 = vsel %vm698, %v692, 0
        %v733 = vsel %vm698, %v693, 0
        %v736 = vsel %vm698, %v694, 0
        %v739 = vsel %vm698, %v695, 0
        %v742 = vsel %vm698, %v696, 0
        %v745 = vsel %vm698, %v697, 0
        %vm747 = vcmask 1041408
        %v749 = vsel %vm747, %v649, 0
        %751 = vmatprep.subr.bf16.mxu0 0
        %752 = vmatpush1.bf16.msra.mxu0 0
        %753 = vmatprep.subr.bf16.mxu0 0
        %754 = vmatpush1.bf16.msra.mxu0 0
        %755 = vmatprep.subr.bf16.mxu0 0
        %756 = vmatpush1.bf16.msra.mxu0 0
        %757 = vmatprep.subr.bf16.mxu0 0
        %758 = vmatpush1.bf16.msra.mxu0 0
        %759 = vmatprep.subr.bf16.mxu0 0
        %760 = vmatpush1.bf16.msra.mxu0 0
        %761 = vmatprep.subr.bf16.mxu0 0
        %762 = vmatpush1.bf16.msra.mxu0 0
        %763 = vmatprep.subr.bf16.mxu0 0
        %764 = vmatpush1.bf16.msra.mxu0 0
        %765 = vmatprep.subr.bf16.mxu0 0
        %766 = vmatpush1.bf16.msra.mxu0 %v749
        %767 = vmatprep.subr.bf16.mxu0 0
        %768 = vmatpush2.bf16.msra.mxu0 0
        %769 = vmatprep.subr.bf16.mxu0 0
        %770 = vmatpush2.bf16.msra.mxu0 0
        %771 = vmatprep.subr.bf16.mxu0 0
        %772 = vmatpush2.bf16.msra.mxu0 0
        %773 = vmatprep.subr.bf16.mxu0 0
        %774 = vmatpush2.bf16.msra.mxu0 0
        %775 = vmatprep.subr.bf16.mxu0 0
        %776 = vmatpush2.bf16.msra.mxu0 0
        %777 = vmatprep.subr.bf16.mxu0 0
        %778 = vmatpush2.bf16.msra.mxu0 0
        %779 = vmatprep.subr.bf16.mxu0 0
        %780 = vmatpush2.bf16.msra.mxu0 0
        %781 = vmatprep.subr.bf16.mxu0 0
        %782 = vmatpush2.bf16.msra.mxu0 0
        %783 = vmatprep.mubr.bf16.mxu0 0
        %784 = vmatmul.mubr.bf16.gmra.mxu0 %v700
        %v785 = vpop.f32.mrf.mxu0
        %v786 = vadd.f32 0.0, %v785
        %v787 = vpop.f32.mrf.mxu0
        %v788 = vpop.f32.mrf.mxu0
        %v789 = vadd.f32 0.0, %v788
        %v790 = vpop.f32.mrf.mxu0
        %791 = vmatprep.mubr.bf16.mxu0 0
        %792 = vmatmul.mubr.bf16.gmra.mxu0 %v703
        %v793 = vpop.f32.mrf.mxu0
        %v794 = vadd.f32 0.0, %v793
        %v795 = vpop.f32.mrf.mxu0
        %v796 = vpop.f32.mrf.mxu0
        %v797 = vadd.f32 0.0, %v796
        %v798 = vpop.f32.mrf.mxu0
        %799 = vmatprep.mubr.bf16.mxu0 0
        %800 = vmatmul.mubr.bf16.gmra.mxu0 %v706
        %v801 = vpop.f32.mrf.mxu0
        %v802 = vadd.f32 0.0, %v801
        %v803 = vpop.f32.mrf.mxu0
        %v804 = vpop.f32.mrf.mxu0
        %v805 = vadd.f32 0.0, %v804
        %v806 = vpop.f32.mrf.mxu0
        %807 = vmatprep.mubr.bf16.mxu0 0
        %808 = vmatmul.mubr.bf16.gmra.mxu0 %v709
        %v809 = vpop.f32.mrf.mxu0
        %v810 = vadd.f32 0.0, %v809
        %v811 = vpop.f32.mrf.mxu0
        %v812 = vpop.f32.mrf.mxu0
        %v813 = vadd.f32 0.0, %v812
        %v814 = vpop.f32.mrf.mxu0
        %815 = vmatprep.mubr.bf16.mxu0 0
        %816 = vmatmul.mubr.bf16.gmra.mxu0 %v712
        %v817 = vpop.f32.mrf.mxu0
        %v818 = vadd.f32 0.0, %v817
        %v819 = vpop.f32.mrf.mxu0
        %v820 = vpop.f32.mrf.mxu0
        %v821 = vadd.f32 0.0, %v820
        %v822 = vpop.f32.mrf.mxu0
        %823 = vmatprep.mubr.bf16.mxu0 0
        %824 = vmatmul.mubr.bf16.gmra.mxu0 %v715
        %v825 = vpop.f32.mrf.mxu0
        %v826 = vadd.f32 0.0, %v825
        %v827 = vpop.f32.mrf.mxu0
        %v828 = vpop.f32.mrf.mxu0
        %v829 = vadd.f32 0.0, %v828
        %v830 = vpop.f32.mrf.mxu0
        %831 = vmatprep.mubr.bf16.mxu0 0
        %832 = vmatmul.mubr.bf16.gmra.mxu0 %v718
        %v833 = vpop.f32.mrf.mxu0
        %v834 = vadd.f32 0.0, %v833
        %v835 = vpop.f32.mrf.mxu0
        %v836 = vpop.f32.mrf.mxu0
        %v837 = vadd.f32 0.0, %v836
        %v838 = vpop.f32.mrf.mxu0
        %839 = vmatprep.mubr.bf16.mxu0 0
        %840 = vmatmul.mubr.bf16.gmra.mxu0 %v721
        %v841 = vpop.f32.mrf.mxu0
        %v842 = vadd.f32 0.0, %v841
        %v843 = vpop.f32.mrf.mxu0
        %v844 = vpop.f32.mrf.mxu0
        %v845 = vadd.f32 0.0, %v844
        %v846 = vpop.f32.mrf.mxu0
        %847 = vmatprep.mubr.bf16.mxu0 0
        %848 = vmatmul.mubr.bf16.gmra.mxu0 %v724
        %v849 = vpop.f32.mrf.mxu0
        %v850 = vadd.f32 0.0, %v849
        %v851 = vpop.f32.mrf.mxu0
        %v852 = vpop.f32.mrf.mxu0
        %v853 = vadd.f32 0.0, %v852
        %v854 = vpop.f32.mrf.mxu0
        %855 = vmatprep.mubr.bf16.mxu0 0
        %856 = vmatmul.mubr.bf16.gmra.mxu0 %v727
        %v857 = vpop.f32.mrf.mxu0
        %v858 = vadd.f32 0.0, %v857
        %v859 = vpop.f32.mrf.mxu0
        %v860 = vpop.f32.mrf.mxu0
        %v861 = vadd.f32 0.0, %v860
        %v862 = vpop.f32.mrf.mxu0
        %863 = vmatprep.mubr.bf16.mxu0 0
        %864 = vmatmul.mubr.bf16.gmra.mxu0 %v730
        %v865 = vpop.f32.mrf.mxu0
        %v866 = vadd.f32 0.0, %v865
        %v867 = vpop.f32.mrf.mxu0
        %v868 = vpop.f32.mrf.mxu0
        %v869 = vadd.f32 0.0, %v868
        %v870 = vpop.f32.mrf.mxu0
        %871 = vmatprep.mubr.bf16.mxu0 0
        %872 = vmatmul.mubr.bf16.gmra.mxu0 %v733
        %v873 = vpop.f32.mrf.mxu0
        %v874 = vadd.f32 0.0, %v873
        %v875 = vpop.f32.mrf.mxu0
        %v876 = vpop.f32.mrf.mxu0
        %v877 = vadd.f32 0.0, %v876
        %v878 = vpop.f32.mrf.mxu0
        %879 = vmatprep.mubr.bf16.mxu0 0
        %880 = vmatmul.mubr.bf16.gmra.mxu0 %v736
        %v881 = vpop.f32.mrf.mxu0
        %v882 = vadd.f32 0.0, %v881
        %v883 = vpop.f32.mrf.mxu0
        %v884 = vpop.f32.mrf.mxu0
        %v885 = vadd.f32 0.0, %v884
        %v886 = vpop.f32.mrf.mxu0
        %887 = vmatprep.mubr.bf16.mxu0 0
        %888 = vmatmul.mubr.bf16.gmra.mxu0 %v739
        %v889 = vpop.f32.mrf.mxu0
        %v890 = vadd.f32 0.0, %v889
        %v891 = vpop.f32.mrf.mxu0
        %v892 = vpop.f32.mrf.mxu0
        %v893 = vadd.f32 0.0, %v892
        %v894 = vpop.f32.mrf.mxu0
        %895 = vmatprep.mubr.bf16.mxu0 0
        %896 = vmatmul.mubr.bf16.gmra.mxu0 %v742
        %v897 = vpop.f32.mrf.mxu0
        %v898 = vadd.f32 0.0, %v897
        %v899 = vpop.f32.mrf.mxu0
        %v900 = vpop.f32.mrf.mxu0
        %v901 = vadd.f32 0.0, %v900
        %v902 = vpop.f32.mrf.mxu0
        %903 = vmatprep.mubr.bf16.mxu0 0
        %904 = vmatmul.mubr.bf16.gmra.mxu0 %v745
        %v905 = vpop.f32.mrf.mxu0
        %v906 = vadd.f32 0.0, %v905
        %v907 = vpop.f32.mrf.mxu0
        %v908 = vpop.f32.mrf.mxu0
        %v909 = vadd.f32 0.0, %v908
        %v910 = vpop.f32.mrf.mxu0
        %911 = vdwg.mxu0
        %v944 = vunpack.c.l.b16 %v212
        %v945 = vunpack.c.l.b16 %v213
        %v946 = vunpack.c.l.b16 %v214
        %v947 = vunpack.c.l.b16 %v215
        %v948 = vunpack.c.l.b16 %v216
        %v949 = vunpack.c.l.b16 %v217
        %v950 = vunpack.c.l.b16 %v218
        %v951 = vunpack.c.l.b16 %v219
        %v952 = vunpack.c.l.b16 %v220
        %v953 = vunpack.c.l.b16 %v221
        %v954 = vunpack.c.l.b16 %v222
        %v955 = vunpack.c.l.b16 %v223
        %v956 = vunpack.c.l.b16 %v224
        %v957 = vunpack.c.l.b16 %v225
        %v958 = vunpack.c.l.b16 %v226
        %v959 = vunpack.c.l.b16 %v227
        %v960 = vunpack.c.l.b16 %v228
        %v961 = vunpack.c.l.b16 %v229
        %v962 = vunpack.c.l.b16 %v230
        %v963 = vunpack.c.l.b16 %v231
        %v964 = vunpack.c.l.b16 %v232
        %v965 = vunpack.c.l.b16 %v233
        %v966 = vunpack.c.l.b16 %v234
        %v967 = vunpack.c.l.b16 %v235
        %v968 = vunpack.c.l.b16 %v236
        %v969 = vunpack.c.l.b16 %v237
        %v970 = vunpack.c.l.b16 %v238
        %v971 = vunpack.c.l.b16 %v239
        %v972 = vunpack.c.l.b16 %v240
        %v973 = vunpack.c.l.b16 %v241
        %v974 = vunpack.c.l.b16 %v242
        %v975 = vunpack.c.l.b16 %v243
        %v976 = vpack.c.b16 %v945, %v944
        %v977 = vpack.c.b16 %v947, %v946
        %v978 = vpack.c.b16 %v949, %v948
        %v979 = vpack.c.b16 %v951, %v950
        %v980 = vpack.c.b16 %v953, %v952
        %v981 = vpack.c.b16 %v955, %v954
        %v982 = vpack.c.b16 %v957, %v956
        %v983 = vpack.c.b16 %v959, %v958
        %v984 = vpack.c.b16 %v961, %v960
        %v985 = vpack.c.b16 %v963, %v962
        %v986 = vpack.c.b16 %v965, %v964
        %v987 = vpack.c.b16 %v967, %v966
        %v988 = vpack.c.b16 %v969, %v968
        %v989 = vpack.c.b16 %v971, %v970
        %v990 = vpack.c.b16 %v973, %v972
        %v991 = vpack.c.b16 %v975, %v974
        %v993 = vsel %vm698, %v976, 0
        %v996 = vsel %vm698, %v977, 0
        %v999 = vsel %vm698, %v978, 0
        %v1002 = vsel %vm698, %v979, 0
        %v1005 = vsel %vm698, %v980, 0
        %v1008 = vsel %vm698, %v981, 0
        %v1011 = vsel %vm698, %v982, 0
        %v1014 = vsel %vm698, %v983, 0
        %v1017 = vsel %vm698, %v984, 0
        %v1020 = vsel %vm698, %v985, 0
        %v1023 = vsel %vm698, %v986, 0
        %v1026 = vsel %vm698, %v987, 0
        %v1029 = vsel %vm698, %v988, 0
        %v1032 = vsel %vm698, %v989, 0
        %v1035 = vsel %vm698, %v990, 0
        %v1038 = vsel %vm698, %v991, 0
        %v1041 = vsel %vm747, %v244, 0
        %1043 = vmatprep.subr.bf16.mxu0 0
        %1044 = vmatpush1.bf16.msra.mxu0 0
        %1045 = vmatprep.subr.bf16.mxu0 0
        %1046 = vmatpush1.bf16.msra.mxu0 0
        %1047 = vmatprep.subr.bf16.mxu0 0
        %1048 = vmatpush1.bf16.msra.mxu0 0
        %1049 = vmatprep.subr.bf16.mxu0 0
        %1050 = vmatpush1.bf16.msra.mxu0 0
        %1051 = vmatprep.subr.bf16.mxu0 0
        %1052 = vmatpush1.bf16.msra.mxu0 0
        %1053 = vmatprep.subr.bf16.mxu0 0
        %1054 = vmatpush1.bf16.msra.mxu0 0
        %1055 = vmatprep.subr.bf16.mxu0 0
        %1056 = vmatpush1.bf16.msra.mxu0 0
        %1057 = vmatprep.subr.bf16.mxu0 0
        %1058 = vmatpush1.bf16.msra.mxu0 %v1041
        %1059 = vmatprep.subr.bf16.mxu0 0
        %1060 = vmatpush2.bf16.msra.mxu0 0
        %1061 = vmatprep.subr.bf16.mxu0 0
        %1062 = vmatpush2.bf16.msra.mxu0 0
        %1063 = vmatprep.subr.bf16.mxu0 0
        %1064 = vmatpush2.bf16.msra.mxu0 0
        %1065 = vmatprep.subr.bf16.mxu0 0
        %1066 = vmatpush2.bf16.msra.mxu0 0
        %1067 = vmatprep.subr.bf16.mxu0 0
        %1068 = vmatpush2.bf16.msra.mxu0 0
        %1069 = vmatprep.subr.bf16.mxu0 0
        %1070 = vmatpush2.bf16.msra.mxu0 0
        %1071 = vmatprep.subr.bf16.mxu0 0
        %1072 = vmatpush2.bf16.msra.mxu0 0
        %1073 = vmatprep.subr.bf16.mxu0 0
        %1074 = vmatpush2.bf16.msra.mxu0 0
        %1075 = vmatprep.mubr.bf16.mxu0 0
        %1076 = vmatmul.mubr.bf16.gmra.mxu0 %v993
        %v1077 = vpop.f32.mrf.mxu0
        %v1078 = vadd.f32 %v786, %v1077
        %v1079 = vpop.f32.mrf.mxu0
        %v1080 = vpop.f32.mrf.mxu0
        %v1081 = vadd.f32 %v789, %v1080
        %v1082 = vpop.f32.mrf.mxu0
        %1083 = vmatprep.mubr.bf16.mxu0 0
        %1084 = vmatmul.mubr.bf16.gmra.mxu0 %v996
        %v1085 = vpop.f32.mrf.mxu0
        %v1086 = vadd.f32 %v794, %v1085
        %v1087 = vpop.f32.mrf.mxu0
        %v1088 = vpop.f32.mrf.mxu0
        %v1089 = vadd.f32 %v797, %v1088
        %v1090 = vpop.f32.mrf.mxu0
        %1091 = vmatprep.mubr.bf16.mxu0 0
        %1092 = vmatmul.mubr.bf16.gmra.mxu0 %v999
        %v1093 = vpop.f32.mrf.mxu0
        %v1094 = vadd.f32 %v802, %v1093
        %v1095 = vpop.f32.mrf.mxu0
        %v1096 = vpop.f32.mrf.mxu0
        %v1097 = vadd.f32 %v805, %v1096
        %v1098 = vpop.f32.mrf.mxu0
        %1099 = vmatprep.mubr.bf16.mxu0 0
        %1100 = vmatmul.mubr.bf16.gmra.mxu0 %v1002
        %v1101 = vpop.f32.mrf.mxu0
        %v1102 = vadd.f32 %v810, %v1101
        %v1103 = vpop.f32.mrf.mxu0
        %v1104 = vpop.f32.mrf.mxu0
        %v1105 = vadd.f32 %v813, %v1104
        %v1106 = vpop.f32.mrf.mxu0
        %1107 = vmatprep.mubr.bf16.mxu0 0
        %1108 = vmatmul.mubr.bf16.gmra.mxu0 %v1005
        %v1109 = vpop.f32.mrf.mxu0
        %v1110 = vadd.f32 %v818, %v1109
        %v1111 = vpop.f32.mrf.mxu0
        %v1112 = vpop.f32.mrf.mxu0
        %v1113 = vadd.f32 %v821, %v1112
        %v1114 = vpop.f32.mrf.mxu0
        %1115 = vmatprep.mubr.bf16.mxu0 0
        %1116 = vmatmul.mubr.bf16.gmra.mxu0 %v1008
        %v1117 = vpop.f32.mrf.mxu0
        %v1118 = vadd.f32 %v826, %v1117
        %v1119 = vpop.f32.mrf.mxu0
        %v1120 = vpop.f32.mrf.mxu0
        %v1121 = vadd.f32 %v829, %v1120
        %v1122 = vpop.f32.mrf.mxu0
        %1123 = vmatprep.mubr.bf16.mxu0 0
        %1124 = vmatmul.mubr.bf16.gmra.mxu0 %v1011
        %v1125 = vpop.f32.mrf.mxu0
        %v1126 = vadd.f32 %v834, %v1125
        %v1127 = vpop.f32.mrf.mxu0
        %v1128 = vpop.f32.mrf.mxu0
        %v1129 = vadd.f32 %v837, %v1128
        %v1130 = vpop.f32.mrf.mxu0
        %1131 = vmatprep.mubr.bf16.mxu0 0
        %1132 = vmatmul.mubr.bf16.gmra.mxu0 %v1014
        %v1133 = vpop.f32.mrf.mxu0
        %v1134 = vadd.f32 %v842, %v1133
        %v1135 = vpop.f32.mrf.mxu0
        %v1136 = vpop.f32.mrf.mxu0
        %v1137 = vadd.f32 %v845, %v1136
        %v1138 = vpop.f32.mrf.mxu0
        %1139 = vmatprep.mubr.bf16.mxu0 0
        %1140 = vmatmul.mubr.bf16.gmra.mxu0 %v1017
        %v1141 = vpop.f32.mrf.mxu0
        %v1142 = vadd.f32 %v850, %v1141
        %v1143 = vpop.f32.mrf.mxu0
        %v1144 = vpop.f32.mrf.mxu0
        %v1145 = vadd.f32 %v853, %v1144
        %v1146 = vpop.f32.mrf.mxu0
        %1147 = vmatprep.mubr.bf16.mxu0 0
        %1148 = vmatmul.mubr.bf16.gmra.mxu0 %v1020
        %v1149 = vpop.f32.mrf.mxu0
        %v1150 = vadd.f32 %v858, %v1149
        %v1151 = vpop.f32.mrf.mxu0
        %v1152 = vpop.f32.mrf.mxu0
        %v1153 = vadd.f32 %v861, %v1152
        %v1154 = vpop.f32.mrf.mxu0
        %1155 = vmatprep.mubr.bf16.mxu0 0
        %1156 = vmatmul.mubr.bf16.gmra.mxu0 %v1023
        %v1157 = vpop.f32.mrf.mxu0
        %v1158 = vadd.f32 %v866, %v1157
        %v1159 = vpop.f32.mrf.mxu0
        %v1160 = vpop.f32.mrf.mxu0
        %v1161 = vadd.f32 %v869, %v1160
        %v1162 = vpop.f32.mrf.mxu0
        %1163 = vmatprep.mubr.bf16.mxu0 0
        %1164 = vmatmul.mubr.bf16.gmra.mxu0 %v1026
        %v1165 = vpop.f32.mrf.mxu0
        %v1166 = vadd.f32 %v874, %v1165
        %v1167 = vpop.f32.mrf.mxu0
        %v1168 = vpop.f32.mrf.mxu0
        %v1169 = vadd.f32 %v877, %v1168
        %v1170 = vpop.f32.mrf.mxu0
        %1171 = vmatprep.mubr.bf16.mxu0 0
        %1172 = vmatmul.mubr.bf16.gmra.mxu0 %v1029
        %v1173 = vpop.f32.mrf.mxu0
        %v1174 = vadd.f32 %v882, %v1173
        %v1175 = vpop.f32.mrf.mxu0
        %v1176 = vpop.f32.mrf.mxu0
        %v1177 = vadd.f32 %v885, %v1176
        %v1178 = vpop.f32.mrf.mxu0
        %1179 = vmatprep.mubr.bf16.mxu0 0
        %1180 = vmatmul.mubr.bf16.gmra.mxu0 %v1032
        %v1181 = vpop.f32.mrf.mxu0
        %v1182 = vadd.f32 %v890, %v1181
        %v1183 = vpop.f32.mrf.mxu0
        %v1184 = vpop.f32.mrf.mxu0
        %v1185 = vadd.f32 %v893, %v1184
        %v1186 = vpop.f32.mrf.mxu0
        %1187 = vmatprep.mubr.bf16.mxu0 0
        %1188 = vmatmul.mubr.bf16.gmra.mxu0 %v1035
        %v1189 = vpop.f32.mrf.mxu0
        %v1190 = vadd.f32 %v898, %v1189
        %v1191 = vpop.f32.mrf.mxu0
        %v1192 = vpop.f32.mrf.mxu0
        %v1193 = vadd.f32 %v901, %v1192
        %v1194 = vpop.f32.mrf.mxu0
        %1195 = vmatprep.mubr.bf16.mxu0 0
        %1196 = vmatmul.mubr.bf16.gmra.mxu0 %v1038
        %v1197 = vpop.f32.mrf.mxu0
        %v1198 = vadd.f32 %v906, %v1197
        %v1199 = vpop.f32.mrf.mxu0
        %v1200 = vpop.f32.mrf.mxu0
        %v1201 = vadd.f32 %v909, %v1200
        %v1202 = vpop.f32.mrf.mxu0
        %1203 = vdwg.mxu0
        %v1204 = vld [vmem:[%s211] sm:$0xe]
        %v1205 = vld [vmem:[%s211 + $0xc] sm:$0xe]
        %v1206 = vld [vmem:[%s211 + $0x18] sm:$0xe]
        %v1207 = vld [vmem:[%s211 + $0x24] sm:$0xe]
        %v1208 = vld [vmem:[%s211 + $0x30] sm:$0xe]
        %v1209 = vld [vmem:[%s211 + $0x3c] sm:$0xe]
        %v1210 = vld [vmem:[%s211 + $0x48] sm:$0xe]
        %v1211 = vld [vmem:[%s211 + $0x54] sm:$0xe]
        %v1212 = vld [vmem:[%s211 + $0x60] sm:$0xe]
        %v1213 = vld [vmem:[%s211 + $0x6c] sm:$0xe]
        %v1214 = vld [vmem:[%s211 + $0x78] sm:$0xe]
        %v1215 = vld [vmem:[%s211 + $0x84] sm:$0xe]
        %v1216 = vld [vmem:[%s211 + $0x90] sm:$0xe]
        %v1217 = vld [vmem:[%s211 + $0x9c] sm:$0xe]
        %v1218 = vld [vmem:[%s211 + $0xa8] sm:$0xe]
        %v1219 = vld [vmem:[%s211 + $0xb4] sm:$0xe]
        %vm1252 = vcmask 1042432
        %vm1253 = vcmask 1046532
        %vm1254 = vmor %vm1252, %vm1253
        %v1255 = vrot.slane %v1204, 5
        %v1256 = vrot.slane %v1255, 4
        %v1257 = vrot.slane %v213, 5
        %v1258 = vsel %vm1254, %v1256, %v1257
        %v1259 = vrot.slane %v1257, 4
        %v1260 = vrot.slane %v245, 5
        %v1261 = vsel %vm1254, %v1259, %v1260
        %v1262 = vrot.slane %v1205, 5
        %v1263 = vrot.slane %v1262, 4
        %v1264 = vrot.slane %v215, 5
        %v1265 = vsel %vm1254, %v1263, %v1264
        %v1266 = vrot.slane %v1264, 4
        %v1267 = vrot.slane %v246, 5
        %v1268 = vsel %vm1254, %v1266, %v1267
        %v1269 = vrot.slane %v1206, 5
        %v1270 = vrot.slane %v1269, 4
        %v1271 = vrot.slane %v217, 5
        %v1272 = vsel %vm1254, %v1270, %v1271
        %v1273 = vrot.slane %v1271, 4
        %v1274 = vrot.slane %v247, 5
        %v1275 = vsel %vm1254, %v1273, %v1274
        %v1276 = vrot.slane %v1207, 5
        %v1277 = vrot.slane %v1276, 4
        %v1278 = vrot.slane %v219, 5
        %v1279 = vsel %vm1254, %v1277, %v1278
        %v1280 = vrot.slane %v1278, 4
        %v1281 = vrot.slane %v248, 5
        %v1282 = vsel %vm1254, %v1280, %v1281
        %v1283 = vrot.slane %v1208, 5
        %v1284 = vrot.slane %v1283, 4
        %v1285 = vrot.slane %v221, 5
        %v1286 = vsel %vm1254, %v1284, %v1285
        %v1287 = vrot.slane %v1285, 4
        %v1288 = vrot.slane %v249, 5
        %v1289 = vsel %vm1254, %v1287, %v1288
        %v1290 = vrot.slane %v1209, 5
        %v1291 = vrot.slane %v1290, 4
        %v1292 = vrot.slane %v223, 5
        %v1293 = vsel %vm1254, %v1291, %v1292
        %v1294 = vrot.slane %v1292, 4
        %v1295 = vrot.slane %v250, 5
        %v1296 = vsel %vm1254, %v1294, %v1295
        %v1297 = vrot.slane %v1210, 5
        %v1298 = vrot.slane %v1297, 4
        %v1299 = vrot.slane %v225, 5
        %v1300 = vsel %vm1254, %v1298, %v1299
        %v1301 = vrot.slane %v1299, 4
        %v1302 = vrot.slane %v251, 5
        %v1303 = vsel %vm1254, %v1301, %v1302
        %v1304 = vrot.slane %v1211, 5
        %v1305 = vrot.slane %v1304, 4
        %v1306 = vrot.slane %v227, 5
        %v1307 = vsel %vm1254, %v1305, %v1306
        %v1308 = vrot.slane %v1306, 4
        %v1309 = vrot.slane %v252, 5
        %v1310 = vsel %vm1254, %v1308, %v1309
        %v1311 = vrot.slane %v1212, 5
        %v1312 = vrot.slane %v1311, 4
        %v1313 = vrot.slane %v229, 5
        %v1314 = vsel %vm1254, %v1312, %v1313
        %v1315 = vrot.slane %v1313, 4
        %v1316 = vrot.slane %v253, 5
        %v1317 = vsel %vm1254, %v1315, %v1316
        %v1318 = vrot.slane %v1213, 5
        %v1319 = vrot.slane %v1318, 4
        %v1320 = vrot.slane %v231, 5
        %v1321 = vsel %vm1254, %v1319, %v1320
        %v1322 = vrot.slane %v1320, 4
        %v1323 = vrot.slane %v254, 5
        %v1324 = vsel %vm1254, %v1322, %v1323
        %v1325 = vrot.slane %v1214, 5
        %v1326 = vrot.slane %v1325, 4
        %v1327 = vrot.slane %v233, 5
        %v1328 = vsel %vm1254, %v1326, %v1327
        %v1329 = vrot.slane %v1327, 4
        %v1330 = vrot.slane %v255, 5
        %v1331 = vsel %vm1254, %v1329, %v1330
        %v1332 = vrot.slane %v1215, 5
        %v1333 = vrot.slane %v1332, 4
        %v1334 = vrot.slane %v235, 5
        %v1335 = vsel %vm1254, %v1333, %v1334
        %v1336 = vrot.slane %v1334, 4
        %v1337 = vrot.slane %v256, 5
        %v1338 = vsel %vm1254, %v1336, %v1337
        %v1339 = vrot.slane %v1216, 5
        %v1340 = vrot.slane %v1339, 4
        %v1341 = vrot.slane %v237, 5
        %v1342 = vsel %vm1254, %v1340, %v1341
        %v1343 = vrot.slane %v1341, 4
        %v1344 = vrot.slane %v257, 5
        %v1345 = vsel %vm1254, %v1343, %v1344
        %v1346 = vrot.slane %v1217, 5
        %v1347 = vrot.slane %v1346, 4
        %v1348 = vrot.slane %v239, 5
        %v1349 = vsel %vm1254, %v1347, %v1348
        %v1350 = vrot.slane %v1348, 4
        %v1351 = vrot.slane %v258, 5
        %v1352 = vsel %vm1254, %v1350, %v1351
        %v1353 = vrot.slane %v1218, 5
        %v1354 = vrot.slane %v1353, 4
        %v1355 = vrot.slane %v241, 5
        %v1356 = vsel %vm1254, %v1354, %v1355
        %v1357 = vrot.slane %v1355, 4
        %v1358 = vrot.slane %v259, 5
        %v1359 = vsel %vm1254, %v1357, %v1358
        %v1360 = vrot.slane %v1219, 5
        %v1361 = vrot.slane %v1360, 4
        %v1362 = vrot.slane %v243, 5
        %v1363 = vsel %vm1254, %v1361, %v1362
        %v1364 = vrot.slane %v1362, 4
        %v1365 = vrot.slane %v260, 5
        %v1366 = vsel %vm1254, %v1364, %v1365
        %s1367 = scalar_lea.vmem %s1, 4
        %v1368 = vld [vmem:[%s1367] sm:$0x3]
        %v1369 = vunpack.c.l.b16 %v1258
        %v1370 = vunpack.c.l.b16 %v1261
        %v1371 = vunpack.c.l.b16 %v1265
        %v1372 = vunpack.c.l.b16 %v1268
        %v1373 = vunpack.c.l.b16 %v1272
        %v1374 = vunpack.c.l.b16 %v1275
        %v1375 = vunpack.c.l.b16 %v1279
        %v1376 = vunpack.c.l.b16 %v1282
        %v1377 = vunpack.c.l.b16 %v1286
        %v1378 = vunpack.c.l.b16 %v1289
        %v1379 = vunpack.c.l.b16 %v1293
        %v1380 = vunpack.c.l.b16 %v1296
        %v1381 = vunpack.c.l.b16 %v1300
        %v1382 = vunpack.c.l.b16 %v1303
        %v1383 = vunpack.c.l.b16 %v1307
        %v1384 = vunpack.c.l.b16 %v1310
        %v1385 = vunpack.c.l.b16 %v1314
        %v1386 = vunpack.c.l.b16 %v1317
        %v1387 = vunpack.c.l.b16 %v1321
        %v1388 = vunpack.c.l.b16 %v1324
        %v1389 = vunpack.c.l.b16 %v1328
        %v1390 = vunpack.c.l.b16 %v1331
        %v1391 = vunpack.c.l.b16 %v1335
        %v1392 = vunpack.c.l.b16 %v1338
        %v1393 = vunpack.c.l.b16 %v1342
        %v1394 = vunpack.c.l.b16 %v1345
        %v1395 = vunpack.c.l.b16 %v1349
        %v1396 = vunpack.c.l.b16 %v1352
        %v1397 = vunpack.c.l.b16 %v1356
        %v1398 = vunpack.c.l.b16 %v1359
        %v1399 = vunpack.c.l.b16 %v1363
        %v1400 = vunpack.c.l.b16 %v1366
        %v1401 = vpack.c.b16 %v1370, %v1369
        %v1402 = vpack.c.b16 %v1372, %v1371
        %v1403 = vpack.c.b16 %v1374, %v1373
        %v1404 = vpack.c.b16 %v1376, %v1375
        %v1405 = vpack.c.b16 %v1378, %v1377
        %v1406 = vpack.c.b16 %v1380, %v1379
        %v1407 = vpack.c.b16 %v1382, %v1381
        %v1408 = vpack.c.b16 %v1384, %v1383
        %v1409 = vpack.c.b16 %v1386, %v1385
        %v1410 = vpack.c.b16 %v1388, %v1387
        %v1411 = vpack.c.b16 %v1390, %v1389
        %v1412 = vpack.c.b16 %v1392, %v1391
        %v1413 = vpack.c.b16 %v1394, %v1393
        %v1414 = vpack.c.b16 %v1396, %v1395
        %v1415 = vpack.c.b16 %v1398, %v1397
        %v1416 = vpack.c.b16 %v1400, %v1399
        %v1418 = vsel %vm698, %v1401, 0
        %v1421 = vsel %vm698, %v1402, 0
        %v1424 = vsel %vm698, %v1403, 0
        %v1427 = vsel %vm698, %v1404, 0
        %v1430 = vsel %vm698, %v1405, 0
        %v1433 = vsel %vm698, %v1406, 0
        %v1436 = vsel %vm698, %v1407, 0
        %v1439 = vsel %vm698, %v1408, 0
        %v1442 = vsel %vm698, %v1409, 0
        %v1445 = vsel %vm698, %v1410, 0
        %v1448 = vsel %vm698, %v1411, 0
        %v1451 = vsel %vm698, %v1412, 0
        %v1454 = vsel %vm698, %v1413, 0
        %v1457 = vsel %vm698, %v1414, 0
        %v1460 = vsel %vm698, %v1415, 0
        %v1463 = vsel %vm698, %v1416, 0
        %v1466 = vsel %vm747, %v1368, 0
        %1468 = vmatprep.subr.bf16.mxu0 0
        %1469 = vmatpush1.bf16.msra.mxu0 0
        %1470 = vmatprep.subr.bf16.mxu0 0
        %1471 = vmatpush1.bf16.msra.mxu0 0
        %1472 = vmatprep.subr.bf16.mxu0 0
        %1473 = vmatpush1.bf16.msra.mxu0 0
        %1474 = vmatprep.subr.bf16.mxu0 0
        %1475 = vmatpush1.bf16.msra.mxu0 0
        %1476 = vmatprep.subr.bf16.mxu0 0
        %1477 = vmatpush1.bf16.msra.mxu0 0
        %1478 = vmatprep.subr.bf16.mxu0 0
        %1479 = vmatpush1.bf16.msra.mxu0 0
        %1480 = vmatprep.subr.bf16.mxu0 0
        %1481 = vmatpush1.bf16.msra.mxu0 0
        %1482 = vmatprep.subr.bf16.mxu0 0
        %1483 = vmatpush1.bf16.msra.mxu0 %v1466
        %1484 = vmatprep.subr.bf16.mxu0 0
        %1485 = vmatpush2.bf16.msra.mxu0 0
        %1486 = vmatprep.subr.bf16.mxu0 0
        %1487 = vmatpush2.bf16.msra.mxu0 0
        %1488 = vmatprep.subr.bf16.mxu0 0
        %1489 = vmatpush2.bf16.msra.mxu0 0
        %1490 = vmatprep.subr.bf16.mxu0 0
        %1491 = vmatpush2.bf16.msra.mxu0 0
        %1492 = vmatprep.subr.bf16.mxu0 0
        %1493 = vmatpush2.bf16.msra.mxu0 0
        %1494 = vmatprep.subr.bf16.mxu0 0
        %1495 = vmatpush2.bf16.msra.mxu0 0
        %1496 = vmatprep.subr.bf16.mxu0 0
        %1497 = vmatpush2.bf16.msra.mxu0 0
        %1498 = vmatprep.subr.bf16.mxu0 0
        %1499 = vmatpush2.bf16.msra.mxu0 0
        %1500 = vmatprep.mubr.bf16.mxu0 0
        %1501 = vmatmul.mubr.bf16.gmra.mxu0 %v1418
        %v1502 = vpop.f32.mrf.mxu0
        %v1503 = vadd.f32 0.0, %v1502
        %v1504 = vpop.f32.mrf.mxu0
        %v1505 = vpop.f32.mrf.mxu0
        %v1506 = vadd.f32 0.0, %v1505
        %v1507 = vpop.f32.mrf.mxu0
        %1508 = vmatprep.mubr.bf16.mxu0 0
        %1509 = vmatmul.mubr.bf16.gmra.mxu0 %v1421
        %v1510 = vpop.f32.mrf.mxu0
        %v1511 = vadd.f32 0.0, %v1510
        %v1512 = vpop.f32.mrf.mxu0
        %v1513 = vpop.f32.mrf.mxu0
        %v1514 = vadd.f32 0.0, %v1513
        %v1515 = vpop.f32.mrf.mxu0
        %1516 = vmatprep.mubr.bf16.mxu0 0
        %1517 = vmatmul.mubr.bf16.gmra.mxu0 %v1424
        %v1518 = vpop.f32.mrf.mxu0
        %v1519 = vadd.f32 0.0, %v1518
        %v1520 = vpop.f32.mrf.mxu0
        %v1521 = vpop.f32.mrf.mxu0
        %v1522 = vadd.f32 0.0, %v1521
        %v1523 = vpop.f32.mrf.mxu0
        %1524 = vmatprep.mubr.bf16.mxu0 0
        %1525 = vmatmul.mubr.bf16.gmra.mxu0 %v1427
        %v1526 = vpop.f32.mrf.mxu0
        %v1527 = vadd.f32 0.0, %v1526
        %v1528 = vpop.f32.mrf.mxu0
        %v1529 = vpop.f32.mrf.mxu0
        %v1530 = vadd.f32 0.0, %v1529
        %v1531 = vpop.f32.mrf.mxu0
        %1532 = vmatprep.mubr.bf16.mxu0 0
        %1533 = vmatmul.mubr.bf16.gmra.mxu0 %v1430
        %v1534 = vpop.f32.mrf.mxu0
        %v1535 = vadd.f32 0.0, %v1534
        %v1536 = vpop.f32.mrf.mxu0
        %v1537 = vpop.f32.mrf.mxu0
        %v1538 = vadd.f32 0.0, %v1537
        %v1539 = vpop.f32.mrf.mxu0
        %1540 = vmatprep.mubr.bf16.mxu0 0
        %1541 = vmatmul.mubr.bf16.gmra.mxu0 %v1433
        %v1542 = vpop.f32.mrf.mxu0
        %v1543 = vadd.f32 0.0, %v1542
        %v1544 = vpop.f32.mrf.mxu0
        %v1545 = vpop.f32.mrf.mxu0
        %v1546 = vadd.f32 0.0, %v1545
        %v1547 = vpop.f32.mrf.mxu0
        %1548 = vmatprep.mubr.bf16.mxu0 0
        %1549 = vmatmul.mubr.bf16.gmra.mxu0 %v1436
        %v1550 = vpop.f32.mrf.mxu0
        %v1551 = vadd.f32 0.0, %v1550
        %v1552 = vpop.f32.mrf.mxu0
        %v1553 = vpop.f32.mrf.mxu0
        %v1554 = vadd.f32 0.0, %v1553
        %v1555 = vpop.f32.mrf.mxu0
        %1556 = vmatprep.mubr.bf16.mxu0 0
        %1557 = vmatmul.mubr.bf16.gmra.mxu0 %v1439
        %v1558 = vpop.f32.mrf.mxu0
        %v1559 = vadd.f32 0.0, %v1558
        %v1560 = vpop.f32.mrf.mxu0
        %v1561 = vpop.f32.mrf.mxu0
        %v1562 = vadd.f32 0.0, %v1561
        %v1563 = vpop.f32.mrf.mxu0
        %1564 = vmatprep.mubr.bf16.mxu0 0
        %1565 = vmatmul.mubr.bf16.gmra.mxu0 %v1442
        %v1566 = vpop.f32.mrf.mxu0
        %v1567 = vadd.f32 0.0, %v1566
        %v1568 = vpop.f32.mrf.mxu0
        %v1569 = vpop.f32.mrf.mxu0
        %v1570 = vadd.f32 0.0, %v1569
        %v1571 = vpop.f32.mrf.mxu0
        %1572 = vmatprep.mubr.bf16.mxu0 0
        %1573 = vmatmul.mubr.bf16.gmra.mxu0 %v1445
        %v1574 = vpop.f32.mrf.mxu0
        %v1575 = vadd.f32 0.0, %v1574
        %v1576 = vpop.f32.mrf.mxu0
        %v1577 = vpop.f32.mrf.mxu0
        %v1578 = vadd.f32 0.0, %v1577
        %v1579 = vpop.f32.mrf.mxu0
        %1580 = vmatprep.mubr.bf16.mxu0 0
        %1581 = vmatmul.mubr.bf16.gmra.mxu0 %v1448
        %v1582 = vpop.f32.mrf.mxu0
        %v1583 = vadd.f32 0.0, %v1582
        %v1584 = vpop.f32.mrf.mxu0
        %v1585 = vpop.f32.mrf.mxu0
        %v1586 = vadd.f32 0.0, %v1585
        %v1587 = vpop.f32.mrf.mxu0
        %1588 = vmatprep.mubr.bf16.mxu0 0
        %1589 = vmatmul.mubr.bf16.gmra.mxu0 %v1451
        %v1590 = vpop.f32.mrf.mxu0
        %v1591 = vadd.f32 0.0, %v1590
        %v1592 = vpop.f32.mrf.mxu0
        %v1593 = vpop.f32.mrf.mxu0
        %v1594 = vadd.f32 0.0, %v1593
        %v1595 = vpop.f32.mrf.mxu0
        %1596 = vmatprep.mubr.bf16.mxu0 0
        %1597 = vmatmul.mubr.bf16.gmra.mxu0 %v1454
        %v1598 = vpop.f32.mrf.mxu0
        %v1599 = vadd.f32 0.0, %v1598
        %v1600 = vpop.f32.mrf.mxu0
        %v1601 = vpop.f32.mrf.mxu0
        %v1602 = vadd.f32 0.0, %v1601
        %v1603 = vpop.f32.mrf.mxu0
        %1604 = vmatprep.mubr.bf16.mxu0 0
        %1605 = vmatmul.mubr.bf16.gmra.mxu0 %v1457
        %v1606 = vpop.f32.mrf.mxu0
        %v1607 = vadd.f32 0.0, %v1606
        %v1608 = vpop.f32.mrf.mxu0
        %v1609 = vpop.f32.mrf.mxu0
        %v1610 = vadd.f32 0.0, %v1609
        %v1611 = vpop.f32.mrf.mxu0
        %1612 = vmatprep.mubr.bf16.mxu0 0
        %1613 = vmatmul.mubr.bf16.gmra.mxu0 %v1460
        %v1614 = vpop.f32.mrf.mxu0
        %v1615 = vadd.f32 0.0, %v1614
        %v1616 = vpop.f32.mrf.mxu0
        %v1617 = vpop.f32.mrf.mxu0
        %v1618 = vadd.f32 0.0, %v1617
        %v1619 = vpop.f32.mrf.mxu0
        %1620 = vmatprep.mubr.bf16.mxu0 0
        %1621 = vmatmul.mubr.bf16.gmra.mxu0 %v1463
        %v1622 = vpop.f32.mrf.mxu0
        %v1623 = vadd.f32 0.0, %v1622
        %v1624 = vpop.f32.mrf.mxu0
        %v1625 = vpop.f32.mrf.mxu0
        %v1626 = vadd.f32 0.0, %v1625
        %v1627 = vpop.f32.mrf.mxu0
        %1628 = vdwg.mxu0
        %v1629 = vadd.f32 %v1078, %v1503
        %v1630 = vadd.f32 %v1081, %v1506
        %v1631 = vadd.f32 %v1086, %v1511
        %v1632 = vadd.f32 %v1089, %v1514
        %v1633 = vadd.f32 %v1094, %v1519
        %v1634 = vadd.f32 %v1097, %v1522
        %v1635 = vadd.f32 %v1102, %v1527
        %v1636 = vadd.f32 %v1105, %v1530
        %v1637 = vadd.f32 %v1110, %v1535
        %v1638 = vadd.f32 %v1113, %v1538
        %v1639 = vadd.f32 %v1118, %v1543
        %v1640 = vadd.f32 %v1121, %v1546
        %v1641 = vadd.f32 %v1126, %v1551
        %v1642 = vadd.f32 %v1129, %v1554
        %v1643 = vadd.f32 %v1134, %v1559
        %v1644 = vadd.f32 %v1137, %v1562
        %v1645 = vadd.f32 %v1142, %v1567
        %v1646 = vadd.f32 %v1145, %v1570
        %v1647 = vadd.f32 %v1150, %v1575
        %v1648 = vadd.f32 %v1153, %v1578
        %v1649 = vadd.f32 %v1158, %v1583
        %v1650 = vadd.f32 %v1161, %v1586
        %v1651 = vadd.f32 %v1166, %v1591
        %v1652 = vadd.f32 %v1169, %v1594
        %v1653 = vadd.f32 %v1174, %v1599
        %v1654 = vadd.f32 %v1177, %v1602
        %v1655 = vadd.f32 %v1182, %v1607
        %v1656 = vadd.f32 %v1185, %v1610
        %v1657 = vadd.f32 %v1190, %v1615
        %v1658 = vadd.f32 %v1193, %v1618
        %v1659 = vadd.f32 %v1198, %v1623
        %v1660 = vadd.f32 %v1201, %v1626
        %s1661 = sadd.s32 %s208, 1
        %s1662 = smul.u32 %s1661, 3
        %s1663 = smul.addr %s1662, 4
        %s1664 = scalar_lea.vmem %s196, %s1663
        %v1665 = vld [vmem:[%s1664] sm:$0xf]
        %v1666 = vld [vmem:[%s1664 + $0x4] sm:$0xf]
        %v1667 = vld [vmem:[%s1664 + $0xc] sm:$0xf]
        %v1668 = vld [vmem:[%s1664 + $0x10] sm:$0xf]
        %v1669 = vld [vmem:[%s1664 + $0x18] sm:$0xf]
        %v1670 = vld [vmem:[%s1664 + $0x1c] sm:$0xf]
        %v1671 = vld [vmem:[%s1664 + $0x24] sm:$0xf]
        %v1672 = vld [vmem:[%s1664 + $0x28] sm:$0xf]
        %v1673 = vld [vmem:[%s1664 + $0x30] sm:$0xf]
        %v1674 = vld [vmem:[%s1664 + $0x34] sm:$0xf]
        %v1675 = vld [vmem:[%s1664 + $0x3c] sm:$0xf]
        %v1676 = vld [vmem:[%s1664 + $0x40] sm:$0xf]
        %v1677 = vld [vmem:[%s1664 + $0x48] sm:$0xf]
        %v1678 = vld [vmem:[%s1664 + $0x4c] sm:$0xf]
        %v1679 = vld [vmem:[%s1664 + $0x54] sm:$0xf]
        %v1680 = vld [vmem:[%s1664 + $0x58] sm:$0xf]
        %v1681 = vld [vmem:[%s1664 + $0x60] sm:$0xf]
        %v1682 = vld [vmem:[%s1664 + $0x64] sm:$0xf]
        %v1683 = vld [vmem:[%s1664 + $0x6c] sm:$0xf]
        %v1684 = vld [vmem:[%s1664 + $0x70] sm:$0xf]
        %v1685 = vld [vmem:[%s1664 + $0x78] sm:$0xf]
        %v1686 = vld [vmem:[%s1664 + $0x7c] sm:$0xf]
        %v1687 = vld [vmem:[%s1664 + $0x84] sm:$0xf]
        %v1688 = vld [vmem:[%s1664 + $0x88] sm:$0xf]
        %v1689 = vld [vmem:[%s1664 + $0x90] sm:$0xf]
        %v1690 = vld [vmem:[%s1664 + $0x94] sm:$0xf]
        %v1691 = vld [vmem:[%s1664 + $0x9c] sm:$0xf]
        %v1692 = vld [vmem:[%s1664 + $0xa0] sm:$0xf]
        %v1693 = vld [vmem:[%s1664 + $0xa8] sm:$0xf]
        %v1694 = vld [vmem:[%s1664 + $0xac] sm:$0xf]
        %v1695 = vld [vmem:[%s1664 + $0xb4] sm:$0xf]
        %v1696 = vld [vmem:[%s1664 + $0xb8] sm:$0xf]
        %s1697 = scalar_lea.vmem %s1, 6
        %v1698 = vld [vmem:[%s1697] sm:$0x3]
        %v1731 = vunpack.c.l.b16 %v1665
        %v1732 = vunpack.c.l.b16 %v1666
        %v1733 = vunpack.c.l.b16 %v1667
        %v1734 = vunpack.c.l.b16 %v1668
        %v1735 = vunpack.c.l.b16 %v1669
        %v1736 = vunpack.c.l.b16 %v1670
        %v1737 = vunpack.c.l.b16 %v1671
        %v1738 = vunpack.c.l.b16 %v1672
        %v1739 = vunpack.c.l.b16 %v1673
        %v1740 = vunpack.c.l.b16 %v1674
        %v1741 = vunpack.c.l.b16 %v1675
        %v1742 = vunpack.c.l.b16 %v1676
        %v1743 = vunpack.c.l.b16 %v1677
        %v1744 = vunpack.c.l.b16 %v1678
        %v1745 = vunpack.c.l.b16 %v1679
        %v1746 = vunpack.c.l.b16 %v1680
        %v1747 = vunpack.c.l.b16 %v1681
        %v1748 = vunpack.c.l.b16 %v1682
        %v1749 = vunpack.c.l.b16 %v1683
        %v1750 = vunpack.c.l.b16 %v1684
        %v1751 = vunpack.c.l.b16 %v1685
        %v1752 = vunpack.c.l.b16 %v1686
        %v1753 = vunpack.c.l.b16 %v1687
        %v1754 = vunpack.c.l.b16 %v1688
        %v1755 = vunpack.c.l.b16 %v1689
        %v1756 = vunpack.c.l.b16 %v1690
        %v1757 = vunpack.c.l.b16 %v1691
        %v1758 = vunpack.c.l.b16 %v1692
        %v1759 = vunpack.c.l.b16 %v1693
        %v1760 = vunpack.c.l.b16 %v1694
        %v1761 = vunpack.c.l.b16 %v1695
        %v1762 = vunpack.c.l.b16 %v1696
        %v1763 = vpack.c.b16 %v1732, %v1731
        %v1764 = vpack.c.b16 %v1734, %v1733
        %v1765 = vpack.c.b16 %v1736, %v1735
        %v1766 = vpack.c.b16 %v1738, %v1737
        %v1767 = vpack.c.b16 %v1740, %v1739
        %v1768 = vpack.c.b16 %v1742, %v1741
        %v1769 = vpack.c.b16 %v1744, %v1743
        %v1770 = vpack.c.b16 %v1746, %v1745
        %v1771 = vpack.c.b16 %v1748, %v1747
        %v1772 = vpack.c.b16 %v1750, %v1749
        %v1773 = vpack.c.b16 %v1752, %v1751
        %v1774 = vpack.c.b16 %v1754, %v1753
        %v1775 = vpack.c.b16 %v1756, %v1755
        %v1776 = vpack.c.b16 %v1758, %v1757
        %v1777 = vpack.c.b16 %v1760, %v1759
        %v1778 = vpack.c.b16 %v1762, %v1761
        %v1780 = vsel %vm698, %v1763, 0
        %v1783 = vsel %vm698, %v1764, 0
        %v1786 = vsel %vm698, %v1765, 0
        %v1789 = vsel %vm698, %v1766, 0
        %v1792 = vsel %vm698, %v1767, 0
        %v1795 = vsel %vm698, %v1768, 0
        %v1798 = vsel %vm698, %v1769, 0
        %v1801 = vsel %vm698, %v1770, 0
        %v1804 = vsel %vm698, %v1771, 0
        %v1807 = vsel %vm698, %v1772, 0
        %v1810 = vsel %vm698, %v1773, 0
        %v1813 = vsel %vm698, %v1774, 0
        %v1816 = vsel %vm698, %v1775, 0
        %v1819 = vsel %vm698, %v1776, 0
        %v1822 = vsel %vm698, %v1777, 0
        %v1825 = vsel %vm698, %v1778, 0
        %v1828 = vsel %vm747, %v1698, 0
        %1830 = vmatprep.subr.bf16.mxu0 0
        %1831 = vmatpush1.bf16.msra.mxu0 0
        %1832 = vmatprep.subr.bf16.mxu0 0
        %1833 = vmatpush1.bf16.msra.mxu0 0
        %1834 = vmatprep.subr.bf16.mxu0 0
        %1835 = vmatpush1.bf16.msra.mxu0 0
        %1836 = vmatprep.subr.bf16.mxu0 0
        %1837 = vmatpush1.bf16.msra.mxu0 0
        %1838 = vmatprep.subr.bf16.mxu0 0
        %1839 = vmatpush1.bf16.msra.mxu0 0
        %1840 = vmatprep.subr.bf16.mxu0 0
        %1841 = vmatpush1.bf16.msra.mxu0 0
        %1842 = vmatprep.subr.bf16.mxu0 0
        %1843 = vmatpush1.bf16.msra.mxu0 0
        %1844 = vmatprep.subr.bf16.mxu0 0
        %1845 = vmatpush1.bf16.msra.mxu0 %v1828
        %1846 = vmatprep.subr.bf16.mxu0 0
        %1847 = vmatpush2.bf16.msra.mxu0 0
        %1848 = vmatprep.subr.bf16.mxu0 0
        %1849 = vmatpush2.bf16.msra.mxu0 0
        %1850 = vmatprep.subr.bf16.mxu0 0
        %1851 = vmatpush2.bf16.msra.mxu0 0
        %1852 = vmatprep.subr.bf16.mxu0 0
        %1853 = vmatpush2.bf16.msra.mxu0 0
        %1854 = vmatprep.subr.bf16.mxu0 0
        %1855 = vmatpush2.bf16.msra.mxu0 0
        %1856 = vmatprep.subr.bf16.mxu0 0
        %1857 = vmatpush2.bf16.msra.mxu0 0
        %1858 = vmatprep.subr.bf16.mxu0 0
        %1859 = vmatpush2.bf16.msra.mxu0 0
        %1860 = vmatprep.subr.bf16.mxu0 0
        %1861 = vmatpush2.bf16.msra.mxu0 0
        %1862 = vmatprep.mubr.bf16.mxu0 0
        %1863 = vmatmul.mubr.bf16.gmra.mxu0 %v1780
        %v1864 = vpop.f32.mrf.mxu0
        %v1865 = vadd.f32 0.0, %v1864
        %v1866 = vpop.f32.mrf.mxu0
        %v1867 = vpop.f32.mrf.mxu0
        %v1868 = vadd.f32 0.0, %v1867
        %v1869 = vpop.f32.mrf.mxu0
        %1870 = vmatprep.mubr.bf16.mxu0 0
        %1871 = vmatmul.mubr.bf16.gmra.mxu0 %v1783
        %v1872 = vpop.f32.mrf.mxu0
        %v1873 = vadd.f32 0.0, %v1872
        %v1874 = vpop.f32.mrf.mxu0
        %v1875 = vpop.f32.mrf.mxu0
        %v1876 = vadd.f32 0.0, %v1875
        %v1877 = vpop.f32.mrf.mxu0
        %1878 = vmatprep.mubr.bf16.mxu0 0
        %1879 = vmatmul.mubr.bf16.gmra.mxu0 %v1786
        %v1880 = vpop.f32.mrf.mxu0
        %v1881 = vadd.f32 0.0, %v1880
        %v1882 = vpop.f32.mrf.mxu0
        %v1883 = vpop.f32.mrf.mxu0
        %v1884 = vadd.f32 0.0, %v1883
        %v1885 = vpop.f32.mrf.mxu0
        %1886 = vmatprep.mubr.bf16.mxu0 0
        %1887 = vmatmul.mubr.bf16.gmra.mxu0 %v1789
        %v1888 = vpop.f32.mrf.mxu0
        %v1889 = vadd.f32 0.0, %v1888
        %v1890 = vpop.f32.mrf.mxu0
        %v1891 = vpop.f32.mrf.mxu0
        %v1892 = vadd.f32 0.0, %v1891
        %v1893 = vpop.f32.mrf.mxu0
        %1894 = vmatprep.mubr.bf16.mxu0 0
        %1895 = vmatmul.mubr.bf16.gmra.mxu0 %v1792
        %v1896 = vpop.f32.mrf.mxu0
        %v1897 = vadd.f32 0.0, %v1896
        %v1898 = vpop.f32.mrf.mxu0
        %v1899 = vpop.f32.mrf.mxu0
        %v1900 = vadd.f32 0.0, %v1899
        %v1901 = vpop.f32.mrf.mxu0
        %1902 = vmatprep.mubr.bf16.mxu0 0
        %1903 = vmatmul.mubr.bf16.gmra.mxu0 %v1795
        %v1904 = vpop.f32.mrf.mxu0
        %v1905 = vadd.f32 0.0, %v1904
        %v1906 = vpop.f32.mrf.mxu0
        %v1907 = vpop.f32.mrf.mxu0
        %v1908 = vadd.f32 0.0, %v1907
        %v1909 = vpop.f32.mrf.mxu0
        %1910 = vmatprep.mubr.bf16.mxu0 0
        %1911 = vmatmul.mubr.bf16.gmra.mxu0 %v1798
        %v1912 = vpop.f32.mrf.mxu0
        %v1913 = vadd.f32 0.0, %v1912
        %v1914 = vpop.f32.mrf.mxu0
        %v1915 = vpop.f32.mrf.mxu0
        %v1916 = vadd.f32 0.0, %v1915
        %v1917 = vpop.f32.mrf.mxu0
        %1918 = vmatprep.mubr.bf16.mxu0 0
        %1919 = vmatmul.mubr.bf16.gmra.mxu0 %v1801
        %v1920 = vpop.f32.mrf.mxu0
        %v1921 = vadd.f32 0.0, %v1920
        %v1922 = vpop.f32.mrf.mxu0
        %v1923 = vpop.f32.mrf.mxu0
        %v1924 = vadd.f32 0.0, %v1923
        %v1925 = vpop.f32.mrf.mxu0
        %1926 = vmatprep.mubr.bf16.mxu0 0
        %1927 = vmatmul.mubr.bf16.gmra.mxu0 %v1804
        %v1928 = vpop.f32.mrf.mxu0
        %v1929 = vadd.f32 0.0, %v1928
        %v1930 = vpop.f32.mrf.mxu0
        %v1931 = vpop.f32.mrf.mxu0
        %v1932 = vadd.f32 0.0, %v1931
        %v1933 = vpop.f32.mrf.mxu0
        %1934 = vmatprep.mubr.bf16.mxu0 0
        %1935 = vmatmul.mubr.bf16.gmra.mxu0 %v1807
        %v1936 = vpop.f32.mrf.mxu0
        %v1937 = vadd.f32 0.0, %v1936
        %v1938 = vpop.f32.mrf.mxu0
        %v1939 = vpop.f32.mrf.mxu0
        %v1940 = vadd.f32 0.0, %v1939
        %v1941 = vpop.f32.mrf.mxu0
        %1942 = vmatprep.mubr.bf16.mxu0 0
        %1943 = vmatmul.mubr.bf16.gmra.mxu0 %v1810
        %v1944 = vpop.f32.mrf.mxu0
        %v1945 = vadd.f32 0.0, %v1944
        %v1946 = vpop.f32.mrf.mxu0
        %v1947 = vpop.f32.mrf.mxu0
        %v1948 = vadd.f32 0.0, %v1947
        %v1949 = vpop.f32.mrf.mxu0
        %1950 = vmatprep.mubr.bf16.mxu0 0
        %1951 = vmatmul.mubr.bf16.gmra.mxu0 %v1813
        %v1952 = vpop.f32.mrf.mxu0
        %v1953 = vadd.f32 0.0, %v1952
        %v1954 = vpop.f32.mrf.mxu0
        %v1955 = vpop.f32.mrf.mxu0
        %v1956 = vadd.f32 0.0, %v1955
        %v1957 = vpop.f32.mrf.mxu0
        %1958 = vmatprep.mubr.bf16.mxu0 0
        %1959 = vmatmul.mubr.bf16.gmra.mxu0 %v1816
        %v1960 = vpop.f32.mrf.mxu0
        %v1961 = vadd.f32 0.0, %v1960
        %v1962 = vpop.f32.mrf.mxu0
        %v1963 = vpop.f32.mrf.mxu0
        %v1964 = vadd.f32 0.0, %v1963
        %v1965 = vpop.f32.mrf.mxu0
        %1966 = vmatprep.mubr.bf16.mxu0 0
        %1967 = vmatmul.mubr.bf16.gmra.mxu0 %v1819
        %v1968 = vpop.f32.mrf.mxu0
        %v1969 = vadd.f32 0.0, %v1968
        %v1970 = vpop.f32.mrf.mxu0
        %v1971 = vpop.f32.mrf.mxu0
        %v1972 = vadd.f32 0.0, %v1971
        %v1973 = vpop.f32.mrf.mxu0
        %1974 = vmatprep.mubr.bf16.mxu0 0
        %1975 = vmatmul.mubr.bf16.gmra.mxu0 %v1822
        %v1976 = vpop.f32.mrf.mxu0
        %v1977 = vadd.f32 0.0, %v1976
        %v1978 = vpop.f32.mrf.mxu0
        %v1979 = vpop.f32.mrf.mxu0
        %v1980 = vadd.f32 0.0, %v1979
        %v1981 = vpop.f32.mrf.mxu0
        %1982 = vmatprep.mubr.bf16.mxu0 0
        %1983 = vmatmul.mubr.bf16.gmra.mxu0 %v1825
        %v1984 = vpop.f32.mrf.mxu0
        %v1985 = vadd.f32 0.0, %v1984
        %v1986 = vpop.f32.mrf.mxu0
        %v1987 = vpop.f32.mrf.mxu0
        %v1988 = vadd.f32 0.0, %v1987
        %v1989 = vpop.f32.mrf.mxu0
        %1990 = vdwg.mxu0
        %v1991 = vadd.f32 %v1629, %v1865
        %v1992 = vadd.f32 %v1630, %v1868
        %v1993 = vadd.f32 %v1631, %v1873
        %v1994 = vadd.f32 %v1632, %v1876
        %v1995 = vadd.f32 %v1633, %v1881
        %v1996 = vadd.f32 %v1634, %v1884
        %v1997 = vadd.f32 %v1635, %v1889
        %v1998 = vadd.f32 %v1636, %v1892
        %v1999 = vadd.f32 %v1637, %v1897
        %v2000 = vadd.f32 %v1638, %v1900
        %v2001 = vadd.f32 %v1639, %v1905
        %v2002 = vadd.f32 %v1640, %v1908
        %v2003 = vadd.f32 %v1641, %v1913
        %v2004 = vadd.f32 %v1642, %v1916
        %v2005 = vadd.f32 %v1643, %v1921
        %v2006 = vadd.f32 %v1644, %v1924
        %v2007 = vadd.f32 %v1645, %v1929
        %v2008 = vadd.f32 %v1646, %v1932
        %v2009 = vadd.f32 %v1647, %v1937
        %v2010 = vadd.f32 %v1648, %v1940
        %v2011 = vadd.f32 %v1649, %v1945
        %v2012 = vadd.f32 %v1650, %v1948
        %v2013 = vadd.f32 %v1651, %v1953
        %v2014 = vadd.f32 %v1652, %v1956
        %v2015 = vadd.f32 %v1653, %v1961
        %v2016 = vadd.f32 %v1654, %v1964
        %v2017 = vadd.f32 %v1655, %v1969
        %v2018 = vadd.f32 %v1656, %v1972
        %v2019 = vadd.f32 %v1657, %v1977
        %v2020 = vadd.f32 %v1658, %v1980
        %v2021 = vadd.f32 %v1659, %v1985
        %v2022 = vadd.f32 %v1660, %v1988
        %v2023 = vld [vmem:[%s1664] sm:$0xf]
        %v2024 = vld [vmem:[%s1664 + $0x4] sm:$0xf]
        %v2025 = vld [vmem:[%s1664 + $0x8] sm:$0x1]
        %v2026 = vld [vmem:[%s1664 + $0xc] sm:$0xf]
        %v2027 = vld [vmem:[%s1664 + $0x10] sm:$0xf]
        %v2028 = vld [vmem:[%s1664 + $0x14] sm:$0x1]
        %v2029 = vld [vmem:[%s1664 + $0x18] sm:$0xf]
        %v2030 = vld [vmem:[%s1664 + $0x1c] sm:$0xf]
        %v2031 = vld [vmem:[%s1664 + $0x20] sm:$0x1]
        %v2032 = vld [vmem:[%s1664 + $0x24] sm:$0xf]
        %v2033 = vld [vmem:[%s1664 + $0x28] sm:$0xf]
        %v2034 = vld [vmem:[%s1664 + $0x2c] sm:$0x1]
        %v2035 = vld [vmem:[%s1664 + $0x30] sm:$0xf]
        %v2036 = vld [vmem:[%s1664 + $0x34] sm:$0xf]
        %v2037 = vld [vmem:[%s1664 + $0x38] sm:$0x1]
        %v2038 = vld [vmem:[%s1664 + $0x3c] sm:$0xf]
        %v2039 = vld [vmem:[%s1664 + $0x40] sm:$0xf]
        %v2040 = vld [vmem:[%s1664 + $0x44] sm:$0x1]
        %v2041 = vld [vmem:[%s1664 + $0x48] sm:$0xf]
        %v2042 = vld [vmem:[%s1664 + $0x4c] sm:$0xf]
        %v2043 = vld [vmem:[%s1664 + $0x50] sm:$0x1]
        %v2044 = vld [vmem:[%s1664 + $0x54] sm:$0xf]
        %v2045 = vld [vmem:[%s1664 + $0x58] sm:$0xf]
        %v2046 = vld [vmem:[%s1664 + $0x5c] sm:$0x1]
        %v2047 = vld [vmem:[%s1664 + $0x60] sm:$0xf]
        %v2048 = vld [vmem:[%s1664 + $0x64] sm:$0xf]
        %v2049 = vld [vmem:[%s1664 + $0x68] sm:$0x1]
        %v2050 = vld [vmem:[%s1664 + $0x6c] sm:$0xf]
        %v2051 = vld [vmem:[%s1664 + $0x70] sm:$0xf]
        %v2052 = vld [vmem:[%s1664 + $0x74] sm:$0x1]
        %v2053 = vld [vmem:[%s1664 + $0x78] sm:$0xf]
        %v2054 = vld [vmem:[%s1664 + $0x7c] sm:$0xf]
        %v2055 = vld [vmem:[%s1664 + $0x80] sm:$0x1]
        %v2056 = vld [vmem:[%s1664 + $0x84] sm:$0xf]
        %v2057 = vld [vmem:[%s1664 + $0x88] sm:$0xf]
        %v2058 = vld [vmem:[%s1664 + $0x8c] sm:$0x1]
        %v2059 = vld [vmem:[%s1664 + $0x90] sm:$0xf]
        %v2060 = vld [vmem:[%s1664 + $0x94] sm:$0xf]
        %v2061 = vld [vmem:[%s1664 + $0x98] sm:$0x1]
        %v2062 = vld [vmem:[%s1664 + $0x9c] sm:$0xf]
        %v2063 = vld [vmem:[%s1664 + $0xa0] sm:$0xf]
        %v2064 = vld [vmem:[%s1664 + $0xa4] sm:$0x1]
        %v2065 = vld [vmem:[%s1664 + $0xa8] sm:$0xf]
        %v2066 = vld [vmem:[%s1664 + $0xac] sm:$0xf]
        %v2067 = vld [vmem:[%s1664 + $0xb0] sm:$0x1]
        %v2068 = vld [vmem:[%s1664 + $0xb4] sm:$0xf]
        %v2069 = vld [vmem:[%s1664 + $0xb8] sm:$0xf]
        %v2070 = vld [vmem:[%s1664 + $0xbc] sm:$0x1]
        %v2072 = vshrl.u32 %v2023, 16
        %v2074 = vrot.slane %v2072, 4
        %v2075 = vshll.u32 %v2023, 16
        %v2077 = vrot.slane %v2075, 5
        %v2078 = vor.u32 %v2074, %v2077
        %v2079 = vrot.slane %v2078, 4
        %v2081 = vshll.u32 %v2024, 16
        %v2083 = vrot.slane %v2081, 5
        %v2084 = vsel %vm263, %v2079, %v2083
        %v2085 = vshrl.u32 %v2024, 16
        %v2087 = vrot.slane %v2085, 4
        %v2088 = vor.u32 %v2087, %v2083
        %v2089 = vrot.slane %v2088, 4
        %v2091 = vshll.u32 %v2025, 16
        %v2093 = vrot.slane %v2091, 5
        %v2094 = vsel %vm263, %v2089, %v2093
        %v2096 = vshrl.u32 %v2026, 16
        %v2098 = vrot.slane %v2096, 4
        %v2099 = vshll.u32 %v2026, 16
        %v2101 = vrot.slane %v2099, 5
        %v2102 = vor.u32 %v2098, %v2101
        %v2103 = vrot.slane %v2102, 4
        %v2105 = vshll.u32 %v2027, 16
        %v2107 = vrot.slane %v2105, 5
        %v2108 = vsel %vm263, %v2103, %v2107
        %v2109 = vshrl.u32 %v2027, 16
        %v2111 = vrot.slane %v2109, 4
        %v2112 = vor.u32 %v2111, %v2107
        %v2113 = vrot.slane %v2112, 4
        %v2115 = vshll.u32 %v2028, 16
        %v2117 = vrot.slane %v2115, 5
        %v2118 = vsel %vm263, %v2113, %v2117
        %v2120 = vshrl.u32 %v2029, 16
        %v2122 = vrot.slane %v2120, 4
        %v2123 = vshll.u32 %v2029, 16
        %v2125 = vrot.slane %v2123, 5
        %v2126 = vor.u32 %v2122, %v2125
        %v2127 = vrot.slane %v2126, 4
        %v2129 = vshll.u32 %v2030, 16
        %v2131 = vrot.slane %v2129, 5
        %v2132 = vsel %vm263, %v2127, %v2131
        %v2133 = vshrl.u32 %v2030, 16
        %v2135 = vrot.slane %v2133, 4
        %v2136 = vor.u32 %v2135, %v2131
        %v2137 = vrot.slane %v2136, 4
        %v2139 = vshll.u32 %v2031, 16
        %v2141 = vrot.slane %v2139, 5
        %v2142 = vsel %vm263, %v2137, %v2141
        %v2144 = vshrl.u32 %v2032, 16
        %v2146 = vrot.slane %v2144, 4
        %v2147 = vshll.u32 %v2032, 16
        %v2149 = vrot.slane %v2147, 5
        %v2150 = vor.u32 %v2146, %v2149
        %v2151 = vrot.slane %v2150, 4
        %v2153 = vshll.u32 %v2033, 16
        %v2155 = vrot.slane %v2153, 5
        %v2156 = vsel %vm263, %v2151, %v2155
        %v2157 = vshrl.u32 %v2033, 16
        %v2159 = vrot.slane %v2157, 4
        %v2160 = vor.u32 %v2159, %v2155
        %v2161 = vrot.slane %v2160, 4
        %v2163 = vshll.u32 %v2034, 16
        %v2165 = vrot.slane %v2163, 5
        %v2166 = vsel %vm263, %v2161, %v2165
        %v2168 = vshrl.u32 %v2035, 16
        %v2170 = vrot.slane %v2168, 4
        %v2171 = vshll.u32 %v2035, 16
        %v2173 = vrot.slane %v2171, 5
        %v2174 = vor.u32 %v2170, %v2173
        %v2175 = vrot.slane %v2174, 4
        %v2177 = vshll.u32 %v2036, 16
        %v2179 = vrot.slane %v2177, 5
        %v2180 = vsel %vm263, %v2175, %v2179
        %v2181 = vshrl.u32 %v2036, 16
        %v2183 = vrot.slane %v2181, 4
        %v2184 = vor.u32 %v2183, %v2179
        %v2185 = vrot.slane %v2184, 4
        %v2187 = vshll.u32 %v2037, 16
        %v2189 = vrot.slane %v2187, 5
        %v2190 = vsel %vm263, %v2185, %v2189
        %v2192 = vshrl.u32 %v2038, 16
        %v2194 = vrot.slane %v2192, 4
        %v2195 = vshll.u32 %v2038, 16
        %v2197 = vrot.slane %v2195, 5
        %v2198 = vor.u32 %v2194, %v2197
        %v2199 = vrot.slane %v2198, 4
        %v2201 = vshll.u32 %v2039, 16
        %v2203 = vrot.slane %v2201, 5
        %v2204 = vsel %vm263, %v2199, %v2203
        %v2205 = vshrl.u32 %v2039, 16
        %v2207 = vrot.slane %v2205, 4
        %v2208 = vor.u32 %v2207, %v2203
        %v2209 = vrot.slane %v2208, 4
        %v2211 = vshll.u32 %v2040, 16
        %v2213 = vrot.slane %v2211, 5
        %v2214 = vsel %vm263, %v2209, %v2213
        %v2216 = vshrl.u32 %v2041, 16
        %v2218 = vrot.slane %v2216, 4
        %v2219 = vshll.u32 %v2041, 16
        %v2221 = vrot.slane %v2219, 5
        %v2222 = vor.u32 %v2218, %v2221
        %v2223 = vrot.slane %v2222, 4
        %v2225 = vshll.u32 %v2042, 16
        %v2227 = vrot.slane %v2225, 5
        %v2228 = vsel %vm263, %v2223, %v2227
        %v2229 = vshrl.u32 %v2042, 16
        %v2231 = vrot.slane %v2229, 4
        %v2232 = vor.u32 %v2231, %v2227
        %v2233 = vrot.slane %v2232, 4
        %v2235 = vshll.u32 %v2043, 16
        %v2237 = vrot.slane %v2235, 5
        %v2238 = vsel %vm263, %v2233, %v2237
        %v2240 = vshrl.u32 %v2044, 16
        %v2242 = vrot.slane %v2240, 4
        %v2243 = vshll.u32 %v2044, 16
        %v2245 = vrot.slane %v2243, 5
        %v2246 = vor.u32 %v2242, %v2245
        %v2247 = vrot.slane %v2246, 4
        %v2249 = vshll.u32 %v2045, 16
        %v2251 = vrot.slane %v2249, 5
        %v2252 = vsel %vm263, %v2247, %v2251
        %v2253 = vshrl.u32 %v2045, 16
        %v2255 = vrot.slane %v2253, 4
        %v2256 = vor.u32 %v2255, %v2251
        %v2257 = vrot.slane %v2256, 4
        %v2259 = vshll.u32 %v2046, 16
        %v2261 = vrot.slane %v2259, 5
        %v2262 = vsel %vm263, %v2257, %v2261
        %v2264 = vshrl.u32 %v2047, 16
        %v2266 = vrot.slane %v2264, 4
        %v2267 = vshll.u32 %v2047, 16
        %v2269 = vrot.slane %v2267, 5
        %v2270 = vor.u32 %v2266, %v2269
        %v2271 = vrot.slane %v2270, 4
        %v2273 = vshll.u32 %v2048, 16
        %v2275 = vrot.slane %v2273, 5
        %v2276 = vsel %vm263, %v2271, %v2275
        %v2277 = vshrl.u32 %v2048, 16
        %v2279 = vrot.slane %v2277, 4
        %v2280 = vor.u32 %v2279, %v2275
        %v2281 = vrot.slane %v2280, 4
        %v2283 = vshll.u32 %v2049, 16
        %v2285 = vrot.slane %v2283, 5
        %v2286 = vsel %vm263, %v2281, %v2285
        %v2288 = vshrl.u32 %v2050, 16
        %v2290 = vrot.slane %v2288, 4
        %v2291 = vshll.u32 %v2050, 16
        %v2293 = vrot.slane %v2291, 5
        %v2294 = vor.u32 %v2290, %v2293
        %v2295 = vrot.slane %v2294, 4
        %v2297 = vshll.u32 %v2051, 16
        %v2299 = vrot.slane %v2297, 5
        %v2300 = vsel %vm263, %v2295, %v2299
        %v2301 = vshrl.u32 %v2051, 16
        %v2303 = vrot.slane %v2301, 4
        %v2304 = vor.u32 %v2303, %v2299
        %v2305 = vrot.slane %v2304, 4
        %v2307 = vshll.u32 %v2052, 16
        %v2309 = vrot.slane %v2307, 5
        %v2310 = vsel %vm263, %v2305, %v2309
        %v2312 = vshrl.u32 %v2053, 16
        %v2314 = vrot.slane %v2312, 4
        %v2315 = vshll.u32 %v2053, 16
        %v2317 = vrot.slane %v2315, 5
        %v2318 = vor.u32 %v2314, %v2317
        %v2319 = vrot.slane %v2318, 4
        %v2321 = vshll.u32 %v2054, 16
        %v2323 = vrot.slane %v2321, 5
        %v2324 = vsel %vm263, %v2319, %v2323
        %v2325 = vshrl.u32 %v2054, 16
        %v2327 = vrot.slane %v2325, 4
        %v2328 = vor.u32 %v2327, %v2323
        %v2329 = vrot.slane %v2328, 4
        %v2331 = vshll.u32 %v2055, 16
        %v2333 = vrot.slane %v2331, 5
        %v2334 = vsel %vm263, %v2329, %v2333
        %v2336 = vshrl.u32 %v2056, 16
        %v2338 = vrot.slane %v2336, 4
        %v2339 = vshll.u32 %v2056, 16
        %v2341 = vrot.slane %v2339, 5
        %v2342 = vor.u32 %v2338, %v2341
        %v2343 = vrot.slane %v2342, 4
        %v2345 = vshll.u32 %v2057, 16
        %v2347 = vrot.slane %v2345, 5
        %v2348 = vsel %vm263, %v2343, %v2347
        %v2349 = vshrl.u32 %v2057, 16
        %v2351 = vrot.slane %v2349, 4
        %v2352 = vor.u32 %v2351, %v2347
        %v2353 = vrot.slane %v2352, 4
        %v2355 = vshll.u32 %v2058, 16
        %v2357 = vrot.slane %v2355, 5
        %v2358 = vsel %vm263, %v2353, %v2357
        %v2360 = vshrl.u32 %v2059, 16
        %v2362 = vrot.slane %v2360, 4
        %v2363 = vshll.u32 %v2059, 16
        %v2365 = vrot.slane %v2363, 5
        %v2366 = vor.u32 %v2362, %v2365
        %v2367 = vrot.slane %v2366, 4
        %v2369 = vshll.u32 %v2060, 16
        %v2371 = vrot.slane %v2369, 5
        %v2372 = vsel %vm263, %v2367, %v2371
        %v2373 = vshrl.u32 %v2060, 16
        %v2375 = vrot.slane %v2373, 4
        %v2376 = vor.u32 %v2375, %v2371
        %v2377 = vrot.slane %v2376, 4
        %v2379 = vshll.u32 %v2061, 16
        %v2381 = vrot.slane %v2379, 5
        %v2382 = vsel %vm263, %v2377, %v2381
        %v2384 = vshrl.u32 %v2062, 16
        %v2386 = vrot.slane %v2384, 4
        %v2387 = vshll.u32 %v2062, 16
        %v2389 = vrot.slane %v2387, 5
        %v2390 = vor.u32 %v2386, %v2389
        %v2391 = vrot.slane %v2390, 4
        %v2393 = vshll.u32 %v2063, 16
        %v2395 = vrot.slane %v2393, 5
        %v2396 = vsel %vm263, %v2391, %v2395
        %v2397 = vshrl.u32 %v2063, 16
        %v2399 = vrot.slane %v2397, 4
        %v2400 = vor.u32 %v2399, %v2395
        %v2401 = vrot.slane %v2400, 4
        %v2403 = vshll.u32 %v2064, 16
        %v2405 = vrot.slane %v2403, 5
        %v2406 = vsel %vm263, %v2401, %v2405
        %v2408 = vshrl.u32 %v2065, 16
        %v2410 = vrot.slane %v2408, 4
        %v2411 = vshll.u32 %v2065, 16
        %v2413 = vrot.slane %v2411, 5
        %v2414 = vor.u32 %v2410, %v2413
        %v2415 = vrot.slane %v2414, 4
        %v2417 = vshll.u32 %v2066, 16
        %v2419 = vrot.slane %v2417, 5
        %v2420 = vsel %vm263, %v2415, %v2419
        %v2421 = vshrl.u32 %v2066, 16
        %v2423 = vrot.slane %v2421, 4
        %v2424 = vor.u32 %v2423, %v2419
        %v2425 = vrot.slane %v2424, 4
        %v2427 = vshll.u32 %v2067, 16
        %v2429 = vrot.slane %v2427, 5
        %v2430 = vsel %vm263, %v2425, %v2429
        %v2432 = vshrl.u32 %v2068, 16
        %v2434 = vrot.slane %v2432, 4
        %v2435 = vshll.u32 %v2068, 16
        %v2437 = vrot.slane %v2435, 5
        %v2438 = vor.u32 %v2434, %v2437
        %v2439 = vrot.slane %v2438, 4
        %v2441 = vshll.u32 %v2069, 16
        %v2443 = vrot.slane %v2441, 5
        %v2444 = vsel %vm263, %v2439, %v2443
        %v2445 = vshrl.u32 %v2069, 16
        %v2447 = vrot.slane %v2445, 4
        %v2448 = vor.u32 %v2447, %v2443
        %v2449 = vrot.slane %v2448, 4
        %v2451 = vshll.u32 %v2070, 16
        %v2453 = vrot.slane %v2451, 5
        %v2454 = vsel %vm263, %v2449, %v2453
        %s2455 = scalar_lea.vmem %s1, 8
        %v2456 = vld [vmem:[%s2455] sm:$0x3]
        %v2457 = vunpack.c.l.b16 %v2084
        %v2458 = vunpack.c.l.b16 %v2094
        %v2459 = vunpack.c.l.b16 %v2108
        %v2460 = vunpack.c.l.b16 %v2118
        %v2461 = vunpack.c.l.b16 %v2132
        %v2462 = vunpack.c.l.b16 %v2142
        %v2463 = vunpack.c.l.b16 %v2156
        %v2464 = vunpack.c.l.b16 %v2166
        %v2465 = vunpack.c.l.b16 %v2180
        %v2466 = vunpack.c.l.b16 %v2190
        %v2467 = vunpack.c.l.b16 %v2204
        %v2468 = vunpack.c.l.b16 %v2214
        %v2469 = vunpack.c.l.b16 %v2228
        %v2470 = vunpack.c.l.b16 %v2238
        %v2471 = vunpack.c.l.b16 %v2252
        %v2472 = vunpack.c.l.b16 %v2262
        %v2473 = vunpack.c.l.b16 %v2276
        %v2474 = vunpack.c.l.b16 %v2286
        %v2475 = vunpack.c.l.b16 %v2300
        %v2476 = vunpack.c.l.b16 %v2310
        %v2477 = vunpack.c.l.b16 %v2324
        %v2478 = vunpack.c.l.b16 %v2334
        %v2479 = vunpack.c.l.b16 %v2348
        %v2480 = vunpack.c.l.b16 %v2358
        %v2481 = vunpack.c.l.b16 %v2372
        %v2482 = vunpack.c.l.b16 %v2382
        %v2483 = vunpack.c.l.b16 %v2396
        %v2484 = vunpack.c.l.b16 %v2406
        %v2485 = vunpack.c.l.b16 %v2420
        %v2486 = vunpack.c.l.b16 %v2430
        %v2487 = vunpack.c.l.b16 %v2444
        %v2488 = vunpack.c.l.b16 %v2454
        %v2489 = vpack.c.b16 %v2458, %v2457
        %v2490 = vpack.c.b16 %v2460, %v2459
        %v2491 = vpack.c.b16 %v2462, %v2461
        %v2492 = vpack.c.b16 %v2464, %v2463
        %v2493 = vpack.c.b16 %v2466, %v2465
        %v2494 = vpack.c.b16 %v2468, %v2467
        %v2495 = vpack.c.b16 %v2470, %v2469
        %v2496 = vpack.c.b16 %v2472, %v2471
        %v2497 = vpack.c.b16 %v2474, %v2473
        %v2498 = vpack.c.b16 %v2476, %v2475
        %v2499 = vpack.c.b16 %v2478, %v2477
        %v2500 = vpack.c.b16 %v2480, %v2479
        %v2501 = vpack.c.b16 %v2482, %v2481
        %v2502 = vpack.c.b16 %v2484, %v2483
        %v2503 = vpack.c.b16 %v2486, %v2485
        %v2504 = vpack.c.b16 %v2488, %v2487
        %v2506 = vsel %vm698, %v2489, 0
        %v2509 = vsel %vm698, %v2490, 0
        %v2512 = vsel %vm698, %v2491, 0
        %v2515 = vsel %vm698, %v2492, 0
        %v2518 = vsel %vm698, %v2493, 0
        %v2521 = vsel %vm698, %v2494, 0
        %v2524 = vsel %vm698, %v2495, 0
        %v2527 = vsel %vm698, %v2496, 0
        %v2530 = vsel %vm698, %v2497, 0
        %v2533 = vsel %vm698, %v2498, 0
        %v2536 = vsel %vm698, %v2499, 0
        %v2539 = vsel %vm698, %v2500, 0
        %v2542 = vsel %vm698, %v2501, 0
        %v2545 = vsel %vm698, %v2502, 0
        %v2548 = vsel %vm698, %v2503, 0
        %v2551 = vsel %vm698, %v2504, 0
        %v2554 = vsel %vm747, %v2456, 0
        %2556 = vmatprep.subr.bf16.mxu0 0
        %2557 = vmatpush1.bf16.msra.mxu0 0
        %2558 = vmatprep.subr.bf16.mxu0 0
        %2559 = vmatpush1.bf16.msra.mxu0 0
        %2560 = vmatprep.subr.bf16.mxu0 0
        %2561 = vmatpush1.bf16.msra.mxu0 0
        %2562 = vmatprep.subr.bf16.mxu0 0
        %2563 = vmatpush1.bf16.msra.mxu0 0
        %2564 = vmatprep.subr.bf16.mxu0 0
        %2565 = vmatpush1.bf16.msra.mxu0 0
        %2566 = vmatprep.subr.bf16.mxu0 0
        %2567 = vmatpush1.bf16.msra.mxu0 0
        %2568 = vmatprep.subr.bf16.mxu0 0
        %2569 = vmatpush1.bf16.msra.mxu0 0
        %2570 = vmatprep.subr.bf16.mxu0 0
        %2571 = vmatpush1.bf16.msra.mxu0 %v2554
        %2572 = vmatprep.subr.bf16.mxu0 0
        %2573 = vmatpush2.bf16.msra.mxu0 0
        %2574 = vmatprep.subr.bf16.mxu0 0
        %2575 = vmatpush2.bf16.msra.mxu0 0
        %2576 = vmatprep.subr.bf16.mxu0 0
        %2577 = vmatpush2.bf16.msra.mxu0 0
        %2578 = vmatprep.subr.bf16.mxu0 0
        %2579 = vmatpush2.bf16.msra.mxu0 0
        %2580 = vmatprep.subr.bf16.mxu0 0
        %2581 = vmatpush2.bf16.msra.mxu0 0
        %2582 = vmatprep.subr.bf16.mxu0 0
        %2583 = vmatpush2.bf16.msra.mxu0 0
        %2584 = vmatprep.subr.bf16.mxu0 0
        %2585 = vmatpush2.bf16.msra.mxu0 0
        %2586 = vmatprep.subr.bf16.mxu0 0
        %2587 = vmatpush2.bf16.msra.mxu0 0
        %2588 = vmatprep.mubr.bf16.mxu0 0
        %2589 = vmatmul.mubr.bf16.gmra.mxu0 %v2506
        %v2590 = vpop.f32.mrf.mxu0
        %v2591 = vadd.f32 0.0, %v2590
        %v2592 = vpop.f32.mrf.mxu0
        %v2593 = vpop.f32.mrf.mxu0
        %v2594 = vadd.f32 0.0, %v2593
        %v2595 = vpop.f32.mrf.mxu0
        %2596 = vmatprep.mubr.bf16.mxu0 0
        %2597 = vmatmul.mubr.bf16.gmra.mxu0 %v2509
        %v2598 = vpop.f32.mrf.mxu0
        %v2599 = vadd.f32 0.0, %v2598
        %v2600 = vpop.f32.mrf.mxu0
        %v2601 = vpop.f32.mrf.mxu0
        %v2602 = vadd.f32 0.0, %v2601
        %v2603 = vpop.f32.mrf.mxu0
        %2604 = vmatprep.mubr.bf16.mxu0 0
        %2605 = vmatmul.mubr.bf16.gmra.mxu0 %v2512
        %v2606 = vpop.f32.mrf.mxu0
        %v2607 = vadd.f32 0.0, %v2606
        %v2608 = vpop.f32.mrf.mxu0
        %v2609 = vpop.f32.mrf.mxu0
        %v2610 = vadd.f32 0.0, %v2609
        %v2611 = vpop.f32.mrf.mxu0
        %2612 = vmatprep.mubr.bf16.mxu0 0
        %2613 = vmatmul.mubr.bf16.gmra.mxu0 %v2515
        %v2614 = vpop.f32.mrf.mxu0
        %v2615 = vadd.f32 0.0, %v2614
        %v2616 = vpop.f32.mrf.mxu0
        %v2617 = vpop.f32.mrf.mxu0
        %v2618 = vadd.f32 0.0, %v2617
        %v2619 = vpop.f32.mrf.mxu0
        %2620 = vmatprep.mubr.bf16.mxu0 0
        %2621 = vmatmul.mubr.bf16.gmra.mxu0 %v2518
        %v2622 = vpop.f32.mrf.mxu0
        %v2623 = vadd.f32 0.0, %v2622
        %v2624 = vpop.f32.mrf.mxu0
        %v2625 = vpop.f32.mrf.mxu0
        %v2626 = vadd.f32 0.0, %v2625
        %v2627 = vpop.f32.mrf.mxu0
        %2628 = vmatprep.mubr.bf16.mxu0 0
        %2629 = vmatmul.mubr.bf16.gmra.mxu0 %v2521
        %v2630 = vpop.f32.mrf.mxu0
        %v2631 = vadd.f32 0.0, %v2630
        %v2632 = vpop.f32.mrf.mxu0
        %v2633 = vpop.f32.mrf.mxu0
        %v2634 = vadd.f32 0.0, %v2633
        %v2635 = vpop.f32.mrf.mxu0
        %2636 = vmatprep.mubr.bf16.mxu0 0
        %2637 = vmatmul.mubr.bf16.gmra.mxu0 %v2524
        %v2638 = vpop.f32.mrf.mxu0
        %v2639 = vadd.f32 0.0, %v2638
        %v2640 = vpop.f32.mrf.mxu0
        %v2641 = vpop.f32.mrf.mxu0
        %v2642 = vadd.f32 0.0, %v2641
        %v2643 = vpop.f32.mrf.mxu0
        %2644 = vmatprep.mubr.bf16.mxu0 0
        %2645 = vmatmul.mubr.bf16.gmra.mxu0 %v2527
        %v2646 = vpop.f32.mrf.mxu0
        %v2647 = vadd.f32 0.0, %v2646
        %v2648 = vpop.f32.mrf.mxu0
        %v2649 = vpop.f32.mrf.mxu0
        %v2650 = vadd.f32 0.0, %v2649
        %v2651 = vpop.f32.mrf.mxu0
        %2652 = vmatprep.mubr.bf16.mxu0 0
        %2653 = vmatmul.mubr.bf16.gmra.mxu0 %v2530
        %v2654 = vpop.f32.mrf.mxu0
        %v2655 = vadd.f32 0.0, %v2654
        %v2656 = vpop.f32.mrf.mxu0
        %v2657 = vpop.f32.mrf.mxu0
        %v2658 = vadd.f32 0.0, %v2657
        %v2659 = vpop.f32.mrf.mxu0
        %2660 = vmatprep.mubr.bf16.mxu0 0
        %2661 = vmatmul.mubr.bf16.gmra.mxu0 %v2533
        %v2662 = vpop.f32.mrf.mxu0
        %v2663 = vadd.f32 0.0, %v2662
        %v2664 = vpop.f32.mrf.mxu0
        %v2665 = vpop.f32.mrf.mxu0
        %v2666 = vadd.f32 0.0, %v2665
        %v2667 = vpop.f32.mrf.mxu0
        %2668 = vmatprep.mubr.bf16.mxu0 0
        %2669 = vmatmul.mubr.bf16.gmra.mxu0 %v2536
        %v2670 = vpop.f32.mrf.mxu0
        %v2671 = vadd.f32 0.0, %v2670
        %v2672 = vpop.f32.mrf.mxu0
        %v2673 = vpop.f32.mrf.mxu0
        %v2674 = vadd.f32 0.0, %v2673
        %v2675 = vpop.f32.mrf.mxu0
        %2676 = vmatprep.mubr.bf16.mxu0 0
        %2677 = vmatmul.mubr.bf16.gmra.mxu0 %v2539
        %v2678 = vpop.f32.mrf.mxu0
        %v2679 = vadd.f32 0.0, %v2678
        %v2680 = vpop.f32.mrf.mxu0
        %v2681 = vpop.f32.mrf.mxu0
        %v2682 = vadd.f32 0.0, %v2681
        %v2683 = vpop.f32.mrf.mxu0
        %2684 = vmatprep.mubr.bf16.mxu0 0
        %2685 = vmatmul.mubr.bf16.gmra.mxu0 %v2542
        %v2686 = vpop.f32.mrf.mxu0
        %v2687 = vadd.f32 0.0, %v2686
        %v2688 = vpop.f32.mrf.mxu0
        %v2689 = vpop.f32.mrf.mxu0
        %v2690 = vadd.f32 0.0, %v2689
        %v2691 = vpop.f32.mrf.mxu0
        %2692 = vmatprep.mubr.bf16.mxu0 0
        %2693 = vmatmul.mubr.bf16.gmra.mxu0 %v2545
        %v2694 = vpop.f32.mrf.mxu0
        %v2695 = vadd.f32 0.0, %v2694
        %v2696 = vpop.f32.mrf.mxu0
        %v2697 = vpop.f32.mrf.mxu0
        %v2698 = vadd.f32 0.0, %v2697
        %v2699 = vpop.f32.mrf.mxu0
        %2700 = vmatprep.mubr.bf16.mxu0 0
        %2701 = vmatmul.mubr.bf16.gmra.mxu0 %v2548
        %v2702 = vpop.f32.mrf.mxu0
        %v2703 = vadd.f32 0.0, %v2702
        %v2704 = vpop.f32.mrf.mxu0
        %v2705 = vpop.f32.mrf.mxu0
        %v2706 = vadd.f32 0.0, %v2705
        %v2707 = vpop.f32.mrf.mxu0
        %2708 = vmatprep.mubr.bf16.mxu0 0
        %2709 = vmatmul.mubr.bf16.gmra.mxu0 %v2551
        %v2710 = vpop.f32.mrf.mxu0
        %v2711 = vadd.f32 0.0, %v2710
        %v2712 = vpop.f32.mrf.mxu0
        %v2713 = vpop.f32.mrf.mxu0
        %v2714 = vadd.f32 0.0, %v2713
        %v2715 = vpop.f32.mrf.mxu0
        %2716 = vdwg.mxu0
        %v2717 = vadd.f32 %v1991, %v2591
        %v2718 = vadd.f32 %v1992, %v2594
        %v2719 = vadd.f32 %v1993, %v2599
        %v2720 = vadd.f32 %v1994, %v2602
        %v2721 = vadd.f32 %v1995, %v2607
        %v2722 = vadd.f32 %v1996, %v2610
        %v2723 = vadd.f32 %v1997, %v2615
        %v2724 = vadd.f32 %v1998, %v2618
        %v2725 = vadd.f32 %v1999, %v2623
        %v2726 = vadd.f32 %v2000, %v2626
        %v2727 = vadd.f32 %v2001, %v2631
        %v2728 = vadd.f32 %v2002, %v2634
        %v2729 = vadd.f32 %v2003, %v2639
        %v2730 = vadd.f32 %v2004, %v2642
        %v2731 = vadd.f32 %v2005, %v2647
        %v2732 = vadd.f32 %v2006, %v2650
        %v2733 = vadd.f32 %v2007, %v2655
        %v2734 = vadd.f32 %v2008, %v2658
        %v2735 = vadd.f32 %v2009, %v2663
        %v2736 = vadd.f32 %v2010, %v2666
        %v2737 = vadd.f32 %v2011, %v2671
        %v2738 = vadd.f32 %v2012, %v2674
        %v2739 = vadd.f32 %v2013, %v2679
        %v2740 = vadd.f32 %v2014, %v2682
        %v2741 = vadd.f32 %v2015, %v2687
        %v2742 = vadd.f32 %v2016, %v2690
        %v2743 = vadd.f32 %v2017, %v2695
        %v2744 = vadd.f32 %v2018, %v2698
        %v2745 = vadd.f32 %v2019, %v2703
        %v2746 = vadd.f32 %v2020, %v2706
        %v2747 = vadd.f32 %v2021, %v2711
        %v2748 = vadd.f32 %v2022, %v2714
        %v2749 = vld [vmem:[%s1664] sm:$0xe]
        %v2750 = vld [vmem:[%s1664 + $0xc] sm:$0xe]
        %v2751 = vld [vmem:[%s1664 + $0x18] sm:$0xe]
        %v2752 = vld [vmem:[%s1664 + $0x24] sm:$0xe]
        %v2753 = vld [vmem:[%s1664 + $0x30] sm:$0xe]
        %v2754 = vld [vmem:[%s1664 + $0x3c] sm:$0xe]
        %v2755 = vld [vmem:[%s1664 + $0x48] sm:$0xe]
        %v2756 = vld [vmem:[%s1664 + $0x54] sm:$0xe]
        %v2757 = vld [vmem:[%s1664 + $0x60] sm:$0xe]
        %v2758 = vld [vmem:[%s1664 + $0x6c] sm:$0xe]
        %v2759 = vld [vmem:[%s1664 + $0x78] sm:$0xe]
        %v2760 = vld [vmem:[%s1664 + $0x84] sm:$0xe]
        %v2761 = vld [vmem:[%s1664 + $0x90] sm:$0xe]
        %v2762 = vld [vmem:[%s1664 + $0x9c] sm:$0xe]
        %v2763 = vld [vmem:[%s1664 + $0xa8] sm:$0xe]
        %v2764 = vld [vmem:[%s1664 + $0xb4] sm:$0xe]
        %v2813 = vrot.slane %v2749, 5
        %v2814 = vrot.slane %v2813, 4
        %v2815 = vrot.slane %v2024, 5
        %v2816 = vsel %vm1254, %v2814, %v2815
        %v2817 = vrot.slane %v2815, 4
        %v2818 = vrot.slane %v2025, 5
        %v2819 = vsel %vm1254, %v2817, %v2818
        %v2820 = vrot.slane %v2750, 5
        %v2821 = vrot.slane %v2820, 4
        %v2822 = vrot.slane %v2027, 5
        %v2823 = vsel %vm1254, %v2821, %v2822
        %v2824 = vrot.slane %v2822, 4
        %v2825 = vrot.slane %v2028, 5
        %v2826 = vsel %vm1254, %v2824, %v2825
        %v2827 = vrot.slane %v2751, 5
        %v2828 = vrot.slane %v2827, 4
        %v2829 = vrot.slane %v2030, 5
        %v2830 = vsel %vm1254, %v2828, %v2829
        %v2831 = vrot.slane %v2829, 4
        %v2832 = vrot.slane %v2031, 5
        %v2833 = vsel %vm1254, %v2831, %v2832
        %v2834 = vrot.slane %v2752, 5
        %v2835 = vrot.slane %v2834, 4
        %v2836 = vrot.slane %v2033, 5
        %v2837 = vsel %vm1254, %v2835, %v2836
        %v2838 = vrot.slane %v2836, 4
        %v2839 = vrot.slane %v2034, 5
        %v2840 = vsel %vm1254, %v2838, %v2839
        %v2841 = vrot.slane %v2753, 5
        %v2842 = vrot.slane %v2841, 4
        %v2843 = vrot.slane %v2036, 5
        %v2844 = vsel %vm1254, %v2842, %v2843
        %v2845 = vrot.slane %v2843, 4
        %v2846 = vrot.slane %v2037, 5
        %v2847 = vsel %vm1254, %v2845, %v2846
        %v2848 = vrot.slane %v2754, 5
        %v2849 = vrot.slane %v2848, 4
        %v2850 = vrot.slane %v2039, 5
        %v2851 = vsel %vm1254, %v2849, %v2850
        %v2852 = vrot.slane %v2850, 4
        %v2853 = vrot.slane %v2040, 5
        %v2854 = vsel %vm1254, %v2852, %v2853
        %v2855 = vrot.slane %v2755, 5
        %v2856 = vrot.slane %v2855, 4
        %v2857 = vrot.slane %v2042, 5
        %v2858 = vsel %vm1254, %v2856, %v2857
        %v2859 = vrot.slane %v2857, 4
        %v2860 = vrot.slane %v2043, 5
        %v2861 = vsel %vm1254, %v2859, %v2860
        %v2862 = vrot.slane %v2756, 5
        %v2863 = vrot.slane %v2862, 4
        %v2864 = vrot.slane %v2045, 5
        %v2865 = vsel %vm1254, %v2863, %v2864
        %v2866 = vrot.slane %v2864, 4
        %v2867 = vrot.slane %v2046, 5
        %v2868 = vsel %vm1254, %v2866, %v2867
        %v2869 = vrot.slane %v2757, 5
        %v2870 = vrot.slane %v2869, 4
        %v2871 = vrot.slane %v2048, 5
        %v2872 = vsel %vm1254, %v2870, %v2871
        %v2873 = vrot.slane %v2871, 4
        %v2874 = vrot.slane %v2049, 5
        %v2875 = vsel %vm1254, %v2873, %v2874
        %v2876 = vrot.slane %v2758, 5
        %v2877 = vrot.slane %v2876, 4
        %v2878 = vrot.slane %v2051, 5
        %v2879 = vsel %vm1254, %v2877, %v2878
        %v2880 = vrot.slane %v2878, 4
        %v2881 = vrot.slane %v2052, 5
        %v2882 = vsel %vm1254, %v2880, %v2881
        %v2883 = vrot.slane %v2759, 5
        %v2884 = vrot.slane %v2883, 4
        %v2885 = vrot.slane %v2054, 5
        %v2886 = vsel %vm1254, %v2884, %v2885
        %v2887 = vrot.slane %v2885, 4
        %v2888 = vrot.slane %v2055, 5
        %v2889 = vsel %vm1254, %v2887, %v2888
        %v2890 = vrot.slane %v2760, 5
        %v2891 = vrot.slane %v2890, 4
        %v2892 = vrot.slane %v2057, 5
        %v2893 = vsel %vm1254, %v2891, %v2892
        %v2894 = vrot.slane %v2892, 4
        %v2895 = vrot.slane %v2058, 5
        %v2896 = vsel %vm1254, %v2894, %v2895
        %v2897 = vrot.slane %v2761, 5
        %v2898 = vrot.slane %v2897, 4
        %v2899 = vrot.slane %v2060, 5
        %v2900 = vsel %vm1254, %v2898, %v2899
        %v2901 = vrot.slane %v2899, 4
        %v2902 = vrot.slane %v2061, 5
        %v2903 = vsel %vm1254, %v2901, %v2902
        %v2904 = vrot.slane %v2762, 5
        %v2905 = vrot.slane %v2904, 4
        %v2906 = vrot.slane %v2063, 5
        %v2907 = vsel %vm1254, %v2905, %v2906
        %v2908 = vrot.slane %v2906, 4
        %v2909 = vrot.slane %v2064, 5
        %v2910 = vsel %vm1254, %v2908, %v2909
        %v2911 = vrot.slane %v2763, 5
        %v2912 = vrot.slane %v2911, 4
        %v2913 = vrot.slane %v2066, 5
        %v2914 = vsel %vm1254, %v2912, %v2913
        %v2915 = vrot.slane %v2913, 4
        %v2916 = vrot.slane %v2067, 5
        %v2917 = vsel %vm1254, %v2915, %v2916
        %v2918 = vrot.slane %v2764, 5
        %v2919 = vrot.slane %v2918, 4
        %v2920 = vrot.slane %v2069, 5
        %v2921 = vsel %vm1254, %v2919, %v2920
        %v2922 = vrot.slane %v2920, 4
        %v2923 = vrot.slane %v2070, 5
        %v2924 = vsel %vm1254, %v2922, %v2923
        %s2925 = scalar_lea.vmem %s1, 10
        %v2926 = vld [vmem:[%s2925] sm:$0x3]
        %v2927 = vunpack.c.l.b16 %v2816
        %v2928 = vunpack.c.l.b16 %v2819
        %v2929 = vunpack.c.l.b16 %v2823
        %v2930 = vunpack.c.l.b16 %v2826
        %v2931 = vunpack.c.l.b16 %v2830
        %v2932 = vunpack.c.l.b16 %v2833
        %v2933 = vunpack.c.l.b16 %v2837
        %v2934 = vunpack.c.l.b16 %v2840
        %v2935 = vunpack.c.l.b16 %v2844
        %v2936 = vunpack.c.l.b16 %v2847
        %v2937 = vunpack.c.l.b16 %v2851
        %v2938 = vunpack.c.l.b16 %v2854
        %v2939 = vunpack.c.l.b16 %v2858
        %v2940 = vunpack.c.l.b16 %v2861
        %v2941 = vunpack.c.l.b16 %v2865
        %v2942 = vunpack.c.l.b16 %v2868
        %v2943 = vunpack.c.l.b16 %v2872
        %v2944 = vunpack.c.l.b16 %v2875
        %v2945 = vunpack.c.l.b16 %v2879
        %v2946 = vunpack.c.l.b16 %v2882
        %v2947 = vunpack.c.l.b16 %v2886
        %v2948 = vunpack.c.l.b16 %v2889
        %v2949 = vunpack.c.l.b16 %v2893
        %v2950 = vunpack.c.l.b16 %v2896
        %v2951 = vunpack.c.l.b16 %v2900
        %v2952 = vunpack.c.l.b16 %v2903
        %v2953 = vunpack.c.l.b16 %v2907
        %v2954 = vunpack.c.l.b16 %v2910
        %v2955 = vunpack.c.l.b16 %v2914
        %v2956 = vunpack.c.l.b16 %v2917
        %v2957 = vunpack.c.l.b16 %v2921
        %v2958 = vunpack.c.l.b16 %v2924
        %v2959 = vpack.c.b16 %v2928, %v2927
        %v2960 = vpack.c.b16 %v2930, %v2929
        %v2961 = vpack.c.b16 %v2932, %v2931
        %v2962 = vpack.c.b16 %v2934, %v2933
        %v2963 = vpack.c.b16 %v2936, %v2935
        %v2964 = vpack.c.b16 %v2938, %v2937
        %v2965 = vpack.c.b16 %v2940, %v2939
        %v2966 = vpack.c.b16 %v2942, %v2941
        %v2967 = vpack.c.b16 %v2944, %v2943
        %v2968 = vpack.c.b16 %v2946, %v2945
        %v2969 = vpack.c.b16 %v2948, %v2947
        %v2970 = vpack.c.b16 %v2950, %v2949
        %v2971 = vpack.c.b16 %v2952, %v2951
        %v2972 = vpack.c.b16 %v2954, %v2953
        %v2973 = vpack.c.b16 %v2956, %v2955
        %v2974 = vpack.c.b16 %v2958, %v2957
        %v2976 = vsel %vm698, %v2959, 0
        %v2979 = vsel %vm698, %v2960, 0
        %v2982 = vsel %vm698, %v2961, 0
        %v2985 = vsel %vm698, %v2962, 0
        %v2988 = vsel %vm698, %v2963, 0
        %v2991 = vsel %vm698, %v2964, 0
        %v2994 = vsel %vm698, %v2965, 0
        %v2997 = vsel %vm698, %v2966, 0
        %v3000 = vsel %vm698, %v2967, 0
        %v3003 = vsel %vm698, %v2968, 0
        %v3006 = vsel %vm698, %v2969, 0
        %v3009 = vsel %vm698, %v2970, 0
        %v3012 = vsel %vm698, %v2971, 0
        %v3015 = vsel %vm698, %v2972, 0
        %v3018 = vsel %vm698, %v2973, 0
        %v3021 = vsel %vm698, %v2974, 0
        %v3024 = vsel %vm747, %v2926, 0
        %3026 = vmatprep.subr.bf16.mxu0 0
        %3027 = vmatpush1.bf16.msra.mxu0 0
        %3028 = vmatprep.subr.bf16.mxu0 0
        %3029 = vmatpush1.bf16.msra.mxu0 0
        %3030 = vmatprep.subr.bf16.mxu0 0
        %3031 = vmatpush1.bf16.msra.mxu0 0
        %3032 = vmatprep.subr.bf16.mxu0 0
        %3033 = vmatpush1.bf16.msra.mxu0 0
        %3034 = vmatprep.subr.bf16.mxu0 0
        %3035 = vmatpush1.bf16.msra.mxu0 0
        %3036 = vmatprep.subr.bf16.mxu0 0
        %3037 = vmatpush1.bf16.msra.mxu0 0
        %3038 = vmatprep.subr.bf16.mxu0 0
        %3039 = vmatpush1.bf16.msra.mxu0 0
        %3040 = vmatprep.subr.bf16.mxu0 0
        %3041 = vmatpush1.bf16.msra.mxu0 %v3024
        %3042 = vmatprep.subr.bf16.mxu0 0
        %3043 = vmatpush2.bf16.msra.mxu0 0
        %3044 = vmatprep.subr.bf16.mxu0 0
        %3045 = vmatpush2.bf16.msra.mxu0 0
        %3046 = vmatprep.subr.bf16.mxu0 0
        %3047 = vmatpush2.bf16.msra.mxu0 0
        %3048 = vmatprep.subr.bf16.mxu0 0
        %3049 = vmatpush2.bf16.msra.mxu0 0
        %3050 = vmatprep.subr.bf16.mxu0 0
        %3051 = vmatpush2.bf16.msra.mxu0 0
        %3052 = vmatprep.subr.bf16.mxu0 0
        %3053 = vmatpush2.bf16.msra.mxu0 0
        %3054 = vmatprep.subr.bf16.mxu0 0
        %3055 = vmatpush2.bf16.msra.mxu0 0
        %3056 = vmatprep.subr.bf16.mxu0 0
        %3057 = vmatpush2.bf16.msra.mxu0 0
        %3058 = vmatprep.mubr.bf16.mxu0 0
        %3059 = vmatmul.mubr.bf16.gmra.mxu0 %v2976
        %v3060 = vpop.f32.mrf.mxu0
        %v3061 = vadd.f32 0.0, %v3060
        %v3062 = vpop.f32.mrf.mxu0
        %v3063 = vpop.f32.mrf.mxu0
        %v3064 = vadd.f32 0.0, %v3063
        %v3065 = vpop.f32.mrf.mxu0
        %3066 = vmatprep.mubr.bf16.mxu0 0
        %3067 = vmatmul.mubr.bf16.gmra.mxu0 %v2979
        %v3068 = vpop.f32.mrf.mxu0
        %v3069 = vadd.f32 0.0, %v3068
        %v3070 = vpop.f32.mrf.mxu0
        %v3071 = vpop.f32.mrf.mxu0
        %v3072 = vadd.f32 0.0, %v3071
        %v3073 = vpop.f32.mrf.mxu0
        %3074 = vmatprep.mubr.bf16.mxu0 0
        %3075 = vmatmul.mubr.bf16.gmra.mxu0 %v2982
        %v3076 = vpop.f32.mrf.mxu0
        %v3077 = vadd.f32 0.0, %v3076
        %v3078 = vpop.f32.mrf.mxu0
        %v3079 = vpop.f32.mrf.mxu0
        %v3080 = vadd.f32 0.0, %v3079
        %v3081 = vpop.f32.mrf.mxu0
        %3082 = vmatprep.mubr.bf16.mxu0 0
        %3083 = vmatmul.mubr.bf16.gmra.mxu0 %v2985
        %v3084 = vpop.f32.mrf.mxu0
        %v3085 = vadd.f32 0.0, %v3084
        %v3086 = vpop.f32.mrf.mxu0
        %v3087 = vpop.f32.mrf.mxu0
        %v3088 = vadd.f32 0.0, %v3087
        %v3089 = vpop.f32.mrf.mxu0
        %3090 = vmatprep.mubr.bf16.mxu0 0
        %3091 = vmatmul.mubr.bf16.gmra.mxu0 %v2988
        %v3092 = vpop.f32.mrf.mxu0
        %v3093 = vadd.f32 0.0, %v3092
        %v3094 = vpop.f32.mrf.mxu0
        %v3095 = vpop.f32.mrf.mxu0
        %v3096 = vadd.f32 0.0, %v3095
        %v3097 = vpop.f32.mrf.mxu0
        %3098 = vmatprep.mubr.bf16.mxu0 0
        %3099 = vmatmul.mubr.bf16.gmra.mxu0 %v2991
        %v3100 = vpop.f32.mrf.mxu0
        %v3101 = vadd.f32 0.0, %v3100
        %v3102 = vpop.f32.mrf.mxu0
        %v3103 = vpop.f32.mrf.mxu0
        %v3104 = vadd.f32 0.0, %v3103
        %v3105 = vpop.f32.mrf.mxu0
        %3106 = vmatprep.mubr.bf16.mxu0 0
        %3107 = vmatmul.mubr.bf16.gmra.mxu0 %v2994
        %v3108 = vpop.f32.mrf.mxu0
        %v3109 = vadd.f32 0.0, %v3108
        %v3110 = vpop.f32.mrf.mxu0
        %v3111 = vpop.f32.mrf.mxu0
        %v3112 = vadd.f32 0.0, %v3111
        %v3113 = vpop.f32.mrf.mxu0
        %3114 = vmatprep.mubr.bf16.mxu0 0
        %3115 = vmatmul.mubr.bf16.gmra.mxu0 %v2997
        %v3116 = vpop.f32.mrf.mxu0
        %v3117 = vadd.f32 0.0, %v3116
        %v3118 = vpop.f32.mrf.mxu0
        %v3119 = vpop.f32.mrf.mxu0
        %v3120 = vadd.f32 0.0, %v3119
        %v3121 = vpop.f32.mrf.mxu0
        %3122 = vmatprep.mubr.bf16.mxu0 0
        %3123 = vmatmul.mubr.bf16.gmra.mxu0 %v3000
        %v3124 = vpop.f32.mrf.mxu0
        %v3125 = vadd.f32 0.0, %v3124
        %v3126 = vpop.f32.mrf.mxu0
        %v3127 = vpop.f32.mrf.mxu0
        %v3128 = vadd.f32 0.0, %v3127
        %v3129 = vpop.f32.mrf.mxu0
        %3130 = vmatprep.mubr.bf16.mxu0 0
        %3131 = vmatmul.mubr.bf16.gmra.mxu0 %v3003
        %v3132 = vpop.f32.mrf.mxu0
        %v3133 = vadd.f32 0.0, %v3132
        %v3134 = vpop.f32.mrf.mxu0
        %v3135 = vpop.f32.mrf.mxu0
        %v3136 = vadd.f32 0.0, %v3135
        %v3137 = vpop.f32.mrf.mxu0
        %3138 = vmatprep.mubr.bf16.mxu0 0
        %3139 = vmatmul.mubr.bf16.gmra.mxu0 %v3006
        %v3140 = vpop.f32.mrf.mxu0
        %v3141 = vadd.f32 0.0, %v3140
        %v3142 = vpop.f32.mrf.mxu0
        %v3143 = vpop.f32.mrf.mxu0
        %v3144 = vadd.f32 0.0, %v3143
        %v3145 = vpop.f32.mrf.mxu0
        %3146 = vmatprep.mubr.bf16.mxu0 0
        %3147 = vmatmul.mubr.bf16.gmra.mxu0 %v3009
        %v3148 = vpop.f32.mrf.mxu0
        %v3149 = vadd.f32 0.0, %v3148
        %v3150 = vpop.f32.mrf.mxu0
        %v3151 = vpop.f32.mrf.mxu0
        %v3152 = vadd.f32 0.0, %v3151
        %v3153 = vpop.f32.mrf.mxu0
        %3154 = vmatprep.mubr.bf16.mxu0 0
        %3155 = vmatmul.mubr.bf16.gmra.mxu0 %v3012
        %v3156 = vpop.f32.mrf.mxu0
        %v3157 = vadd.f32 0.0, %v3156
        %v3158 = vpop.f32.mrf.mxu0
        %v3159 = vpop.f32.mrf.mxu0
        %v3160 = vadd.f32 0.0, %v3159
        %v3161 = vpop.f32.mrf.mxu0
        %3162 = vmatprep.mubr.bf16.mxu0 0
        %3163 = vmatmul.mubr.bf16.gmra.mxu0 %v3015
        %v3164 = vpop.f32.mrf.mxu0
        %v3165 = vadd.f32 0.0, %v3164
        %v3166 = vpop.f32.mrf.mxu0
        %v3167 = vpop.f32.mrf.mxu0
        %v3168 = vadd.f32 0.0, %v3167
        %v3169 = vpop.f32.mrf.mxu0
        %3170 = vmatprep.mubr.bf16.mxu0 0
        %3171 = vmatmul.mubr.bf16.gmra.mxu0 %v3018
        %v3172 = vpop.f32.mrf.mxu0
        %v3173 = vadd.f32 0.0, %v3172
        %v3174 = vpop.f32.mrf.mxu0
        %v3175 = vpop.f32.mrf.mxu0
        %v3176 = vadd.f32 0.0, %v3175
        %v3177 = vpop.f32.mrf.mxu0
        %3178 = vmatprep.mubr.bf16.mxu0 0
        %3179 = vmatmul.mubr.bf16.gmra.mxu0 %v3021
        %v3180 = vpop.f32.mrf.mxu0
        %v3181 = vadd.f32 0.0, %v3180
        %v3182 = vpop.f32.mrf.mxu0
        %v3183 = vpop.f32.mrf.mxu0
        %v3184 = vadd.f32 0.0, %v3183
        %v3185 = vpop.f32.mrf.mxu0
        %3186 = vdwg.mxu0
        %v3187 = vadd.f32 %v2717, %v3061
        %v3188 = vadd.f32 %v2718, %v3064
        %v3189 = vadd.f32 %v2719, %v3069
        %v3190 = vadd.f32 %v2720, %v3072
        %v3191 = vadd.f32 %v2721, %v3077
        %v3192 = vadd.f32 %v2722, %v3080
        %v3193 = vadd.f32 %v2723, %v3085
        %v3194 = vadd.f32 %v2724, %v3088
        %v3195 = vadd.f32 %v2725, %v3093
        %v3196 = vadd.f32 %v2726, %v3096
        %v3197 = vadd.f32 %v2727, %v3101
        %v3198 = vadd.f32 %v2728, %v3104
        %v3199 = vadd.f32 %v2729, %v3109
        %v3200 = vadd.f32 %v2730, %v3112
        %v3201 = vadd.f32 %v2731, %v3117
        %v3202 = vadd.f32 %v2732, %v3120
        %v3203 = vadd.f32 %v2733, %v3125
        %v3204 = vadd.f32 %v2734, %v3128
        %v3205 = vadd.f32 %v2735, %v3133
        %v3206 = vadd.f32 %v2736, %v3136
        %v3207 = vadd.f32 %v2737, %v3141
        %v3208 = vadd.f32 %v2738, %v3144
        %v3209 = vadd.f32 %v2739, %v3149
        %v3210 = vadd.f32 %v2740, %v3152
        %v3211 = vadd.f32 %v2741, %v3157
        %v3212 = vadd.f32 %v2742, %v3160
        %v3213 = vadd.f32 %v2743, %v3165
        %v3214 = vadd.f32 %v2744, %v3168
        %v3215 = vadd.f32 %v2745, %v3173
        %v3216 = vadd.f32 %v2746, %v3176
        %v3217 = vadd.f32 %v2747, %v3181
        %v3218 = vadd.f32 %v2748, %v3184
        %s3219 = sadd.s32 %s208, 2
        %s3220 = smul.u32 %s3219, 3
        %s3221 = smul.addr %s3220, 4
        %s3222 = scalar_lea.vmem %s196, %s3221
        %v3223 = vld [vmem:[%s3222] sm:$0xf]
        %v3224 = vld [vmem:[%s3222 + $0x4] sm:$0xf]
        %v3225 = vld [vmem:[%s3222 + $0xc] sm:$0xf]
        %v3226 = vld [vmem:[%s3222 + $0x10] sm:$0xf]
        %v3227 = vld [vmem:[%s3222 + $0x18] sm:$0xf]
        %v3228 = vld [vmem:[%s3222 + $0x1c] sm:$0xf]
        %v3229 = vld [vmem:[%s3222 + $0x24] sm:$0xf]
        %v3230 = vld [vmem:[%s3222 + $0x28] sm:$0xf]
        %v3231 = vld [vmem:[%s3222 + $0x30] sm:$0xf]
        %v3232 = vld [vmem:[%s3222 + $0x34] sm:$0xf]
        %v3233 = vld [vmem:[%s3222 + $0x3c] sm:$0xf]
        %v3234 = vld [vmem:[%s3222 + $0x40] sm:$0xf]
        %v3235 = vld [vmem:[%s3222 + $0x48] sm:$0xf]
        %v3236 = vld [vmem:[%s3222 + $0x4c] sm:$0xf]
        %v3237 = vld [vmem:[%s3222 + $0x54] sm:$0xf]
        %v3238 = vld [vmem:[%s3222 + $0x58] sm:$0xf]
        %v3239 = vld [vmem:[%s3222 + $0x60] sm:$0xf]
        %v3240 = vld [vmem:[%s3222 + $0x64] sm:$0xf]
        %v3241 = vld [vmem:[%s3222 + $0x6c] sm:$0xf]
        %v3242 = vld [vmem:[%s3222 + $0x70] sm:$0xf]
        %v3243 = vld [vmem:[%s3222 + $0x78] sm:$0xf]
        %v3244 = vld [vmem:[%s3222 + $0x7c] sm:$0xf]
        %v3245 = vld [vmem:[%s3222 + $0x84] sm:$0xf]
        %v3246 = vld [vmem:[%s3222 + $0x88] sm:$0xf]
        %v3247 = vld [vmem:[%s3222 + $0x90] sm:$0xf]
        %v3248 = vld [vmem:[%s3222 + $0x94] sm:$0xf]
        %v3249 = vld [vmem:[%s3222 + $0x9c] sm:$0xf]
        %v3250 = vld [vmem:[%s3222 + $0xa0] sm:$0xf]
        %v3251 = vld [vmem:[%s3222 + $0xa8] sm:$0xf]
        %v3252 = vld [vmem:[%s3222 + $0xac] sm:$0xf]
        %v3253 = vld [vmem:[%s3222 + $0xb4] sm:$0xf]
        %v3254 = vld [vmem:[%s3222 + $0xb8] sm:$0xf]
        %s3255 = scalar_lea.vmem %s1, 12
        %v3256 = vld [vmem:[%s3255] sm:$0x3]
        %v3289 = vunpack.c.l.b16 %v3223
        %v3290 = vunpack.c.l.b16 %v3224
        %v3291 = vunpack.c.l.b16 %v3225
        %v3292 = vunpack.c.l.b16 %v3226
        %v3293 = vunpack.c.l.b16 %v3227
        %v3294 = vunpack.c.l.b16 %v3228
        %v3295 = vunpack.c.l.b16 %v3229
        %v3296 = vunpack.c.l.b16 %v3230
        %v3297 = vunpack.c.l.b16 %v3231
        %v3298 = vunpack.c.l.b16 %v3232
        %v3299 = vunpack.c.l.b16 %v3233
        %v3300 = vunpack.c.l.b16 %v3234
        %v3301 = vunpack.c.l.b16 %v3235
        %v3302 = vunpack.c.l.b16 %v3236
        %v3303 = vunpack.c.l.b16 %v3237
        %v3304 = vunpack.c.l.b16 %v3238
        %v3305 = vunpack.c.l.b16 %v3239
        %v3306 = vunpack.c.l.b16 %v3240
        %v3307 = vunpack.c.l.b16 %v3241
        %v3308 = vunpack.c.l.b16 %v3242
        %v3309 = vunpack.c.l.b16 %v3243
        %v3310 = vunpack.c.l.b16 %v3244
        %v3311 = vunpack.c.l.b16 %v3245
        %v3312 = vunpack.c.l.b16 %v3246
        %v3313 = vunpack.c.l.b16 %v3247
        %v3314 = vunpack.c.l.b16 %v3248
        %v3315 = vunpack.c.l.b16 %v3249
        %v3316 = vunpack.c.l.b16 %v3250
        %v3317 = vunpack.c.l.b16 %v3251
        %v3318 = vunpack.c.l.b16 %v3252
        %v3319 = vunpack.c.l.b16 %v3253
        %v3320 = vunpack.c.l.b16 %v3254
        %v3321 = vpack.c.b16 %v3290, %v3289
        %v3322 = vpack.c.b16 %v3292, %v3291
        %v3323 = vpack.c.b16 %v3294, %v3293
        %v3324 = vpack.c.b16 %v3296, %v3295
        %v3325 = vpack.c.b16 %v3298, %v3297
        %v3326 = vpack.c.b16 %v3300, %v3299
        %v3327 = vpack.c.b16 %v3302, %v3301
        %v3328 = vpack.c.b16 %v3304, %v3303
        %v3329 = vpack.c.b16 %v3306, %v3305
        %v3330 = vpack.c.b16 %v3308, %v3307
        %v3331 = vpack.c.b16 %v3310, %v3309
        %v3332 = vpack.c.b16 %v3312, %v3311
        %v3333 = vpack.c.b16 %v3314, %v3313
        %v3334 = vpack.c.b16 %v3316, %v3315
        %v3335 = vpack.c.b16 %v3318, %v3317
        %v3336 = vpack.c.b16 %v3320, %v3319
        %v3338 = vsel %vm698, %v3321, 0
        %v3341 = vsel %vm698, %v3322, 0
        %v3344 = vsel %vm698, %v3323, 0
        %v3347 = vsel %vm698, %v3324, 0
        %v3350 = vsel %vm698, %v3325, 0
        %v3353 = vsel %vm698, %v3326, 0
        %v3356 = vsel %vm698, %v3327, 0
        %v3359 = vsel %vm698, %v3328, 0
        %v3362 = vsel %vm698, %v3329, 0
        %v3365 = vsel %vm698, %v3330, 0
        %v3368 = vsel %vm698, %v3331, 0
        %v3371 = vsel %vm698, %v3332, 0
        %v3374 = vsel %vm698, %v3333, 0
        %v3377 = vsel %vm698, %v3334, 0
        %v3380 = vsel %vm698, %v3335, 0
        %v3383 = vsel %vm698, %v3336, 0
        %v3386 = vsel %vm747, %v3256, 0
        %3388 = vmatprep.subr.bf16.mxu0 0
        %3389 = vmatpush1.bf16.msra.mxu0 0
        %3390 = vmatprep.subr.bf16.mxu0 0
        %3391 = vmatpush1.bf16.msra.mxu0 0
        %3392 = vmatprep.subr.bf16.mxu0 0
        %3393 = vmatpush1.bf16.msra.mxu0 0
        %3394 = vmatprep.subr.bf16.mxu0 0
        %3395 = vmatpush1.bf16.msra.mxu0 0
        %3396 = vmatprep.subr.bf16.mxu0 0
        %3397 = vmatpush1.bf16.msra.mxu0 0
        %3398 = vmatprep.subr.bf16.mxu0 0
        %3399 = vmatpush1.bf16.msra.mxu0 0
        %3400 = vmatprep.subr.bf16.mxu0 0
        %3401 = vmatpush1.bf16.msra.mxu0 0
        %3402 = vmatprep.subr.bf16.mxu0 0
        %3403 = vmatpush1.bf16.msra.mxu0 %v3386
        %3404 = vmatprep.subr.bf16.mxu0 0
        %3405 = vmatpush2.bf16.msra.mxu0 0
        %3406 = vmatprep.subr.bf16.mxu0 0
        %3407 = vmatpush2.bf16.msra.mxu0 0
        %3408 = vmatprep.subr.bf16.mxu0 0
        %3409 = vmatpush2.bf16.msra.mxu0 0
        %3410 = vmatprep.subr.bf16.mxu0 0
        %3411 = vmatpush2.bf16.msra.mxu0 0
        %3412 = vmatprep.subr.bf16.mxu0 0
        %3413 = vmatpush2.bf16.msra.mxu0 0
        %3414 = vmatprep.subr.bf16.mxu0 0
        %3415 = vmatpush2.bf16.msra.mxu0 0
        %3416 = vmatprep.subr.bf16.mxu0 0
        %3417 = vmatpush2.bf16.msra.mxu0 0
        %3418 = vmatprep.subr.bf16.mxu0 0
        %3419 = vmatpush2.bf16.msra.mxu0 0
        %3420 = vmatprep.mubr.bf16.mxu0 0
        %3421 = vmatmul.mubr.bf16.gmra.mxu0 %v3338
        %v3422 = vpop.f32.mrf.mxu0
        %v3423 = vadd.f32 0.0, %v3422
        %v3424 = vpop.f32.mrf.mxu0
        %v3425 = vpop.f32.mrf.mxu0
        %v3426 = vadd.f32 0.0, %v3425
        %v3427 = vpop.f32.mrf.mxu0
        %3428 = vmatprep.mubr.bf16.mxu0 0
        %3429 = vmatmul.mubr.bf16.gmra.mxu0 %v3341
        %v3430 = vpop.f32.mrf.mxu0
        %v3431 = vadd.f32 0.0, %v3430
        %v3432 = vpop.f32.mrf.mxu0
        %v3433 = vpop.f32.mrf.mxu0
        %v3434 = vadd.f32 0.0, %v3433
        %v3435 = vpop.f32.mrf.mxu0
        %3436 = vmatprep.mubr.bf16.mxu0 0
        %3437 = vmatmul.mubr.bf16.gmra.mxu0 %v3344
        %v3438 = vpop.f32.mrf.mxu0
        %v3439 = vadd.f32 0.0, %v3438
        %v3440 = vpop.f32.mrf.mxu0
        %v3441 = vpop.f32.mrf.mxu0
        %v3442 = vadd.f32 0.0, %v3441
        %v3443 = vpop.f32.mrf.mxu0
        %3444 = vmatprep.mubr.bf16.mxu0 0
        %3445 = vmatmul.mubr.bf16.gmra.mxu0 %v3347
        %v3446 = vpop.f32.mrf.mxu0
        %v3447 = vadd.f32 0.0, %v3446
        %v3448 = vpop.f32.mrf.mxu0
        %v3449 = vpop.f32.mrf.mxu0
        %v3450 = vadd.f32 0.0, %v3449
        %v3451 = vpop.f32.mrf.mxu0
        %3452 = vmatprep.mubr.bf16.mxu0 0
        %3453 = vmatmul.mubr.bf16.gmra.mxu0 %v3350
        %v3454 = vpop.f32.mrf.mxu0
        %v3455 = vadd.f32 0.0, %v3454
        %v3456 = vpop.f32.mrf.mxu0
        %v3457 = vpop.f32.mrf.mxu0
        %v3458 = vadd.f32 0.0, %v3457
        %v3459 = vpop.f32.mrf.mxu0
        %3460 = vmatprep.mubr.bf16.mxu0 0
        %3461 = vmatmul.mubr.bf16.gmra.mxu0 %v3353
        %v3462 = vpop.f32.mrf.mxu0
        %v3463 = vadd.f32 0.0, %v3462
        %v3464 = vpop.f32.mrf.mxu0
        %v3465 = vpop.f32.mrf.mxu0
        %v3466 = vadd.f32 0.0, %v3465
        %v3467 = vpop.f32.mrf.mxu0
        %3468 = vmatprep.mubr.bf16.mxu0 0
        %3469 = vmatmul.mubr.bf16.gmra.mxu0 %v3356
        %v3470 = vpop.f32.mrf.mxu0
        %v3471 = vadd.f32 0.0, %v3470
        %v3472 = vpop.f32.mrf.mxu0
        %v3473 = vpop.f32.mrf.mxu0
        %v3474 = vadd.f32 0.0, %v3473
        %v3475 = vpop.f32.mrf.mxu0
        %3476 = vmatprep.mubr.bf16.mxu0 0
        %3477 = vmatmul.mubr.bf16.gmra.mxu0 %v3359
        %v3478 = vpop.f32.mrf.mxu0
        %v3479 = vadd.f32 0.0, %v3478
        %v3480 = vpop.f32.mrf.mxu0
        %v3481 = vpop.f32.mrf.mxu0
        %v3482 = vadd.f32 0.0, %v3481
        %v3483 = vpop.f32.mrf.mxu0
        %3484 = vmatprep.mubr.bf16.mxu0 0
        %3485 = vmatmul.mubr.bf16.gmra.mxu0 %v3362
        %v3486 = vpop.f32.mrf.mxu0
        %v3487 = vadd.f32 0.0, %v3486
        %v3488 = vpop.f32.mrf.mxu0
        %v3489 = vpop.f32.mrf.mxu0
        %v3490 = vadd.f32 0.0, %v3489
        %v3491 = vpop.f32.mrf.mxu0
        %3492 = vmatprep.mubr.bf16.mxu0 0
        %3493 = vmatmul.mubr.bf16.gmra.mxu0 %v3365
        %v3494 = vpop.f32.mrf.mxu0
        %v3495 = vadd.f32 0.0, %v3494
        %v3496 = vpop.f32.mrf.mxu0
        %v3497 = vpop.f32.mrf.mxu0
        %v3498 = vadd.f32 0.0, %v3497
        %v3499 = vpop.f32.mrf.mxu0
        %3500 = vmatprep.mubr.bf16.mxu0 0
        %3501 = vmatmul.mubr.bf16.gmra.mxu0 %v3368
        %v3502 = vpop.f32.mrf.mxu0
        %v3503 = vadd.f32 0.0, %v3502
        %v3504 = vpop.f32.mrf.mxu0
        %v3505 = vpop.f32.mrf.mxu0
        %v3506 = vadd.f32 0.0, %v3505
        %v3507 = vpop.f32.mrf.mxu0
        %3508 = vmatprep.mubr.bf16.mxu0 0
        %3509 = vmatmul.mubr.bf16.gmra.mxu0 %v3371
        %v3510 = vpop.f32.mrf.mxu0
        %v3511 = vadd.f32 0.0, %v3510
        %v3512 = vpop.f32.mrf.mxu0
        %v3513 = vpop.f32.mrf.mxu0
        %v3514 = vadd.f32 0.0, %v3513
        %v3515 = vpop.f32.mrf.mxu0
        %3516 = vmatprep.mubr.bf16.mxu0 0
        %3517 = vmatmul.mubr.bf16.gmra.mxu0 %v3374
        %v3518 = vpop.f32.mrf.mxu0
        %v3519 = vadd.f32 0.0, %v3518
        %v3520 = vpop.f32.mrf.mxu0
        %v3521 = vpop.f32.mrf.mxu0
        %v3522 = vadd.f32 0.0, %v3521
        %v3523 = vpop.f32.mrf.mxu0
        %3524 = vmatprep.mubr.bf16.mxu0 0
        %3525 = vmatmul.mubr.bf16.gmra.mxu0 %v3377
        %v3526 = vpop.f32.mrf.mxu0
        %v3527 = vadd.f32 0.0, %v3526
        %v3528 = vpop.f32.mrf.mxu0
        %v3529 = vpop.f32.mrf.mxu0
        %v3530 = vadd.f32 0.0, %v3529
        %v3531 = vpop.f32.mrf.mxu0
        %3532 = vmatprep.mubr.bf16.mxu0 0
        %3533 = vmatmul.mubr.bf16.gmra.mxu0 %v3380
        %v3534 = vpop.f32.mrf.mxu0
        %v3535 = vadd.f32 0.0, %v3534
        %v3536 = vpop.f32.mrf.mxu0
        %v3537 = vpop.f32.mrf.mxu0
        %v3538 = vadd.f32 0.0, %v3537
        %v3539 = vpop.f32.mrf.mxu0
        %3540 = vmatprep.mubr.bf16.mxu0 0
        %3541 = vmatmul.mubr.bf16.gmra.mxu0 %v3383
        %v3542 = vpop.f32.mrf.mxu0
        %v3543 = vadd.f32 0.0, %v3542
        %v3544 = vpop.f32.mrf.mxu0
        %v3545 = vpop.f32.mrf.mxu0
        %v3546 = vadd.f32 0.0, %v3545
        %v3547 = vpop.f32.mrf.mxu0
        %3548 = vdwg.mxu0
        %v3549 = vadd.f32 %v3187, %v3423
        %v3550 = vadd.f32 %v3188, %v3426
        %v3551 = vadd.f32 %v3189, %v3431
        %v3552 = vadd.f32 %v3190, %v3434
        %v3553 = vadd.f32 %v3191, %v3439
        %v3554 = vadd.f32 %v3192, %v3442
        %v3555 = vadd.f32 %v3193, %v3447
        %v3556 = vadd.f32 %v3194, %v3450
        %v3557 = vadd.f32 %v3195, %v3455
        %v3558 = vadd.f32 %v3196, %v3458
        %v3559 = vadd.f32 %v3197, %v3463
        %v3560 = vadd.f32 %v3198, %v3466
        %v3561 = vadd.f32 %v3199, %v3471
        %v3562 = vadd.f32 %v3200, %v3474
        %v3563 = vadd.f32 %v3201, %v3479
        %v3564 = vadd.f32 %v3202, %v3482
        %v3565 = vadd.f32 %v3203, %v3487
        %v3566 = vadd.f32 %v3204, %v3490
        %v3567 = vadd.f32 %v3205, %v3495
        %v3568 = vadd.f32 %v3206, %v3498
        %v3569 = vadd.f32 %v3207, %v3503
        %v3570 = vadd.f32 %v3208, %v3506
        %v3571 = vadd.f32 %v3209, %v3511
        %v3572 = vadd.f32 %v3210, %v3514
        %v3573 = vadd.f32 %v3211, %v3519
        %v3574 = vadd.f32 %v3212, %v3522
        %v3575 = vadd.f32 %v3213, %v3527
        %v3576 = vadd.f32 %v3214, %v3530
        %v3577 = vadd.f32 %v3215, %v3535
        %v3578 = vadd.f32 %v3216, %v3538
        %v3579 = vadd.f32 %v3217, %v3543
        %v3580 = vadd.f32 %v3218, %v3546
        %v3581 = vld [vmem:[%s3222] sm:$0xf]
        %v3582 = vld [vmem:[%s3222 + $0x4] sm:$0xf]
        %v3583 = vld [vmem:[%s3222 + $0x8] sm:$0x1]
        %v3584 = vld [vmem:[%s3222 + $0xc] sm:$0xf]
        %v3585 = vld [vmem:[%s3222 + $0x10] sm:$0xf]
        %v3586 = vld [vmem:[%s3222 + $0x14] sm:$0x1]
        %v3587 = vld [vmem:[%s3222 + $0x18] sm:$0xf]
        %v3588 = vld [vmem:[%s3222 + $0x1c] sm:$0xf]
        %v3589 = vld [vmem:[%s3222 + $0x20] sm:$0x1]
        %v3590 = vld [vmem:[%s3222 + $0x24] sm:$0xf]
        %v3591 = vld [vmem:[%s3222 + $0x28] sm:$0xf]
        %v3592 = vld [vmem:[%s3222 + $0x2c] sm:$0x1]
        %v3593 = vld [vmem:[%s3222 + $0x30] sm:$0xf]
        %v3594 = vld [vmem:[%s3222 + $0x34] sm:$0xf]
        %v3595 = vld [vmem:[%s3222 + $0x38] sm:$0x1]
        %v3596 = vld [vmem:[%s3222 + $0x3c] sm:$0xf]
        %v3597 = vld [vmem:[%s3222 + $0x40] sm:$0xf]
        %v3598 = vld [vmem:[%s3222 + $0x44] sm:$0x1]
        %v3599 = vld [vmem:[%s3222 + $0x48] sm:$0xf]
        %v3600 = vld [vmem:[%s3222 + $0x4c] sm:$0xf]
        %v3601 = vld [vmem:[%s3222 + $0x50] sm:$0x1]
        %v3602 = vld [vmem:[%s3222 + $0x54] sm:$0xf]
        %v3603 = vld [vmem:[%s3222 + $0x58] sm:$0xf]
        %v3604 = vld [vmem:[%s3222 + $0x5c] sm:$0x1]
        %v3605 = vld [vmem:[%s3222 + $0x60] sm:$0xf]
        %v3606 = vld [vmem:[%s3222 + $0x64] sm:$0xf]
        %v3607 = vld [vmem:[%s3222 + $0x68] sm:$0x1]
        %v3608 = vld [vmem:[%s3222 + $0x6c] sm:$0xf]
        %v3609 = vld [vmem:[%s3222 + $0x70] sm:$0xf]
        %v3610 = vld [vmem:[%s3222 + $0x74] sm:$0x1]
        %v3611 = vld [vmem:[%s3222 + $0x78] sm:$0xf]
        %v3612 = vld [vmem:[%s3222 + $0x7c] sm:$0xf]
        %v3613 = vld [vmem:[%s3222 + $0x80] sm:$0x1]
        %v3614 = vld [vmem:[%s3222 + $0x84] sm:$0xf]
        %v3615 = vld [vmem:[%s3222 + $0x88] sm:$0xf]
        %v3616 = vld [vmem:[%s3222 + $0x8c] sm:$0x1]
        %v3617 = vld [vmem:[%s3222 + $0x90] sm:$0xf]
        %v3618 = vld [vmem:[%s3222 + $0x94] sm:$0xf]
        %v3619 = vld [vmem:[%s3222 + $0x98] sm:$0x1]
        %v3620 = vld [vmem:[%s3222 + $0x9c] sm:$0xf]
        %v3621 = vld [vmem:[%s3222 + $0xa0] sm:$0xf]
        %v3622 = vld [vmem:[%s3222 + $0xa4] sm:$0x1]
        %v3623 = vld [vmem:[%s3222 + $0xa8] sm:$0xf]
        %v3624 = vld [vmem:[%s3222 + $0xac] sm:$0xf]
        %v3625 = vld [vmem:[%s3222 + $0xb0] sm:$0x1]
        %v3626 = vld [vmem:[%s3222 + $0xb4] sm:$0xf]
        %v3627 = vld [vmem:[%s3222 + $0xb8] sm:$0xf]
        %v3628 = vld [vmem:[%s3222 + $0xbc] sm:$0x1]
        %v3630 = vshrl.u32 %v3581, 16
        %v3632 = vrot.slane %v3630, 4
        %v3633 = vshll.u32 %v3581, 16
        %v3635 = vrot.slane %v3633, 5
        %v3636 = vor.u32 %v3632, %v3635
        %v3637 = vrot.slane %v3636, 4
        %v3639 = vshll.u32 %v3582, 16
        %v3641 = vrot.slane %v3639, 5
        %v3642 = vsel %vm263, %v3637, %v3641
        %v3643 = vshrl.u32 %v3582, 16
        %v3645 = vrot.slane %v3643, 4
        %v3646 = vor.u32 %v3645, %v3641
        %v3647 = vrot.slane %v3646, 4
        %v3649 = vshll.u32 %v3583, 16
        %v3651 = vrot.slane %v3649, 5
        %v3652 = vsel %vm263, %v3647, %v3651
        %v3654 = vshrl.u32 %v3584, 16
        %v3656 = vrot.slane %v3654, 4
        %v3657 = vshll.u32 %v3584, 16
        %v3659 = vrot.slane %v3657, 5
        %v3660 = vor.u32 %v3656, %v3659
        %v3661 = vrot.slane %v3660, 4
        %v3663 = vshll.u32 %v3585, 16
        %v3665 = vrot.slane %v3663, 5
        %v3666 = vsel %vm263, %v3661, %v3665
        %v3667 = vshrl.u32 %v3585, 16
        %v3669 = vrot.slane %v3667, 4
        %v3670 = vor.u32 %v3669, %v3665
        %v3671 = vrot.slane %v3670, 4
        %v3673 = vshll.u32 %v3586, 16
        %v3675 = vrot.slane %v3673, 5
        %v3676 = vsel %vm263, %v3671, %v3675
        %v3678 = vshrl.u32 %v3587, 16
        %v3680 = vrot.slane %v3678, 4
        %v3681 = vshll.u32 %v3587, 16
        %v3683 = vrot.slane %v3681, 5
        %v3684 = vor.u32 %v3680, %v3683
        %v3685 = vrot.slane %v3684, 4
        %v3687 = vshll.u32 %v3588, 16
        %v3689 = vrot.slane %v3687, 5
        %v3690 = vsel %vm263, %v3685, %v3689
        %v3691 = vshrl.u32 %v3588, 16
        %v3693 = vrot.slane %v3691, 4
        %v3694 = vor.u32 %v3693, %v3689
        %v3695 = vrot.slane %v3694, 4
        %v3697 = vshll.u32 %v3589, 16
        %v3699 = vrot.slane %v3697, 5
        %v3700 = vsel %vm263, %v3695, %v3699
        %v3702 = vshrl.u32 %v3590, 16
        %v3704 = vrot.slane %v3702, 4
        %v3705 = vshll.u32 %v3590, 16
        %v3707 = vrot.slane %v3705, 5
        %v3708 = vor.u32 %v3704, %v3707
        %v3709 = vrot.slane %v3708, 4
        %v3711 = vshll.u32 %v3591, 16
        %v3713 = vrot.slane %v3711, 5
        %v3714 = vsel %vm263, %v3709, %v3713
        %v3715 = vshrl.u32 %v3591, 16
        %v3717 = vrot.slane %v3715, 4
        %v3718 = vor.u32 %v3717, %v3713
        %v3719 = vrot.slane %v3718, 4
        %v3721 = vshll.u32 %v3592, 16
        %v3723 = vrot.slane %v3721, 5
        %v3724 = vsel %vm263, %v3719, %v3723
        %v3726 = vshrl.u32 %v3593, 16
        %v3728 = vrot.slane %v3726, 4
        %v3729 = vshll.u32 %v3593, 16
        %v3731 = vrot.slane %v3729, 5
        %v3732 = vor.u32 %v3728, %v3731
        %v3733 = vrot.slane %v3732, 4
        %v3735 = vshll.u32 %v3594, 16
        %v3737 = vrot.slane %v3735, 5
        %v3738 = vsel %vm263, %v3733, %v3737
        %v3739 = vshrl.u32 %v3594, 16
        %v3741 = vrot.slane %v3739, 4
        %v3742 = vor.u32 %v3741, %v3737
        %v3743 = vrot.slane %v3742, 4
        %v3745 = vshll.u32 %v3595, 16
        %v3747 = vrot.slane %v3745, 5
        %v3748 = vsel %vm263, %v3743, %v3747
        %v3750 = vshrl.u32 %v3596, 16
        %v3752 = vrot.slane %v3750, 4
        %v3753 = vshll.u32 %v3596, 16
        %v3755 = vrot.slane %v3753, 5
        %v3756 = vor.u32 %v3752, %v3755
        %v3757 = vrot.slane %v3756, 4
        %v3759 = vshll.u32 %v3597, 16
        %v3761 = vrot.slane %v3759, 5
        %v3762 = vsel %vm263, %v3757, %v3761
        %v3763 = vshrl.u32 %v3597, 16
        %v3765 = vrot.slane %v3763, 4
        %v3766 = vor.u32 %v3765, %v3761
        %v3767 = vrot.slane %v3766, 4
        %v3769 = vshll.u32 %v3598, 16
        %v3771 = vrot.slane %v3769, 5
        %v3772 = vsel %vm263, %v3767, %v3771
        %v3774 = vshrl.u32 %v3599, 16
        %v3776 = vrot.slane %v3774, 4
        %v3777 = vshll.u32 %v3599, 16
        %v3779 = vrot.slane %v3777, 5
        %v3780 = vor.u32 %v3776, %v3779
        %v3781 = vrot.slane %v3780, 4
        %v3783 = vshll.u32 %v3600, 16
        %v3785 = vrot.slane %v3783, 5
        %v3786 = vsel %vm263, %v3781, %v3785
        %v3787 = vshrl.u32 %v3600, 16
        %v3789 = vrot.slane %v3787, 4
        %v3790 = vor.u32 %v3789, %v3785
        %v3791 = vrot.slane %v3790, 4
        %v3793 = vshll.u32 %v3601, 16
        %v3795 = vrot.slane %v3793, 5
        %v3796 = vsel %vm263, %v3791, %v3795
        %v3798 = vshrl.u32 %v3602, 16
        %v3800 = vrot.slane %v3798, 4
        %v3801 = vshll.u32 %v3602, 16
        %v3803 = vrot.slane %v3801, 5
        %v3804 = vor.u32 %v3800, %v3803
        %v3805 = vrot.slane %v3804, 4
        %v3807 = vshll.u32 %v3603, 16
        %v3809 = vrot.slane %v3807, 5
        %v3810 = vsel %vm263, %v3805, %v3809
        %v3811 = vshrl.u32 %v3603, 16
        %v3813 = vrot.slane %v3811, 4
        %v3814 = vor.u32 %v3813, %v3809
        %v3815 = vrot.slane %v3814, 4
        %v3817 = vshll.u32 %v3604, 16
        %v3819 = vrot.slane %v3817, 5
        %v3820 = vsel %vm263, %v3815, %v3819
        %v3822 = vshrl.u32 %v3605, 16
        %v3824 = vrot.slane %v3822, 4
        %v3825 = vshll.u32 %v3605, 16
        %v3827 = vrot.slane %v3825, 5
        %v3828 = vor.u32 %v3824, %v3827
        %v3829 = vrot.slane %v3828, 4
        %v3831 = vshll.u32 %v3606, 16
        %v3833 = vrot.slane %v3831, 5
        %v3834 = vsel %vm263, %v3829, %v3833
        %v3835 = vshrl.u32 %v3606, 16
        %v3837 = vrot.slane %v3835, 4
        %v3838 = vor.u32 %v3837, %v3833
        %v3839 = vrot.slane %v3838, 4
        %v3841 = vshll.u32 %v3607, 16
        %v3843 = vrot.slane %v3841, 5
        %v3844 = vsel %vm263, %v3839, %v3843
        %v3846 = vshrl.u32 %v3608, 16
        %v3848 = vrot.slane %v3846, 4
        %v3849 = vshll.u32 %v3608, 16
        %v3851 = vrot.slane %v3849, 5
        %v3852 = vor.u32 %v3848, %v3851
        %v3853 = vrot.slane %v3852, 4
        %v3855 = vshll.u32 %v3609, 16
        %v3857 = vrot.slane %v3855, 5
        %v3858 = vsel %vm263, %v3853, %v3857
        %v3859 = vshrl.u32 %v3609, 16
        %v3861 = vrot.slane %v3859, 4
        %v3862 = vor.u32 %v3861, %v3857
        %v3863 = vrot.slane %v3862, 4
        %v3865 = vshll.u32 %v3610, 16
        %v3867 = vrot.slane %v3865, 5
        %v3868 = vsel %vm263, %v3863, %v3867
        %v3870 = vshrl.u32 %v3611, 16
        %v3872 = vrot.slane %v3870, 4
        %v3873 = vshll.u32 %v3611, 16
        %v3875 = vrot.slane %v3873, 5
        %v3876 = vor.u32 %v3872, %v3875
        %v3877 = vrot.slane %v3876, 4
        %v3879 = vshll.u32 %v3612, 16
        %v3881 = vrot.slane %v3879, 5
        %v3882 = vsel %vm263, %v3877, %v3881
        %v3883 = vshrl.u32 %v3612, 16
        %v3885 = vrot.slane %v3883, 4
        %v3886 = vor.u32 %v3885, %v3881
        %v3887 = vrot.slane %v3886, 4
        %v3889 = vshll.u32 %v3613, 16
        %v3891 = vrot.slane %v3889, 5
        %v3892 = vsel %vm263, %v3887, %v3891
        %v3894 = vshrl.u32 %v3614, 16
        %v3896 = vrot.slane %v3894, 4
        %v3897 = vshll.u32 %v3614, 16
        %v3899 = vrot.slane %v3897, 5
        %v3900 = vor.u32 %v3896, %v3899
        %v3901 = vrot.slane %v3900, 4
        %v3903 = vshll.u32 %v3615, 16
        %v3905 = vrot.slane %v3903, 5
        %v3906 = vsel %vm263, %v3901, %v3905
        %v3907 = vshrl.u32 %v3615, 16
        %v3909 = vrot.slane %v3907, 4
        %v3910 = vor.u32 %v3909, %v3905
        %v3911 = vrot.slane %v3910, 4
        %v3913 = vshll.u32 %v3616, 16
        %v3915 = vrot.slane %v3913, 5
        %v3916 = vsel %vm263, %v3911, %v3915
        %v3918 = vshrl.u32 %v3617, 16
        %v3920 = vrot.slane %v3918, 4
        %v3921 = vshll.u32 %v3617, 16
        %v3923 = vrot.slane %v3921, 5
        %v3924 = vor.u32 %v3920, %v3923
        %v3925 = vrot.slane %v3924, 4
        %v3927 = vshll.u32 %v3618, 16
        %v3929 = vrot.slane %v3927, 5
        %v3930 = vsel %vm263, %v3925, %v3929
        %v3931 = vshrl.u32 %v3618, 16
        %v3933 = vrot.slane %v3931, 4
        %v3934 = vor.u32 %v3933, %v3929
        %v3935 = vrot.slane %v3934, 4
        %v3937 = vshll.u32 %v3619, 16
        %v3939 = vrot.slane %v3937, 5
        %v3940 = vsel %vm263, %v3935, %v3939
        %v3942 = vshrl.u32 %v3620, 16
        %v3944 = vrot.slane %v3942, 4
        %v3945 = vshll.u32 %v3620, 16
        %v3947 = vrot.slane %v3945, 5
        %v3948 = vor.u32 %v3944, %v3947
        %v3949 = vrot.slane %v3948, 4
        %v3951 = vshll.u32 %v3621, 16
        %v3953 = vrot.slane %v3951, 5
        %v3954 = vsel %vm263, %v3949, %v3953
        %v3955 = vshrl.u32 %v3621, 16
        %v3957 = vrot.slane %v3955, 4
        %v3958 = vor.u32 %v3957, %v3953
        %v3959 = vrot.slane %v3958, 4
        %v3961 = vshll.u32 %v3622, 16
        %v3963 = vrot.slane %v3961, 5
        %v3964 = vsel %vm263, %v3959, %v3963
        %v3966 = vshrl.u32 %v3623, 16
        %v3968 = vrot.slane %v3966, 4
        %v3969 = vshll.u32 %v3623, 16
        %v3971 = vrot.slane %v3969, 5
        %v3972 = vor.u32 %v3968, %v3971
        %v3973 = vrot.slane %v3972, 4
        %v3975 = vshll.u32 %v3624, 16
        %v3977 = vrot.slane %v3975, 5
        %v3978 = vsel %vm263, %v3973, %v3977
        %v3979 = vshrl.u32 %v3624, 16
        %v3981 = vrot.slane %v3979, 4
        %v3982 = vor.u32 %v3981, %v3977
        %v3983 = vrot.slane %v3982, 4
        %v3985 = vshll.u32 %v3625, 16
        %v3987 = vrot.slane %v3985, 5
        %v3988 = vsel %vm263, %v3983, %v3987
        %v3990 = vshrl.u32 %v3626, 16
        %v3992 = vrot.slane %v3990, 4
        %v3993 = vshll.u32 %v3626, 16
        %v3995 = vrot.slane %v3993, 5
        %v3996 = vor.u32 %v3992, %v3995
        %v3997 = vrot.slane %v3996, 4
        %v3999 = vshll.u32 %v3627, 16
        %v4001 = vrot.slane %v3999, 5
        %v4002 = vsel %vm263, %v3997, %v4001
        %v4003 = vshrl.u32 %v3627, 16
        %v4005 = vrot.slane %v4003, 4
        %v4006 = vor.u32 %v4005, %v4001
        %v4007 = vrot.slane %v4006, 4
        %v4009 = vshll.u32 %v3628, 16
        %v4011 = vrot.slane %v4009, 5
        %v4012 = vsel %vm263, %v4007, %v4011
        %s4013 = scalar_lea.vmem %s1, 14
        %v4014 = vld [vmem:[%s4013] sm:$0x3]
        %v4015 = vunpack.c.l.b16 %v3642
        %v4016 = vunpack.c.l.b16 %v3652
        %v4017 = vunpack.c.l.b16 %v3666
        %v4018 = vunpack.c.l.b16 %v3676
        %v4019 = vunpack.c.l.b16 %v3690
        %v4020 = vunpack.c.l.b16 %v3700
        %v4021 = vunpack.c.l.b16 %v3714
        %v4022 = vunpack.c.l.b16 %v3724
        %v4023 = vunpack.c.l.b16 %v3738
        %v4024 = vunpack.c.l.b16 %v3748
        %v4025 = vunpack.c.l.b16 %v3762
        %v4026 = vunpack.c.l.b16 %v3772
        %v4027 = vunpack.c.l.b16 %v3786
        %v4028 = vunpack.c.l.b16 %v3796
        %v4029 = vunpack.c.l.b16 %v3810
        %v4030 = vunpack.c.l.b16 %v3820
        %v4031 = vunpack.c.l.b16 %v3834
        %v4032 = vunpack.c.l.b16 %v3844
        %v4033 = vunpack.c.l.b16 %v3858
        %v4034 = vunpack.c.l.b16 %v3868
        %v4035 = vunpack.c.l.b16 %v3882
        %v4036 = vunpack.c.l.b16 %v3892
        %v4037 = vunpack.c.l.b16 %v3906
        %v4038 = vunpack.c.l.b16 %v3916
        %v4039 = vunpack.c.l.b16 %v3930
        %v4040 = vunpack.c.l.b16 %v3940
        %v4041 = vunpack.c.l.b16 %v3954
        %v4042 = vunpack.c.l.b16 %v3964
        %v4043 = vunpack.c.l.b16 %v3978
        %v4044 = vunpack.c.l.b16 %v3988
        %v4045 = vunpack.c.l.b16 %v4002
        %v4046 = vunpack.c.l.b16 %v4012
        %v4047 = vpack.c.b16 %v4016, %v4015
        %v4048 = vpack.c.b16 %v4018, %v4017
        %v4049 = vpack.c.b16 %v4020, %v4019
        %v4050 = vpack.c.b16 %v4022, %v4021
        %v4051 = vpack.c.b16 %v4024, %v4023
        %v4052 = vpack.c.b16 %v4026, %v4025
        %v4053 = vpack.c.b16 %v4028, %v4027
        %v4054 = vpack.c.b16 %v4030, %v4029
        %v4055 = vpack.c.b16 %v4032, %v4031
        %v4056 = vpack.c.b16 %v4034, %v4033
        %v4057 = vpack.c.b16 %v4036, %v4035
        %v4058 = vpack.c.b16 %v4038, %v4037
        %v4059 = vpack.c.b16 %v4040, %v4039
        %v4060 = vpack.c.b16 %v4042, %v4041
        %v4061 = vpack.c.b16 %v4044, %v4043
        %v4062 = vpack.c.b16 %v4046, %v4045
        %v4064 = vsel %vm698, %v4047, 0
        %v4067 = vsel %vm698, %v4048, 0
        %v4070 = vsel %vm698, %v4049, 0
        %v4073 = vsel %vm698, %v4050, 0
        %v4076 = vsel %vm698, %v4051, 0
        %v4079 = vsel %vm698, %v4052, 0
        %v4082 = vsel %vm698, %v4053, 0
        %v4085 = vsel %vm698, %v4054, 0
        %v4088 = vsel %vm698, %v4055, 0
        %v4091 = vsel %vm698, %v4056, 0
        %v4094 = vsel %vm698, %v4057, 0
        %v4097 = vsel %vm698, %v4058, 0
        %v4100 = vsel %vm698, %v4059, 0
        %v4103 = vsel %vm698, %v4060, 0
        %v4106 = vsel %vm698, %v4061, 0
        %v4109 = vsel %vm698, %v4062, 0
        %v4112 = vsel %vm747, %v4014, 0
        %4114 = vmatprep.subr.bf16.mxu0 0
        %4115 = vmatpush1.bf16.msra.mxu0 0
        %4116 = vmatprep.subr.bf16.mxu0 0
        %4117 = vmatpush1.bf16.msra.mxu0 0
        %4118 = vmatprep.subr.bf16.mxu0 0
        %4119 = vmatpush1.bf16.msra.mxu0 0
        %4120 = vmatprep.subr.bf16.mxu0 0
        %4121 = vmatpush1.bf16.msra.mxu0 0
        %4122 = vmatprep.subr.bf16.mxu0 0
        %4123 = vmatpush1.bf16.msra.mxu0 0
        %4124 = vmatprep.subr.bf16.mxu0 0
        %4125 = vmatpush1.bf16.msra.mxu0 0
        %4126 = vmatprep.subr.bf16.mxu0 0
        %4127 = vmatpush1.bf16.msra.mxu0 0
        %4128 = vmatprep.subr.bf16.mxu0 0
        %4129 = vmatpush1.bf16.msra.mxu0 %v4112
        %4130 = vmatprep.subr.bf16.mxu0 0
        %4131 = vmatpush2.bf16.msra.mxu0 0
        %4132 = vmatprep.subr.bf16.mxu0 0
        %4133 = vmatpush2.bf16.msra.mxu0 0
        %4134 = vmatprep.subr.bf16.mxu0 0
        %4135 = vmatpush2.bf16.msra.mxu0 0
        %4136 = vmatprep.subr.bf16.mxu0 0
        %4137 = vmatpush2.bf16.msra.mxu0 0
        %4138 = vmatprep.subr.bf16.mxu0 0
        %4139 = vmatpush2.bf16.msra.mxu0 0
        %4140 = vmatprep.subr.bf16.mxu0 0
        %4141 = vmatpush2.bf16.msra.mxu0 0
        %4142 = vmatprep.subr.bf16.mxu0 0
        %4143 = vmatpush2.bf16.msra.mxu0 0
        %4144 = vmatprep.subr.bf16.mxu0 0
        %4145 = vmatpush2.bf16.msra.mxu0 0
        %4146 = vmatprep.mubr.bf16.mxu0 0
        %4147 = vmatmul.mubr.bf16.gmra.mxu0 %v4064
        %v4148 = vpop.f32.mrf.mxu0
        %v4149 = vadd.f32 0.0, %v4148
        %v4150 = vpop.f32.mrf.mxu0
        %v4151 = vpop.f32.mrf.mxu0
        %v4152 = vadd.f32 0.0, %v4151
        %v4153 = vpop.f32.mrf.mxu0
        %4154 = vmatprep.mubr.bf16.mxu0 0
        %4155 = vmatmul.mubr.bf16.gmra.mxu0 %v4067
        %v4156 = vpop.f32.mrf.mxu0
        %v4157 = vadd.f32 0.0, %v4156
        %v4158 = vpop.f32.mrf.mxu0
        %v4159 = vpop.f32.mrf.mxu0
        %v4160 = vadd.f32 0.0, %v4159
        %v4161 = vpop.f32.mrf.mxu0
        %4162 = vmatprep.mubr.bf16.mxu0 0
        %4163 = vmatmul.mubr.bf16.gmra.mxu0 %v4070
        %v4164 = vpop.f32.mrf.mxu0
        %v4165 = vadd.f32 0.0, %v4164
        %v4166 = vpop.f32.mrf.mxu0
        %v4167 = vpop.f32.mrf.mxu0
        %v4168 = vadd.f32 0.0, %v4167
        %v4169 = vpop.f32.mrf.mxu0
        %4170 = vmatprep.mubr.bf16.mxu0 0
        %4171 = vmatmul.mubr.bf16.gmra.mxu0 %v4073
        %v4172 = vpop.f32.mrf.mxu0
        %v4173 = vadd.f32 0.0, %v4172
        %v4174 = vpop.f32.mrf.mxu0
        %v4175 = vpop.f32.mrf.mxu0
        %v4176 = vadd.f32 0.0, %v4175
        %v4177 = vpop.f32.mrf.mxu0
        %4178 = vmatprep.mubr.bf16.mxu0 0
        %4179 = vmatmul.mubr.bf16.gmra.mxu0 %v4076
        %v4180 = vpop.f32.mrf.mxu0
        %v4181 = vadd.f32 0.0, %v4180
        %v4182 = vpop.f32.mrf.mxu0
        %v4183 = vpop.f32.mrf.mxu0
        %v4184 = vadd.f32 0.0, %v4183
        %v4185 = vpop.f32.mrf.mxu0
        %4186 = vmatprep.mubr.bf16.mxu0 0
        %4187 = vmatmul.mubr.bf16.gmra.mxu0 %v4079
        %v4188 = vpop.f32.mrf.mxu0
        %v4189 = vadd.f32 0.0, %v4188
        %v4190 = vpop.f32.mrf.mxu0
        %v4191 = vpop.f32.mrf.mxu0
        %v4192 = vadd.f32 0.0, %v4191
        %v4193 = vpop.f32.mrf.mxu0
        %4194 = vmatprep.mubr.bf16.mxu0 0
        %4195 = vmatmul.mubr.bf16.gmra.mxu0 %v4082
        %v4196 = vpop.f32.mrf.mxu0
        %v4197 = vadd.f32 0.0, %v4196
        %v4198 = vpop.f32.mrf.mxu0
        %v4199 = vpop.f32.mrf.mxu0
        %v4200 = vadd.f32 0.0, %v4199
        %v4201 = vpop.f32.mrf.mxu0
        %4202 = vmatprep.mubr.bf16.mxu0 0
        %4203 = vmatmul.mubr.bf16.gmra.mxu0 %v4085
        %v4204 = vpop.f32.mrf.mxu0
        %v4205 = vadd.f32 0.0, %v4204
        %v4206 = vpop.f32.mrf.mxu0
        %v4207 = vpop.f32.mrf.mxu0
        %v4208 = vadd.f32 0.0, %v4207
        %v4209 = vpop.f32.mrf.mxu0
        %4210 = vmatprep.mubr.bf16.mxu0 0
        %4211 = vmatmul.mubr.bf16.gmra.mxu0 %v4088
        %v4212 = vpop.f32.mrf.mxu0
        %v4213 = vadd.f32 0.0, %v4212
        %v4214 = vpop.f32.mrf.mxu0
        %v4215 = vpop.f32.mrf.mxu0
        %v4216 = vadd.f32 0.0, %v4215
        %v4217 = vpop.f32.mrf.mxu0
        %4218 = vmatprep.mubr.bf16.mxu0 0
        %4219 = vmatmul.mubr.bf16.gmra.mxu0 %v4091
        %v4220 = vpop.f32.mrf.mxu0
        %v4221 = vadd.f32 0.0, %v4220
        %v4222 = vpop.f32.mrf.mxu0
        %v4223 = vpop.f32.mrf.mxu0
        %v4224 = vadd.f32 0.0, %v4223
        %v4225 = vpop.f32.mrf.mxu0
        %4226 = vmatprep.mubr.bf16.mxu0 0
        %4227 = vmatmul.mubr.bf16.gmra.mxu0 %v4094
        %v4228 = vpop.f32.mrf.mxu0
        %v4229 = vadd.f32 0.0, %v4228
        %v4230 = vpop.f32.mrf.mxu0
        %v4231 = vpop.f32.mrf.mxu0
        %v4232 = vadd.f32 0.0, %v4231
        %v4233 = vpop.f32.mrf.mxu0
        %4234 = vmatprep.mubr.bf16.mxu0 0
        %4235 = vmatmul.mubr.bf16.gmra.mxu0 %v4097
        %v4236 = vpop.f32.mrf.mxu0
        %v4237 = vadd.f32 0.0, %v4236
        %v4238 = vpop.f32.mrf.mxu0
        %v4239 = vpop.f32.mrf.mxu0
        %v4240 = vadd.f32 0.0, %v4239
        %v4241 = vpop.f32.mrf.mxu0
        %4242 = vmatprep.mubr.bf16.mxu0 0
        %4243 = vmatmul.mubr.bf16.gmra.mxu0 %v4100
        %v4244 = vpop.f32.mrf.mxu0
        %v4245 = vadd.f32 0.0, %v4244
        %v4246 = vpop.f32.mrf.mxu0
        %v4247 = vpop.f32.mrf.mxu0
        %v4248 = vadd.f32 0.0, %v4247
        %v4249 = vpop.f32.mrf.mxu0
        %4250 = vmatprep.mubr.bf16.mxu0 0
        %4251 = vmatmul.mubr.bf16.gmra.mxu0 %v4103
        %v4252 = vpop.f32.mrf.mxu0
        %v4253 = vadd.f32 0.0, %v4252
        %v4254 = vpop.f32.mrf.mxu0
        %v4255 = vpop.f32.mrf.mxu0
        %v4256 = vadd.f32 0.0, %v4255
        %v4257 = vpop.f32.mrf.mxu0
        %4258 = vmatprep.mubr.bf16.mxu0 0
        %4259 = vmatmul.mubr.bf16.gmra.mxu0 %v4106
        %v4260 = vpop.f32.mrf.mxu0
        %v4261 = vadd.f32 0.0, %v4260
        %v4262 = vpop.f32.mrf.mxu0
        %v4263 = vpop.f32.mrf.mxu0
        %v4264 = vadd.f32 0.0, %v4263
        %v4265 = vpop.f32.mrf.mxu0
        %4266 = vmatprep.mubr.bf16.mxu0 0
        %4267 = vmatmul.mubr.bf16.gmra.mxu0 %v4109
        %v4268 = vpop.f32.mrf.mxu0
        %v4269 = vadd.f32 0.0, %v4268
        %v4270 = vpop.f32.mrf.mxu0
        %v4271 = vpop.f32.mrf.mxu0
        %v4272 = vadd.f32 0.0, %v4271
        %v4273 = vpop.f32.mrf.mxu0
        %4274 = vdwg.mxu0
        %v4275 = vadd.f32 %v3549, %v4149
        %v4276 = vadd.f32 %v3550, %v4152
        %v4277 = vadd.f32 %v3551, %v4157
        %v4278 = vadd.f32 %v3552, %v4160
        %v4279 = vadd.f32 %v3553, %v4165
        %v4280 = vadd.f32 %v3554, %v4168
        %v4281 = vadd.f32 %v3555, %v4173
        %v4282 = vadd.f32 %v3556, %v4176
        %v4283 = vadd.f32 %v3557, %v4181
        %v4284 = vadd.f32 %v3558, %v4184
        %v4285 = vadd.f32 %v3559, %v4189
        %v4286 = vadd.f32 %v3560, %v4192
        %v4287 = vadd.f32 %v3561, %v4197
        %v4288 = vadd.f32 %v3562, %v4200
        %v4289 = vadd.f32 %v3563, %v4205
        %v4290 = vadd.f32 %v3564, %v4208
        %v4291 = vadd.f32 %v3565, %v4213
        %v4292 = vadd.f32 %v3566, %v4216
        %v4293 = vadd.f32 %v3567, %v4221
        %v4294 = vadd.f32 %v3568, %v4224
        %v4295 = vadd.f32 %v3569, %v4229
        %v4296 = vadd.f32 %v3570, %v4232
        %v4297 = vadd.f32 %v3571, %v4237
        %v4298 = vadd.f32 %v3572, %v4240
        %v4299 = vadd.f32 %v3573, %v4245
        %v4300 = vadd.f32 %v3574, %v4248
        %v4301 = vadd.f32 %v3575, %v4253
        %v4302 = vadd.f32 %v3576, %v4256
        %v4303 = vadd.f32 %v3577, %v4261
        %v4304 = vadd.f32 %v3578, %v4264
        %v4305 = vadd.f32 %v3579, %v4269
        %v4306 = vadd.f32 %v3580, %v4272
        %v4307 = vld [vmem:[%s3222] sm:$0xe]
        %v4308 = vld [vmem:[%s3222 + $0xc] sm:$0xe]
        %v4309 = vld [vmem:[%s3222 + $0x18] sm:$0xe]
        %v4310 = vld [vmem:[%s3222 + $0x24] sm:$0xe]
        %v4311 = vld [vmem:[%s3222 + $0x30] sm:$0xe]
        %v4312 = vld [vmem:[%s3222 + $0x3c] sm:$0xe]
        %v4313 = vld [vmem:[%s3222 + $0x48] sm:$0xe]
        %v4314 = vld [vmem:[%s3222 + $0x54] sm:$0xe]
        %v4315 = vld [vmem:[%s3222 + $0x60] sm:$0xe]
        %v4316 = vld [vmem:[%s3222 + $0x6c] sm:$0xe]
        %v4317 = vld [vmem:[%s3222 + $0x78] sm:$0xe]
        %v4318 = vld [vmem:[%s3222 + $0x84] sm:$0xe]
        %v4319 = vld [vmem:[%s3222 + $0x90] sm:$0xe]
        %v4320 = vld [vmem:[%s3222 + $0x9c] sm:$0xe]
        %v4321 = vld [vmem:[%s3222 + $0xa8] sm:$0xe]
        %v4322 = vld [vmem:[%s3222 + $0xb4] sm:$0xe]
        %v4371 = vrot.slane %v4307, 5
        %v4372 = vrot.slane %v4371, 4
        %v4373 = vrot.slane %v3582, 5
        %v4374 = vsel %vm1254, %v4372, %v4373
        %v4375 = vrot.slane %v4373, 4
        %v4376 = vrot.slane %v3583, 5
        %v4377 = vsel %vm1254, %v4375, %v4376
        %v4378 = vrot.slane %v4308, 5
        %v4379 = vrot.slane %v4378, 4
        %v4380 = vrot.slane %v3585, 5
        %v4381 = vsel %vm1254, %v4379, %v4380
        %v4382 = vrot.slane %v4380, 4
        %v4383 = vrot.slane %v3586, 5
        %v4384 = vsel %vm1254, %v4382, %v4383
        %v4385 = vrot.slane %v4309, 5
        %v4386 = vrot.slane %v4385, 4
        %v4387 = vrot.slane %v3588, 5
        %v4388 = vsel %vm1254, %v4386, %v4387
        %v4389 = vrot.slane %v4387, 4
        %v4390 = vrot.slane %v3589, 5
        %v4391 = vsel %vm1254, %v4389, %v4390
        %v4392 = vrot.slane %v4310, 5
        %v4393 = vrot.slane %v4392, 4
        %v4394 = vrot.slane %v3591, 5
        %v4395 = vsel %vm1254, %v4393, %v4394
        %v4396 = vrot.slane %v4394, 4
        %v4397 = vrot.slane %v3592, 5
        %v4398 = vsel %vm1254, %v4396, %v4397
        %v4399 = vrot.slane %v4311, 5
        %v4400 = vrot.slane %v4399, 4
        %v4401 = vrot.slane %v3594, 5
        %v4402 = vsel %vm1254, %v4400, %v4401
        %v4403 = vrot.slane %v4401, 4
        %v4404 = vrot.slane %v3595, 5
        %v4405 = vsel %vm1254, %v4403, %v4404
        %v4406 = vrot.slane %v4312, 5
        %v4407 = vrot.slane %v4406, 4
        %v4408 = vrot.slane %v3597, 5
        %v4409 = vsel %vm1254, %v4407, %v4408
        %v4410 = vrot.slane %v4408, 4
        %v4411 = vrot.slane %v3598, 5
        %v4412 = vsel %vm1254, %v4410, %v4411
        %v4413 = vrot.slane %v4313, 5
        %v4414 = vrot.slane %v4413, 4
        %v4415 = vrot.slane %v3600, 5
        %v4416 = vsel %vm1254, %v4414, %v4415
        %v4417 = vrot.slane %v4415, 4
        %v4418 = vrot.slane %v3601, 5
        %v4419 = vsel %vm1254, %v4417, %v4418
        %v4420 = vrot.slane %v4314, 5
        %v4421 = vrot.slane %v4420, 4
        %v4422 = vrot.slane %v3603, 5
        %v4423 = vsel %vm1254, %v4421, %v4422
        %v4424 = vrot.slane %v4422, 4
        %v4425 = vrot.slane %v3604, 5
        %v4426 = vsel %vm1254, %v4424, %v4425
        %v4427 = vrot.slane %v4315, 5
        %v4428 = vrot.slane %v4427, 4
        %v4429 = vrot.slane %v3606, 5
        %v4430 = vsel %vm1254, %v4428, %v4429
        %v4431 = vrot.slane %v4429, 4
        %v4432 = vrot.slane %v3607, 5
        %v4433 = vsel %vm1254, %v4431, %v4432
        %v4434 = vrot.slane %v4316, 5
        %v4435 = vrot.slane %v4434, 4
        %v4436 = vrot.slane %v3609, 5
        %v4437 = vsel %vm1254, %v4435, %v4436
        %v4438 = vrot.slane %v4436, 4
        %v4439 = vrot.slane %v3610, 5
        %v4440 = vsel %vm1254, %v4438, %v4439
        %v4441 = vrot.slane %v4317, 5
        %v4442 = vrot.slane %v4441, 4
        %v4443 = vrot.slane %v3612, 5
        %v4444 = vsel %vm1254, %v4442, %v4443
        %v4445 = vrot.slane %v4443, 4
        %v4446 = vrot.slane %v3613, 5
        %v4447 = vsel %vm1254, %v4445, %v4446
        %v4448 = vrot.slane %v4318, 5
        %v4449 = vrot.slane %v4448, 4
        %v4450 = vrot.slane %v3615, 5
        %v4451 = vsel %vm1254, %v4449, %v4450
        %v4452 = vrot.slane %v4450, 4
        %v4453 = vrot.slane %v3616, 5
        %v4454 = vsel %vm1254, %v4452, %v4453
        %v4455 = vrot.slane %v4319, 5
        %v4456 = vrot.slane %v4455, 4
        %v4457 = vrot.slane %v3618, 5
        %v4458 = vsel %vm1254, %v4456, %v4457
        %v4459 = vrot.slane %v4457, 4
        %v4460 = vrot.slane %v3619, 5
        %v4461 = vsel %vm1254, %v4459, %v4460
        %v4462 = vrot.slane %v4320, 5
        %v4463 = vrot.slane %v4462, 4
        %v4464 = vrot.slane %v3621, 5
        %v4465 = vsel %vm1254, %v4463, %v4464
        %v4466 = vrot.slane %v4464, 4
        %v4467 = vrot.slane %v3622, 5
        %v4468 = vsel %vm1254, %v4466, %v4467
        %v4469 = vrot.slane %v4321, 5
        %v4470 = vrot.slane %v4469, 4
        %v4471 = vrot.slane %v3624, 5
        %v4472 = vsel %vm1254, %v4470, %v4471
        %v4473 = vrot.slane %v4471, 4
        %v4474 = vrot.slane %v3625, 5
        %v4475 = vsel %vm1254, %v4473, %v4474
        %v4476 = vrot.slane %v4322, 5
        %v4477 = vrot.slane %v4476, 4
        %v4478 = vrot.slane %v3627, 5
        %v4479 = vsel %vm1254, %v4477, %v4478
        %v4480 = vrot.slane %v4478, 4
        %v4481 = vrot.slane %v3628, 5
        %v4482 = vsel %vm1254, %v4480, %v4481
        %s4483 = scalar_lea.vmem %s1, 16
        %v4484 = vld [vmem:[%s4483] sm:$0x3]
        %v4485 = vunpack.c.l.b16 %v4374
        %v4486 = vunpack.c.l.b16 %v4377
        %v4487 = vunpack.c.l.b16 %v4381
        %v4488 = vunpack.c.l.b16 %v4384
        %v4489 = vunpack.c.l.b16 %v4388
        %v4490 = vunpack.c.l.b16 %v4391
        %v4491 = vunpack.c.l.b16 %v4395
        %v4492 = vunpack.c.l.b16 %v4398
        %v4493 = vunpack.c.l.b16 %v4402
        %v4494 = vunpack.c.l.b16 %v4405
        %v4495 = vunpack.c.l.b16 %v4409
        %v4496 = vunpack.c.l.b16 %v4412
        %v4497 = vunpack.c.l.b16 %v4416
        %v4498 = vunpack.c.l.b16 %v4419
        %v4499 = vunpack.c.l.b16 %v4423
        %v4500 = vunpack.c.l.b16 %v4426
        %v4501 = vunpack.c.l.b16 %v4430
        %v4502 = vunpack.c.l.b16 %v4433
        %v4503 = vunpack.c.l.b16 %v4437
        %v4504 = vunpack.c.l.b16 %v4440
        %v4505 = vunpack.c.l.b16 %v4444
        %v4506 = vunpack.c.l.b16 %v4447
        %v4507 = vunpack.c.l.b16 %v4451
        %v4508 = vunpack.c.l.b16 %v4454
        %v4509 = vunpack.c.l.b16 %v4458
        %v4510 = vunpack.c.l.b16 %v4461
        %v4511 = vunpack.c.l.b16 %v4465
        %v4512 = vunpack.c.l.b16 %v4468
        %v4513 = vunpack.c.l.b16 %v4472
        %v4514 = vunpack.c.l.b16 %v4475
        %v4515 = vunpack.c.l.b16 %v4479
        %v4516 = vunpack.c.l.b16 %v4482
        %v4517 = vpack.c.b16 %v4486, %v4485
        %v4518 = vpack.c.b16 %v4488, %v4487
        %v4519 = vpack.c.b16 %v4490, %v4489
        %v4520 = vpack.c.b16 %v4492, %v4491
        %v4521 = vpack.c.b16 %v4494, %v4493
        %v4522 = vpack.c.b16 %v4496, %v4495
        %v4523 = vpack.c.b16 %v4498, %v4497
        %v4524 = vpack.c.b16 %v4500, %v4499
        %v4525 = vpack.c.b16 %v4502, %v4501
        %v4526 = vpack.c.b16 %v4504, %v4503
        %v4527 = vpack.c.b16 %v4506, %v4505
        %v4528 = vpack.c.b16 %v4508, %v4507
        %v4529 = vpack.c.b16 %v4510, %v4509
        %v4530 = vpack.c.b16 %v4512, %v4511
        %v4531 = vpack.c.b16 %v4514, %v4513
        %v4532 = vpack.c.b16 %v4516, %v4515
        %v4534 = vsel %vm698, %v4517, 0
        %v4537 = vsel %vm698, %v4518, 0
        %v4540 = vsel %vm698, %v4519, 0
        %v4543 = vsel %vm698, %v4520, 0
        %v4546 = vsel %vm698, %v4521, 0
        %v4549 = vsel %vm698, %v4522, 0
        %v4552 = vsel %vm698, %v4523, 0
        %v4555 = vsel %vm698, %v4524, 0
        %v4558 = vsel %vm698, %v4525, 0
        %v4561 = vsel %vm698, %v4526, 0
        %v4564 = vsel %vm698, %v4527, 0
        %v4567 = vsel %vm698, %v4528, 0
        %v4570 = vsel %vm698, %v4529, 0
        %v4573 = vsel %vm698, %v4530, 0
        %v4576 = vsel %vm698, %v4531, 0
        %v4579 = vsel %vm698, %v4532, 0
        %v4582 = vsel %vm747, %v4484, 0
        %4584 = vmatprep.subr.bf16.mxu0 0
        %4585 = vmatpush1.bf16.msra.mxu0 0
        %4586 = vmatprep.subr.bf16.mxu0 0
        %4587 = vmatpush1.bf16.msra.mxu0 0
        %4588 = vmatprep.subr.bf16.mxu0 0
        %4589 = vmatpush1.bf16.msra.mxu0 0
        %4590 = vmatprep.subr.bf16.mxu0 0
        %4591 = vmatpush1.bf16.msra.mxu0 0
        %4592 = vmatprep.subr.bf16.mxu0 0
        %4593 = vmatpush1.bf16.msra.mxu0 0
        %4594 = vmatprep.subr.bf16.mxu0 0
        %4595 = vmatpush1.bf16.msra.mxu0 0
        %4596 = vmatprep.subr.bf16.mxu0 0
        %4597 = vmatpush1.bf16.msra.mxu0 0
        %4598 = vmatprep.subr.bf16.mxu0 0
        %4599 = vmatpush1.bf16.msra.mxu0 %v4582
        %4600 = vmatprep.subr.bf16.mxu0 0
        %4601 = vmatpush2.bf16.msra.mxu0 0
        %4602 = vmatprep.subr.bf16.mxu0 0
        %4603 = vmatpush2.bf16.msra.mxu0 0
        %4604 = vmatprep.subr.bf16.mxu0 0
        %4605 = vmatpush2.bf16.msra.mxu0 0
        %4606 = vmatprep.subr.bf16.mxu0 0
        %4607 = vmatpush2.bf16.msra.mxu0 0
        %4608 = vmatprep.subr.bf16.mxu0 0
        %4609 = vmatpush2.bf16.msra.mxu0 0
        %4610 = vmatprep.subr.bf16.mxu0 0
        %4611 = vmatpush2.bf16.msra.mxu0 0
        %4612 = vmatprep.subr.bf16.mxu0 0
        %4613 = vmatpush2.bf16.msra.mxu0 0
        %4614 = vmatprep.subr.bf16.mxu0 0
        %4615 = vmatpush2.bf16.msra.mxu0 0
        %4616 = vmatprep.mubr.bf16.mxu0 0
        %4617 = vmatmul.mubr.bf16.gmra.mxu0 %v4534
        %v4618 = vpop.f32.mrf.mxu0
        %v4619 = vadd.f32 0.0, %v4618
        %v4620 = vpop.f32.mrf.mxu0
        %v4621 = vpop.f32.mrf.mxu0
        %v4622 = vadd.f32 0.0, %v4621
        %v4623 = vpop.f32.mrf.mxu0
        %4624 = vmatprep.mubr.bf16.mxu0 0
        %4625 = vmatmul.mubr.bf16.gmra.mxu0 %v4537
        %v4626 = vpop.f32.mrf.mxu0
        %v4627 = vadd.f32 0.0, %v4626
        %v4628 = vpop.f32.mrf.mxu0
        %v4629 = vpop.f32.mrf.mxu0
        %v4630 = vadd.f32 0.0, %v4629
        %v4631 = vpop.f32.mrf.mxu0
        %4632 = vmatprep.mubr.bf16.mxu0 0
        %4633 = vmatmul.mubr.bf16.gmra.mxu0 %v4540
        %v4634 = vpop.f32.mrf.mxu0
        %v4635 = vadd.f32 0.0, %v4634
        %v4636 = vpop.f32.mrf.mxu0
        %v4637 = vpop.f32.mrf.mxu0
        %v4638 = vadd.f32 0.0, %v4637
        %v4639 = vpop.f32.mrf.mxu0
        %4640 = vmatprep.mubr.bf16.mxu0 0
        %4641 = vmatmul.mubr.bf16.gmra.mxu0 %v4543
        %v4642 = vpop.f32.mrf.mxu0
        %v4643 = vadd.f32 0.0, %v4642
        %v4644 = vpop.f32.mrf.mxu0
        %v4645 = vpop.f32.mrf.mxu0
        %v4646 = vadd.f32 0.0, %v4645
        %v4647 = vpop.f32.mrf.mxu0
        %4648 = vmatprep.mubr.bf16.mxu0 0
        %4649 = vmatmul.mubr.bf16.gmra.mxu0 %v4546
        %v4650 = vpop.f32.mrf.mxu0
        %v4651 = vadd.f32 0.0, %v4650
        %v4652 = vpop.f32.mrf.mxu0
        %v4653 = vpop.f32.mrf.mxu0
        %v4654 = vadd.f32 0.0, %v4653
        %v4655 = vpop.f32.mrf.mxu0
        %4656 = vmatprep.mubr.bf16.mxu0 0
        %4657 = vmatmul.mubr.bf16.gmra.mxu0 %v4549
        %v4658 = vpop.f32.mrf.mxu0
        %v4659 = vadd.f32 0.0, %v4658
        %v4660 = vpop.f32.mrf.mxu0
        %v4661 = vpop.f32.mrf.mxu0
        %v4662 = vadd.f32 0.0, %v4661
        %v4663 = vpop.f32.mrf.mxu0
        %4664 = vmatprep.mubr.bf16.mxu0 0
        %4665 = vmatmul.mubr.bf16.gmra.mxu0 %v4552
        %v4666 = vpop.f32.mrf.mxu0
        %v4667 = vadd.f32 0.0, %v4666
        %v4668 = vpop.f32.mrf.mxu0
        %v4669 = vpop.f32.mrf.mxu0
        %v4670 = vadd.f32 0.0, %v4669
        %v4671 = vpop.f32.mrf.mxu0
        %4672 = vmatprep.mubr.bf16.mxu0 0
        %4673 = vmatmul.mubr.bf16.gmra.mxu0 %v4555
        %v4674 = vpop.f32.mrf.mxu0
        %v4675 = vadd.f32 0.0, %v4674
        %v4676 = vpop.f32.mrf.mxu0
        %v4677 = vpop.f32.mrf.mxu0
        %v4678 = vadd.f32 0.0, %v4677
        %v4679 = vpop.f32.mrf.mxu0
        %4680 = vmatprep.mubr.bf16.mxu0 0
        %4681 = vmatmul.mubr.bf16.gmra.mxu0 %v4558
        %v4682 = vpop.f32.mrf.mxu0
        %v4683 = vadd.f32 0.0, %v4682
        %v4684 = vpop.f32.mrf.mxu0
        %v4685 = vpop.f32.mrf.mxu0
        %v4686 = vadd.f32 0.0, %v4685
        %v4687 = vpop.f32.mrf.mxu0
        %4688 = vmatprep.mubr.bf16.mxu0 0
        %4689 = vmatmul.mubr.bf16.gmra.mxu0 %v4561
        %v4690 = vpop.f32.mrf.mxu0
        %v4691 = vadd.f32 0.0, %v4690
        %v4692 = vpop.f32.mrf.mxu0
        %v4693 = vpop.f32.mrf.mxu0
        %v4694 = vadd.f32 0.0, %v4693
        %v4695 = vpop.f32.mrf.mxu0
        %4696 = vmatprep.mubr.bf16.mxu0 0
        %4697 = vmatmul.mubr.bf16.gmra.mxu0 %v4564
        %v4698 = vpop.f32.mrf.mxu0
        %v4699 = vadd.f32 0.0, %v4698
        %v4700 = vpop.f32.mrf.mxu0
        %v4701 = vpop.f32.mrf.mxu0
        %v4702 = vadd.f32 0.0, %v4701
        %v4703 = vpop.f32.mrf.mxu0
        %4704 = vmatprep.mubr.bf16.mxu0 0
        %4705 = vmatmul.mubr.bf16.gmra.mxu0 %v4567
        %v4706 = vpop.f32.mrf.mxu0
        %v4707 = vadd.f32 0.0, %v4706
        %v4708 = vpop.f32.mrf.mxu0
        %v4709 = vpop.f32.mrf.mxu0
        %v4710 = vadd.f32 0.0, %v4709
        %v4711 = vpop.f32.mrf.mxu0
        %4712 = vmatprep.mubr.bf16.mxu0 0
        %4713 = vmatmul.mubr.bf16.gmra.mxu0 %v4570
        %v4714 = vpop.f32.mrf.mxu0
        %v4715 = vadd.f32 0.0, %v4714
        %v4716 = vpop.f32.mrf.mxu0
        %v4717 = vpop.f32.mrf.mxu0
        %v4718 = vadd.f32 0.0, %v4717
        %v4719 = vpop.f32.mrf.mxu0
        %4720 = vmatprep.mubr.bf16.mxu0 0
        %4721 = vmatmul.mubr.bf16.gmra.mxu0 %v4573
        %v4722 = vpop.f32.mrf.mxu0
        %v4723 = vadd.f32 0.0, %v4722
        %v4724 = vpop.f32.mrf.mxu0
        %v4725 = vpop.f32.mrf.mxu0
        %v4726 = vadd.f32 0.0, %v4725
        %v4727 = vpop.f32.mrf.mxu0
        %4728 = vmatprep.mubr.bf16.mxu0 0
        %4729 = vmatmul.mubr.bf16.gmra.mxu0 %v4576
        %v4730 = vpop.f32.mrf.mxu0
        %v4731 = vadd.f32 0.0, %v4730
        %v4732 = vpop.f32.mrf.mxu0
        %v4733 = vpop.f32.mrf.mxu0
        %v4734 = vadd.f32 0.0, %v4733
        %v4735 = vpop.f32.mrf.mxu0
        %4736 = vmatprep.mubr.bf16.mxu0 0
        %4737 = vmatmul.mubr.bf16.gmra.mxu0 %v4579
        %v4738 = vpop.f32.mrf.mxu0
        %v4739 = vadd.f32 0.0, %v4738
        %v4740 = vpop.f32.mrf.mxu0
        %v4741 = vpop.f32.mrf.mxu0
        %v4742 = vadd.f32 0.0, %v4741
        %v4743 = vpop.f32.mrf.mxu0
        %4744 = vdwg.mxu0
        %v4745 = vadd.f32 %v4275, %v4619
        %v4746 = vadd.f32 %v4276, %v4622
        %v4747 = vadd.f32 %v4277, %v4627
        %v4748 = vadd.f32 %v4278, %v4630
        %v4749 = vadd.f32 %v4279, %v4635
        %v4750 = vadd.f32 %v4280, %v4638
        %v4751 = vadd.f32 %v4281, %v4643
        %v4752 = vadd.f32 %v4282, %v4646
        %v4753 = vadd.f32 %v4283, %v4651
        %v4754 = vadd.f32 %v4284, %v4654
        %v4755 = vadd.f32 %v4285, %v4659
        %v4756 = vadd.f32 %v4286, %v4662
        %v4757 = vadd.f32 %v4287, %v4667
        %v4758 = vadd.f32 %v4288, %v4670
        %v4759 = vadd.f32 %v4289, %v4675
        %v4760 = vadd.f32 %v4290, %v4678
        %v4761 = vadd.f32 %v4291, %v4683
        %v4762 = vadd.f32 %v4292, %v4686
        %v4763 = vadd.f32 %v4293, %v4691
        %v4764 = vadd.f32 %v4294, %v4694
        %v4765 = vadd.f32 %v4295, %v4699
        %v4766 = vadd.f32 %v4296, %v4702
        %v4767 = vadd.f32 %v4297, %v4707
        %v4768 = vadd.f32 %v4298, %v4710
        %v4769 = vadd.f32 %v4299, %v4715
        %v4770 = vadd.f32 %v4300, %v4718
        %v4771 = vadd.f32 %v4301, %v4723
        %v4772 = vadd.f32 %v4302, %v4726
        %v4773 = vadd.f32 %v4303, %v4731
        %v4774 = vadd.f32 %v4304, %v4734
        %v4775 = vadd.f32 %v4305, %v4739
        %v4776 = vadd.f32 %v4306, %v4742
        %vm4777 = vcmask 64512
        %4778 = vst.msk [vmem:[%s205] sm:$0xff] %vm4777, %v4745
        %4779 = vst.msk [vmem:[%s205 + $0x8] sm:$0xff] %vm4777, %v4746
        %4780 = vst.msk [vmem:[%s205 + $0x10] sm:$0xff] %vm4777, %v4747
        %4781 = vst.msk [vmem:[%s205 + $0x18] sm:$0xff] %vm4777, %v4748
        %4782 = vst.msk [vmem:[%s205 + $0x20] sm:$0xff] %vm4777, %v4749
        %4783 = vst.msk [vmem:[%s205 + $0x28] sm:$0xff] %vm4777, %v4750
        %4784 = vst.msk [vmem:[%s205 + $0x30] sm:$0xff] %vm4777, %v4751
        %4785 = vst.msk [vmem:[%s205 + $0x38] sm:$0xff] %vm4777, %v4752
        %4786 = vst.msk [vmem:[%s205 + $0x40] sm:$0xff] %vm4777, %v4753
        %4787 = vst.msk [vmem:[%s205 + $0x48] sm:$0xff] %vm4777, %v4754
        %4788 = vst.msk [vmem:[%s205 + $0x50] sm:$0xff] %vm4777, %v4755
        %4789 = vst.msk [vmem:[%s205 + $0x58] sm:$0xff] %vm4777, %v4756
        %4790 = vst.msk [vmem:[%s205 + $0x60] sm:$0xff] %vm4777, %v4757
        %4791 = vst.msk [vmem:[%s205 + $0x68] sm:$0xff] %vm4777, %v4758
        %4792 = vst.msk [vmem:[%s205 + $0x70] sm:$0xff] %vm4777, %v4759
        %4793 = vst.msk [vmem:[%s205 + $0x78] sm:$0xff] %vm4777, %v4760
        %4794 = vst.msk [vmem:[%s205 + $0x80] sm:$0xff] %vm4777, %v4761
        %4795 = vst.msk [vmem:[%s205 + $0x88] sm:$0xff] %vm4777, %v4762
        %4796 = vst.msk [vmem:[%s205 + $0x90] sm:$0xff] %vm4777, %v4763
        %4797 = vst.msk [vmem:[%s205 + $0x98] sm:$0xff] %vm4777, %v4764
        %4798 = vst.msk [vmem:[%s205 + $0xa0] sm:$0xff] %vm4777, %v4765
        %4799 = vst.msk [vmem:[%s205 + $0xa8] sm:$0xff] %vm4777, %v4766
        %4800 = vst.msk [vmem:[%s205 + $0xb0] sm:$0xff] %vm4777, %v4767
        %4801 = vst.msk [vmem:[%s205 + $0xb8] sm:$0xff] %vm4777, %v4768
        %4802 = vst.msk [vmem:[%s205 + $0xc0] sm:$0xff] %vm4777, %v4769
        %4803 = vst.msk [vmem:[%s205 + $0xc8] sm:$0xff] %vm4777, %v4770
        %4804 = vst.msk [vmem:[%s205 + $0xd0] sm:$0xff] %vm4777, %v4771
        %4805 = vst.msk [vmem:[%s205 + $0xd8] sm:$0xff] %vm4777, %v4772
        %4806 = vst.msk [vmem:[%s205 + $0xe0] sm:$0xff] %vm4777, %v4773
        %4807 = vst.msk [vmem:[%s205 + $0xe8] sm:$0xff] %vm4777, %v4774
        %4808 = vst.msk [vmem:[%s205 + $0xf0] sm:$0xff] %vm4777, %v4775
        %4809 = vst.msk [vmem:[%s205 + $0xf8] sm:$0xff] %vm4777, %v4776
        %v4810 = vsel %vm4777, %v4745, 0.0
        %v4811 = vsel %vm4777, %v4746, 0.0
        %v4812 = vadd.f32 %v4810, %v4811
        %v4813 = vsel %vm4777, %v4747, 0.0
        %v4814 = vadd.f32 %v4812, %v4813
        %v4815 = vsel %vm4777, %v4748, 0.0
        %v4816 = vadd.f32 %v4814, %v4815
        %v4817 = vsel %vm4777, %v4749, 0.0
        %v4818 = vadd.f32 %v4816, %v4817
        %v4819 = vsel %vm4777, %v4750, 0.0
        %v4820 = vadd.f32 %v4818, %v4819
        %v4821 = vsel %vm4777, %v4751, 0.0
        %v4822 = vadd.f32 %v4820, %v4821
        %v4823 = vsel %vm4777, %v4752, 0.0
        %v4824 = vadd.f32 %v4822, %v4823
        %v4825 = vsel %vm4777, %v4753, 0.0
        %v4826 = vadd.f32 %v4824, %v4825
        %v4827 = vsel %vm4777, %v4754, 0.0
        %v4828 = vadd.f32 %v4826, %v4827
        %v4829 = vsel %vm4777, %v4755, 0.0
        %v4830 = vadd.f32 %v4828, %v4829
        %v4831 = vsel %vm4777, %v4756, 0.0
        %v4832 = vadd.f32 %v4830, %v4831
        %v4833 = vsel %vm4777, %v4757, 0.0
        %v4834 = vadd.f32 %v4832, %v4833
        %v4835 = vsel %vm4777, %v4758, 0.0
        %v4836 = vadd.f32 %v4834, %v4835
        %v4837 = vsel %vm4777, %v4759, 0.0
        %v4838 = vadd.f32 %v4836, %v4837
        %v4839 = vsel %vm4777, %v4760, 0.0
        %v4840 = vadd.f32 %v4838, %v4839
        %v4841 = vsel %vm4777, %v4761, 0.0
        %v4842 = vadd.f32 %v4840, %v4841
        %v4843 = vsel %vm4777, %v4762, 0.0
        %v4844 = vadd.f32 %v4842, %v4843
        %v4845 = vsel %vm4777, %v4763, 0.0
        %v4846 = vadd.f32 %v4844, %v4845
        %v4847 = vsel %vm4777, %v4764, 0.0
        %v4848 = vadd.f32 %v4846, %v4847
        %v4849 = vsel %vm4777, %v4765, 0.0
        %v4850 = vadd.f32 %v4848, %v4849
        %v4851 = vsel %vm4777, %v4766, 0.0
        %v4852 = vadd.f32 %v4850, %v4851
        %v4853 = vsel %vm4777, %v4767, 0.0
        %v4854 = vadd.f32 %v4852, %v4853
        %v4855 = vsel %vm4777, %v4768, 0.0
        %v4856 = vadd.f32 %v4854, %v4855
        %v4857 = vsel %vm4777, %v4769, 0.0
        %v4858 = vadd.f32 %v4856, %v4857
        %v4859 = vsel %vm4777, %v4770, 0.0
        %v4860 = vadd.f32 %v4858, %v4859
        %v4861 = vsel %vm4777, %v4771, 0.0
        %v4862 = vadd.f32 %v4860, %v4861
        %v4863 = vsel %vm4777, %v4772, 0.0
        %v4864 = vadd.f32 %v4862, %v4863
        %v4865 = vsel %vm4777, %v4773, 0.0
        %v4866 = vadd.f32 %v4864, %v4865
        %v4867 = vsel %vm4777, %v4774, 0.0
        %v4868 = vadd.f32 %v4866, %v4867
        %v4869 = vsel %vm4777, %v4775, 0.0
        %v4870 = vadd.f32 %v4868, %v4869
        %v4871 = vsel %vm4777, %v4776, 0.0
        %v4872 = vadd.f32 %v4870, %v4871
        %v4873 = vrot.slane %v4872, 4
        %v4874 = vadd.f32 %v4872, %v4873
        %v4875 = vrot.slane %v4874, 2
        %v4876 = vadd.f32 %v4874, %v4875
        %v4877 = vrot.slane %v4876, 1
        %v4878 = vadd.f32 %v4876, %v4877
        %vm4879 = vcmask 57344
        %4880 = vst.msk [vmem:[%s191] sm:$0x1] %vm4879, %v4878
        %v4881 = vmul.f32 %v4745, %v4745
        %v4882 = vmul.f32 %v4746, %v4746
        %v4883 = vmul.f32 %v4747, %v4747
        %v4884 = vmul.f32 %v4748, %v4748
        %v4885 = vmul.f32 %v4749, %v4749
        %v4886 = vmul.f32 %v4750, %v4750
        %v4887 = vmul.f32 %v4751, %v4751
        %v4888 = vmul.f32 %v4752, %v4752
        %v4889 = vmul.f32 %v4753, %v4753
        %v4890 = vmul.f32 %v4754, %v4754
        %v4891 = vmul.f32 %v4755, %v4755
        %v4892 = vmul.f32 %v4756, %v4756
        %v4893 = vmul.f32 %v4757, %v4757
        %v4894 = vmul.f32 %v4758, %v4758
        %v4895 = vmul.f32 %v4759, %v4759
        %v4896 = vmul.f32 %v4760, %v4760
        %v4897 = vmul.f32 %v4761, %v4761
        %v4898 = vmul.f32 %v4762, %v4762
        %v4899 = vmul.f32 %v4763, %v4763
        %v4900 = vmul.f32 %v4764, %v4764
        %v4901 = vmul.f32 %v4765, %v4765
        %v4902 = vmul.f32 %v4766, %v4766
        %v4903 = vmul.f32 %v4767, %v4767
        %v4904 = vmul.f32 %v4768, %v4768
        %v4905 = vmul.f32 %v4769, %v4769
        %v4906 = vmul.f32 %v4770, %v4770
        %v4907 = vmul.f32 %v4771, %v4771
        %v4908 = vmul.f32 %v4772, %v4772
        %v4909 = vmul.f32 %v4773, %v4773
        %v4910 = vmul.f32 %v4774, %v4774
        %v4911 = vmul.f32 %v4775, %v4775
        %v4912 = vmul.f32 %v4776, %v4776
        %v4913 = vsel %vm4777, %v4881, 0.0
        %v4914 = vsel %vm4777, %v4882, 0.0
        %v4915 = vadd.f32 %v4913, %v4914
        %v4916 = vsel %vm4777, %v4883, 0.0
        %v4917 = vadd.f32 %v4915, %v4916
        %v4918 = vsel %vm4777, %v4884, 0.0
        %v4919 = vadd.f32 %v4917, %v4918
        %v4920 = vsel %vm4777, %v4885, 0.0
        %v4921 = vadd.f32 %v4919, %v4920
        %v4922 = vsel %vm4777, %v4886, 0.0
        %v4923 = vadd.f32 %v4921, %v4922
        %v4924 = vsel %vm4777, %v4887, 0.0
        %v4925 = vadd.f32 %v4923, %v4924
        %v4926 = vsel %vm4777, %v4888, 0.0
        %v4927 = vadd.f32 %v4925, %v4926
        %v4928 = vsel %vm4777, %v4889, 0.0
        %v4929 = vadd.f32 %v4927, %v4928
        %v4930 = vsel %vm4777, %v4890, 0.0
        %v4931 = vadd.f32 %v4929, %v4930
        %v4932 = vsel %vm4777, %v4891, 0.0
        %v4933 = vadd.f32 %v4931, %v4932
        %v4934 = vsel %vm4777, %v4892, 0.0
        %v4935 = vadd.f32 %v4933, %v4934
        %v4936 = vsel %vm4777, %v4893, 0.0
        %v4937 = vadd.f32 %v4935, %v4936
        %v4938 = vsel %vm4777, %v4894, 0.0
        %v4939 = vadd.f32 %v4937, %v4938
        %v4940 = vsel %vm4777, %v4895, 0.0
        %v4941 = vadd.f32 %v4939, %v4940
        %v4942 = vsel %vm4777, %v4896, 0.0
        %v4943 = vadd.f32 %v4941, %v4942
        %v4944 = vsel %vm4777, %v4897, 0.0
        %v4945 = vadd.f32 %v4943, %v4944
        %v4946 = vsel %vm4777, %v4898, 0.0
        %v4947 = vadd.f32 %v4945, %v4946
        %v4948 = vsel %vm4777, %v4899, 0.0
        %v4949 = vadd.f32 %v4947, %v4948
        %v4950 = vsel %vm4777, %v4900, 0.0
        %v4951 = vadd.f32 %v4949, %v4950
        %v4952 = vsel %vm4777, %v4901, 0.0
        %v4953 = vadd.f32 %v4951, %v4952
        %v4954 = vsel %vm4777, %v4902, 0.0
        %v4955 = vadd.f32 %v4953, %v4954
        %v4956 = vsel %vm4777, %v4903, 0.0
        %v4957 = vadd.f32 %v4955, %v4956
        %v4958 = vsel %vm4777, %v4904, 0.0
        %v4959 = vadd.f32 %v4957, %v4958
        %v4960 = vsel %vm4777, %v4905, 0.0
        %v4961 = vadd.f32 %v4959, %v4960
        %v4962 = vsel %vm4777, %v4906, 0.0
        %v4963 = vadd.f32 %v4961, %v4962
        %v4964 = vsel %vm4777, %v4907, 0.0
        %v4965 = vadd.f32 %v4963, %v4964
        %v4966 = vsel %vm4777, %v4908, 0.0
        %v4967 = vadd.f32 %v4965, %v4966
        %v4968 = vsel %vm4777, %v4909, 0.0
        %v4969 = vadd.f32 %v4967, %v4968
        %v4970 = vsel %vm4777, %v4910, 0.0
        %v4971 = vadd.f32 %v4969, %v4970
        %v4972 = vsel %vm4777, %v4911, 0.0
        %v4973 = vadd.f32 %v4971, %v4972
        %v4974 = vsel %vm4777, %v4912, 0.0
        %v4975 = vadd.f32 %v4973, %v4974
        %v4976 = vrot.slane %v4975, 4
        %v4977 = vadd.f32 %v4975, %v4976
        %v4978 = vrot.slane %v4977, 2
        %v4979 = vadd.f32 %v4977, %v4978
        %v4980 = vrot.slane %v4979, 1
        %v4981 = vadd.f32 %v4979, %v4980
        %4982 = vst.msk [vmem:[%s191 + $0x1] sm:$0x1] %vm4879, %v4981
        %s4983 = smul.u32 32, %s23
        %p4984 = scmp.lt.s32.totalorder %s22, 1
        %s4985 = scalar_select %p4984, %s22, 1
        %p4986 = scmp.lt.s32.totalorder %s4983, 31
        %s4987 = scalar_select %p4986, %s4983, 31
        %s4988 = smul.addr %s4985, 32
        %s4989 = sadd.s32 %s4987, %s4988
        %s4990 = smul.addr %s4989, 8
        %s4991 = scalar_lea.vmem %s2, %s4990
        %s4992 = sand.u32 %s115, 1
        %s4993 = scalar_lea.sflag [#allocation3], %s4992
        %s4994 = sand.u32 %s115, 1
        %s4995 = smul.addr %s4994, 2
        %s4996 = scalar_lea.vmem [#allocation2], %s4995
        // Predicated region
        $region29: #{tpu_custom_call.1} parent=27 // pred_check
          %p4997 = pneg %p97
        $region30: #{tpu_custom_call.1} parent=27 // pred_check_branch
          %4999 = sbr.rel (%p4997) target = $region32
        $region31: #{tpu_custom_call.1} parent=27 // pred_region
          %s5000 = smul.u32 32, %s23
        $region32: #{tpu_custom_call.1} parent=27 // pred_fallthru
          _
        // Predicated region
        $region33: #{tpu_custom_call.1} parent=27 // pred_check
          %p5001 = pneg %p125
        $region34: #{tpu_custom_call.1} parent=27 // pred_check_branch
          %5003 = sbr.rel (%p5001) target = $region36
        $region35: #{tpu_custom_call.1} parent=27 // pred_region
          %s5005 = ssub.s32 32, 32
          %5006 = vsyncadd %s4993, %s5005
          %s5007 = sadd.s32 %s23, %s22
          %s5008 = smul.addr %s5007, 32
          %s5009 = scalar_lea.hbm %s3, %s5008
          %s5011 = sshll.u32 %s4996, 4
          %s5012 = int_to_ptr.vmem [resolvable:$true] %s5011
          %5014 = dma.vmem_to_hbm [thread:$0]  %s5012, 32, %s5009, %s4993
        $region36: #{tpu_custom_call.1} parent=27 // pred_fallthru
          _
      $region28: #{tpu_custom_call.1} parent=5 // pred_fallthru
        _
      %p5015 = scmp.le.s32.totalorder 2, %s13
      // Predicated region
      $region37: #{tpu_custom_call.1} parent=5 // pred_check
        %p5016 = pneg %p5015
      $region38: #{tpu_custom_call.1} parent=5 // pred_check_branch
        %5018 = sbr.rel (%p5016) target = $region40
      $region39: #{tpu_custom_call.1} parent=5 // pred_region
        %s5019 = ssub.s32 %s13, 2
        // Predicated region
        $region41: #{tpu_custom_call.1} parent=39 // pred_check
          %p5020 = pneg %p103
        $region42: #{tpu_custom_call.1} parent=39 // pred_check_branch
          %5022 = sbr.rel (%p5020) target = $region44
        $region43: #{tpu_custom_call.1} parent=39 // pred_region
          %s5023 = smul.u32 32, %s25
          %p5024 = scmp.lt.s32.totalorder %s24, 1
          %s5025 = scalar_select %p5024, %s24, 1
          %p5026 = scmp.lt.s32.totalorder %s5023, 31
          %s5027 = scalar_select %p5026, %s5023, 31
          %s5028 = smul.addr %s5025, 32
          %s5029 = sadd.s32 %s5027, %s5028
          %s5030 = smul.addr %s5029, 8
          %s5031 = scalar_lea.vmem %s2, %s5030
        $region44: #{tpu_custom_call.1} parent=39 // pred_fallthru
          _
        // Predicated region
        $region45: #{tpu_custom_call.1} parent=39 // pred_check
          %p5032 = pneg %p131
        $region46: #{tpu_custom_call.1} parent=39 // pred_check_branch
          %5034 = sbr.rel (%p5032) target = $region48
        $region47: #{tpu_custom_call.1} parent=39 // pred_region
          %s5035 = sand.u32 %s116, 1
          %s5036 = scalar_lea.sflag [#allocation3], %s5035
          %s5037 = sand.u32 %s116, 1
          %s5038 = smul.addr %s5037, 2
          %s5039 = scalar_lea.vmem [#allocation2], %s5038
          %5040 = dma.done %s5036, 32
        $region48: #{tpu_custom_call.1} parent=39 // pred_fallthru
          _
      $region40: #{tpu_custom_call.1} parent=5 // pred_fallthru
        _
    $region6: #{tpu_custom_call.1} parent=1 // loop_footer
      %s17 = sadd.s32 1, %s13
    $region7: #{tpu_custom_call.1} parent=1 // loop_footer_branch
      %12 = sbr.rel target = $region3
    $region8: #{tpu_custom_call.1} parent=1 // loop_exit
      _
    %5041 = vsyncpa [#allocation3], 1
    %s5042 = scalar_lea.sflag [#allocation3], 1
    %5043 = vsyncpa %s5042, 1

</llo_original>
